<compile_context>
chip_gen: v5e
topology: v5e:2x2
jax: 0.10.0
libtpu: 0.0.40
codegen_flags: <defaults>
</compile_context>

<pallas_src>
import jax
import jax.numpy as jnp
from jax.experimental import pallas as pl
from jax.experimental.pallas import tpu as pltpu

_MiB = 1024 * 1024


def _parse_graph_kernel(graph_ref, node_ref, w_ref, b_ref, out_ref):
    g = graph_ref[...]                       # (Bt, Np, Np) bf16
    x2d = node_ref[...]                      # (Bt*Np, H)   bf16
    bt, n, _ = g.shape
    h = x2d.shape[-1]

    # Degree in f32 (bf16 0/1 adjacency entries are exact, but accumulate in
    # f32); guarded rsqrt so zero-degree (padded / isolated) rows give 0, not
    # inf/NaN that could leak into real rows through the batched matmul.
    d = jnp.sum(g.astype(jnp.float32), axis=-1, keepdims=True)   # (Bt, Np, 1)
    s = jnp.where(d > 0.0, jax.lax.rsqrt(d), 0.0)                # EUP rsqrt

    w1t = w_ref[0]                           # bf16 (H, H)  fc1.weight^T
    w2t = w_ref[1]                           # bf16 (H, H)  fc2.weight^T
    woat = w_ref[2]                          # bf16 (H, H)  node_out[:, :H]^T
    wobt = w_ref[3]                          # bf16 (H, H)  node_out[:, H:]^T
    b1 = b_ref[0:1, :]                       # f32 (1, H)
    b2 = b_ref[1:2, :]
    bo = b_ref[2:3, :]

    # (D^-1/2 A D^-1/2) @ v  ==  s * (A @ (s * v))
    def propagate(v3d):                      # (Bt, Np, H) -> (Bt, Np, H) f32
        sv = (s * v3d).astype(jnp.bfloat16)
        gv = jnp.einsum("bij,bjh->bih", g, sv,
                        preferred_element_type=jnp.float32)
        return s * gv

    x3d = x2d.reshape(bt, n, h)              # free sublane split (Np % 8 == 0)

    # node_info = relu(fc1(gn @ node))      -- flattened (Bt*Np, H) @ (H, H)
    m1 = propagate(x3d).reshape(bt * n, h)   # free sublane merge
    h1 = jnp.maximum(
        jnp.dot(m1.astype(jnp.bfloat16), w1t,
                preferred_element_type=jnp.float32) + b1, 0.0)

    # node_info = relu(fc2(gn @ node_info))
    m2 = propagate(h1.reshape(bt, n, h)).reshape(bt * n, h)
    h2 = jnp.maximum(
        jnp.dot(m2.astype(jnp.bfloat16), w2t,
                preferred_element_type=jnp.float32) + b2, 0.0)

    # relu(node_out(cat([node, node_info], -1)))
    #   == relu(node @ Wo[:, :H].T + node_info @ Wo[:, H:].T + bo)
    out = (jnp.dot(x2d, woat, preferred_element_type=jnp.float32)
           + jnp.dot(h2.astype(jnp.bfloat16), wobt,
                     preferred_element_type=jnp.float32)
           + bo)
    out_ref[...] = jnp.maximum(out, 0.0)


def _default_vmem_limit_bytes():
    # Half of physical VMEM, clamped to [32, 64] MiB:
    #   v5e/v6e (128 MiB) -> 64 MiB,  v7x (64 MiB per TC) -> 32 MiB.
    try:
        cap = pltpu.get_tpu_info().vmem_capacity_bytes
    except Exception:
        cap = 64 * _MiB                       # conservative (v7x-sized) fallback
    return max(32 * _MiB, min(64 * _MiB, cap // 2))


def parse_graph_forward(node, graph, params, *, target_rows=512,
                        vmem_limit_bytes=None):
    B, N, H = node.shape
    if vmem_limit_bytes is None:
        vmem_limit_bytes = _default_vmem_limit_bytes()
    vmem_budget = (3 * vmem_limit_bytes) // 4    # headroom for Mosaic scratch

    # Pad node axis to a sublane multiple so in-kernel reshapes are free.
    Np = max(8, ((N + 7) // 8) * 8)

    def _footprint(bt):
        rows = bt * Np
        graph_b = 2 * 2 * bt * Np * Np          # bf16, double-buffered
        node_b = 2 * 2 * rows * H               # bf16, double-buffered
        out_b = 2 * 4 * rows * H                # f32, double-buffered
        const_b = 2 * 4 * H * H + 4 * 3 * H     # single-buffered weights/biases
        temp_b = 40 * rows * H + 4 * bt * Np * Np   # live in-kernel temporaries
        return graph_b + node_b + out_b + const_b + temp_b

    # Batch tile: feed >= target_rows MXU rows per grid step, keep >= 2 grid
    # steps (both v7x TCs busy) and fit the VMEM budget.
    Bt = max(1, min(B, -(-target_rows // Np)))
    if B >= 2:
        Bt = min(Bt, -(-B // 2))
    while Bt > 1 and _footprint(Bt) > vmem_budget:
        Bt -= 1
    Bp = -(-B // Bt) * Bt
    grid = (Bp // Bt,)

    # bf16 inputs in HBM; plain zero padding (where-guarded rsqrt makes padded
    # rows safe), skipped entirely when shapes already align.
    graph_bf = graph.astype(jnp.bfloat16)
    node_bf = node.astype(jnp.bfloat16)
    if (Bp, Np) != (B, N):
        graph_bf = jnp.pad(graph_bf, ((0, Bp - B), (0, Np - N), (0, Np - N)))
        node_bf = jnp.pad(node_bf, ((0, Bp - B), (0, Np - N), (0, 0)))
    node2d = node_bf.reshape(Bp * Np, H)

    # Pre-transpose + bf16-cast weights once (MXU operands, f32 accumulation);
    # stack the constant operands so they are 2 DMAs instead of 7.
    w1t = params["w1"].T
    w2t = params["w2"].T
    woat = params["wo"][:, :H].T
    wobt = params["wo"][:, H:].T
    w_stack = jnp.stack([w1t, w2t, woat, wobt]).astype(jnp.bfloat16)   # (4,H,H)
    b_stack = jnp.stack([params["b1"], params["b2"], params["bo"]]
                        ).astype(jnp.float32)                          # (3,H)

    def _call(single_buffer_consts):
        const_kw = ({"pipeline_mode": pl.Buffered(1)}
                    if single_buffer_consts else {})
        return pl.pallas_call(
            _parse_graph_kernel,
            out_shape=jax.ShapeDtypeStruct((Bp * Np, H), jnp.float32),
            grid=grid,
            in_specs=[
                pl.BlockSpec((Bt, Np, Np), lambda i: (i, 0, 0)),     # graph
                pl.BlockSpec((Bt * Np, H), lambda i: (i, 0)),        # node rows
                pl.BlockSpec((4, H, H), lambda i: (0, 0, 0), **const_kw),
                pl.BlockSpec((3, H), lambda i: (0, 0), **const_kw),
            ],
            out_specs=pl.BlockSpec((Bt * Np, H), lambda i: (i, 0)),
            compiler_params=pltpu.CompilerParams(
                dimension_semantics=("parallel",),   # megacore-shard the batch
                vmem_limit_bytes=vmem_limit_bytes,
            ),
        )(graph_bf, node2d, w_stack, b_stack)

    try:
        out2d = jax.block_until_ready(_call(True))
    except Exception:
        # TODO(synk): drop fallback once pl.Buffered(1) single-buffering of
        # constant operands is confirmed on the deployed jax/Mosaic version.
        out2d = _call(False)

    return out2d.reshape(Bp, Np, H)[:B, :N, :]


def _reference_forward(node, graph, params):
    """Pure-JAX (f32) mirror of the PyTorch forward for validation."""
    graph = graph.astype(jnp.float32)
    d = graph.sum(axis=2)                               # per-batch row sums
    dinv = 1.0 / jnp.sqrt(d)
    gn = graph * dinv[:, :, None] * dinv[:, None, :]

    def linear(x, w, b):
        return jnp.einsum("bnh,oh->bno", x, w) + b

    node_info = jax.nn.relu(linear(jnp.matmul(gn, node), params["w1"], params["b1"]))
    node_info = jax.nn.relu(linear(jnp.matmul(gn, node_info), params["w2"], params["b2"]))
    agg = jnp.concatenate([node, node_info], axis=2)
    return jax.nn.relu(linear(agg, params["wo"], params["bo"]))


if __name__ == "__main__":
    # Small but non-trivial shapes: exercises batch tiling (grid of 2 steps),
    # node padding (12 -> 16) and a lane-dense H (multiple of 128).
    B, N, H = 30, 12, 128
    key = jax.random.PRNGKey(0)
    k_node, k_graph, k1, k2, k3, k4, k5, k6 = jax.random.split(key, 8)

    node = jax.random.normal(k_node, (B, N, H), dtype=jnp.float32)
    # Binary adjacency with self loops so every row sum is >= 1.
    adj = (jax.random.uniform(k_graph, (B, N, N)) > 0.5).astype(jnp.float32)
    graph = jnp.clip(adj + jnp.eye(N, dtype=jnp.float32)[None], 0.0, 1.0)

    scale = 1.0 / jnp.sqrt(jnp.float32(H))
    params = {
        # nn.Linear(hidden, hidden): weight (out, in), bias (out,)
        "w1": jax.random.normal(k1, (H, H), dtype=jnp.float32) * scale,
        "b1": jax.random.normal(k2, (H,), dtype=jnp.float32) * scale,
        "w2": jax.random.normal(k3, (H, H), dtype=jnp.float32) * scale,
        "b2": jax.random.normal(k4, (H,), dtype=jnp.float32) * scale,
        # nn.Linear(2*hidden, hidden): weight (H, 2H), bias (H,)
        "wo": jax.random.normal(k5, (H, 2 * H), dtype=jnp.float32) * scale,
        "bo": jax.random.normal(k6, (H,), dtype=jnp.float32) * scale,
    }

    out = parse_graph_forward(node, graph, params)
    out = jax.block_until_ready(out)

    ref = _reference_forward(node, graph, params)
    assert out.shape == (B, N, H)
    max_err = float(jnp.max(jnp.abs(out - ref)))
    # bf16 HBM inputs + bf16 MXU operands with f32 accumulation.
    assert jnp.allclose(out, ref, atol=5e-2, rtol=5e-2), (
        "mismatch vs reference: max abs err = %g" % max_err)

    print("KERNEL_OK")
</pallas_src>

<mosaic_0001>
module attributes {stable_mosaic.version = 11 : i64} {
  func.func @_parse_graph_kernel(%arg0: i32, %arg1: memref<15x16x16xbf16, #tpu.memory_space<vmem>>, %arg2: memref<240x128xbf16, #tpu.memory_space<vmem>>, %arg3: memref<4x128x128xbf16, #tpu.memory_space<vmem>>, %arg4: memref<3x128xf32, #tpu.memory_space<vmem>>, %arg5: memref<240x128xf32, #tpu.memory_space<vmem>>) attributes {dimension_semantics = [#tpu.dimension_semantics<parallel>], iteration_bounds = array<i64: 2>, scalar_prefetch = 0 : i64, scratch_operands = 0 : i64, tpu.core_type = #tpu.core_type<tc>, window_params = [{transform_indices = @transform_0, window_bounds = array<i64: 15, 16, 16>}, {transform_indices = @transform_1, window_bounds = array<i64: 240, 128>}, {pipeline_mode = #tpu.pipeline_mode<synchronous>, transform_indices = @transform_2, window_bounds = array<i64: 4, 128, 128>}, {pipeline_mode = #tpu.pipeline_mode<synchronous>, transform_indices = @transform_3, window_bounds = array<i64: 3, 128>}, {transform_indices = @transform_4, window_bounds = array<i64: 240, 128>}]} {
    %c0 = arith.constant 0 : index
    %c0_0 = arith.constant 0 : index
    %c0_1 = arith.constant 0 : index
    %0 = vector.load %arg1[%c0, %c0_0, %c0_1] : memref<15x16x16xbf16, #tpu.memory_space<vmem>>, vector<15x16x16xbf16>
    %c0_2 = arith.constant 0 : index
    %c0_3 = arith.constant 0 : index
    %1 = vector.load %arg2[%c0_2, %c0_3] : memref<240x128xbf16, #tpu.memory_space<vmem>>, vector<240x128xbf16>
    %2 = arith.extf %0 : vector<15x16x16xbf16> to vector<15x16x16xf32>
    %cst = arith.constant dense<0.000000e+00> : vector<15x16xf32>
    %3 = vector.multi_reduction <add>, %2, %cst [2] : vector<15x16x16xf32> to vector<15x16xf32>
    %4 = vector.shape_cast %3 : vector<15x16xf32> to vector<15x16x1xf32>
    %cst_4 = arith.constant 0.000000e+00 : f32
    %5 = vector.broadcast %cst_4 : f32 to vector<15x16x1xf32>
    %6 = arith.cmpf ogt, %4, %5 : vector<15x16x1xf32>
    %7 = math.rsqrt %4 : vector<15x16x1xf32>
    %cst_5 = arith.constant 0.000000e+00 : f32
    %8 = vector.broadcast %cst_5 : f32 to vector<15x16x1xf32>
    %9 = arith.select %6, %7, %8 : vector<15x16x1xi1>, vector<15x16x1xf32>
    %c0_6 = arith.constant 0 : index
    %c0_7 = arith.constant 0 : index
    %c0_8 = arith.constant 0 : index
    %10 = vector.load %arg3[%c0_6, %c0_7, %c0_8] : memref<4x128x128xbf16, #tpu.memory_space<vmem>>, vector<1x128x128xbf16>
    %11 = vector.shape_cast %10 : vector<1x128x128xbf16> to vector<128x128xbf16>
    %c1 = arith.constant 1 : index
    %c0_9 = arith.constant 0 : index
    %c0_10 = arith.constant 0 : index
    %12 = vector.load %arg3[%c1, %c0_9, %c0_10] : memref<4x128x128xbf16, #tpu.memory_space<vmem>>, vector<1x128x128xbf16>
    %13 = vector.shape_cast %12 : vector<1x128x128xbf16> to vector<128x128xbf16>
    %c2 = arith.constant 2 : index
    %c0_11 = arith.constant 0 : index
    %c0_12 = arith.constant 0 : index
    %14 = vector.load %arg3[%c2, %c0_11, %c0_12] : memref<4x128x128xbf16, #tpu.memory_space<vmem>>, vector<1x128x128xbf16>
    %15 = vector.shape_cast %14 : vector<1x128x128xbf16> to vector<128x128xbf16>
    %c3 = arith.constant 3 : index
    %c0_13 = arith.constant 0 : index
    %c0_14 = arith.constant 0 : index
    %16 = vector.load %arg3[%c3, %c0_13, %c0_14] : memref<4x128x128xbf16, #tpu.memory_space<vmem>>, vector<1x128x128xbf16>
    %17 = vector.shape_cast %16 : vector<1x128x128xbf16> to vector<128x128xbf16>
    %c0_15 = arith.constant 0 : index
    %c0_16 = arith.constant 0 : index
    %18 = vector.load %arg4[%c0_15, %c0_16] : memref<3x128xf32, #tpu.memory_space<vmem>>, vector<1x128xf32>
    %c1_17 = arith.constant 1 : index
    %c0_18 = arith.constant 0 : index
    %19 = vector.load %arg4[%c1_17, %c0_18] : memref<3x128xf32, #tpu.memory_space<vmem>>, vector<1x128xf32>
    %c2_19 = arith.constant 2 : index
    %c0_20 = arith.constant 0 : index
    %20 = vector.load %arg4[%c2_19, %c0_20] : memref<3x128xf32, #tpu.memory_space<vmem>>, vector<1x128xf32>
    %21 = vector.shape_cast %1 : vector<240x128xbf16> to vector<15x16x128xbf16>
    %22 = arith.extf %21 : vector<15x16x128xbf16> to vector<15x16x128xf32>
    %23 = vector.broadcast %9 : vector<15x16x1xf32> to vector<15x16x128xf32>
    %24 = arith.mulf %23, %22 : vector<15x16x128xf32>
    %25 = arith.truncf %24 : vector<15x16x128xf32> to vector<15x16x128xbf16>
    "tpu.trace_start"() <{level = 10 : i32, message = "bij,bjh->bih"}> : () -> ()
    %cst_21 = arith.constant dense<0.000000e+00> : vector<15x16x128xf32>
    %26 = tpu.matmul %0, %25, %cst_21 {dimension_numbers = #tpu.dot_dimension_numbers<[2], [1], [1], [2], [0, 0, 0, 1, 1, 2], [0], [0]>} : vector<15x16x16xbf16>, vector<15x16x128xbf16>, vector<15x16x128xf32> -> vector<15x16x128xf32>
    "tpu.trace_stop"() : () -> ()
    %27 = vector.broadcast %9 : vector<15x16x1xf32> to vector<15x16x128xf32>
    %28 = arith.mulf %27, %26 : vector<15x16x128xf32>
    %29 = vector.shape_cast %28 : vector<15x16x128xf32> to vector<240x128xf32>
    %30 = arith.truncf %29 : vector<240x128xf32> to vector<240x128xbf16>
    %cst_22 = arith.constant dense<0.000000e+00> : vector<240x128xf32>
    %31 = tpu.matmul %30, %11, %cst_22 {dimension_numbers = #tpu.dot_dimension_numbers<[1], [0], [0], [1], [0, 0, 1, 1], [], []>} : vector<240x128xbf16>, vector<128x128xbf16>, vector<240x128xf32> -> vector<240x128xf32>
    %32 = vector.broadcast %18 : vector<1x128xf32> to vector<240x128xf32>
    %33 = arith.addf %31, %32 : vector<240x128xf32>
    %cst_23 = arith.constant 0.000000e+00 : f32
    %34 = vector.broadcast %cst_23 : f32 to vector<240x128xf32>
    %35 = arith.maximumf %33, %34 : vector<240x128xf32>
    %36 = vector.shape_cast %35 : vector<240x128xf32> to vector<15x16x128xf32>
    %37 = vector.broadcast %9 : vector<15x16x1xf32> to vector<15x16x128xf32>
    %38 = arith.mulf %37, %36 : vector<15x16x128xf32>
    %39 = arith.truncf %38 : vector<15x16x128xf32> to vector<15x16x128xbf16>
    "tpu.trace_start"() <{level = 10 : i32, message = "bij,bjh->bih"}> : () -> ()
    %cst_24 = arith.constant dense<0.000000e+00> : vector<15x16x128xf32>
    %40 = tpu.matmul %0, %39, %cst_24 {dimension_numbers = #tpu.dot_dimension_numbers<[2], [1], [1], [2], [0, 0, 0, 1, 1, 2], [0], [0]>} : vector<15x16x16xbf16>, vector<15x16x128xbf16>, vector<15x16x128xf32> -> vector<15x16x128xf32>
    "tpu.trace_stop"() : () -> ()
    %41 = vector.broadcast %9 : vector<15x16x1xf32> to vector<15x16x128xf32>
    %42 = arith.mulf %41, %40 : vector<15x16x128xf32>
    %43 = vector.shape_cast %42 : vector<15x16x128xf32> to vector<240x128xf32>
    %44 = arith.truncf %43 : vector<240x128xf32> to vector<240x128xbf16>
    %cst_25 = arith.constant dense<0.000000e+00> : vector<240x128xf32>
    %45 = tpu.matmul %44, %13, %cst_25 {dimension_numbers = #tpu.dot_dimension_numbers<[1], [0], [0], [1], [0, 0, 1, 1], [], []>} : vector<240x128xbf16>, vector<128x128xbf16>, vector<240x128xf32> -> vector<240x128xf32>
    %46 = vector.broadcast %19 : vector<1x128xf32> to vector<240x128xf32>
    %47 = arith.addf %45, %46 : vector<240x128xf32>
    %cst_26 = arith.constant 0.000000e+00 : f32
    %48 = vector.broadcast %cst_26 : f32 to vector<240x128xf32>
    %49 = arith.maximumf %47, %48 : vector<240x128xf32>
    %cst_27 = arith.constant dense<0.000000e+00> : vector<240x128xf32>
    %50 = tpu.matmul %1, %15, %cst_27 {dimension_numbers = #tpu.dot_dimension_numbers<[1], [0], [0], [1], [0, 0, 1, 1], [], []>} : vector<240x128xbf16>, vector<128x128xbf16>, vector<240x128xf32> -> vector<240x128xf32>
    %51 = arith.truncf %49 : vector<240x128xf32> to vector<240x128xbf16>
    %cst_28 = arith.constant dense<0.000000e+00> : vector<240x128xf32>
    %52 = tpu.matmul %51, %17, %cst_28 {dimension_numbers = #tpu.dot_dimension_numbers<[1], [0], [0], [1], [0, 0, 1, 1], [], []>} : vector<240x128xbf16>, vector<128x128xbf16>, vector<240x128xf32> -> vector<240x128xf32>
    %53 = arith.addf %50, %52 : vector<240x128xf32>
    %54 = vector.broadcast %20 : vector<1x128xf32> to vector<240x128xf32>
    %55 = arith.addf %53, %54 : vector<240x128xf32>
    %cst_29 = arith.constant 0.000000e+00 : f32
    %56 = vector.broadcast %cst_29 : f32 to vector<240x128xf32>
    %57 = arith.maximumf %55, %56 : vector<240x128xf32>
    %c0_30 = arith.constant 0 : index
    %c0_31 = arith.constant 0 : index
    %58 = vector.load %arg5[%c0_30, %c0_31] : memref<240x128xf32, #tpu.memory_space<vmem>>, vector<240x128xf32>
    tpu.vector_store %arg5[%c0_30, %c0_31], %57 {strides = array<i32>} : memref<240x128xf32, #tpu.memory_space<vmem>>, vector<240x128xf32>,
    return
  }
  func.func @transform_0(%arg0: i32) -> (i32, i32, i32) {
    %c0_i32 = arith.constant 0 : i32
    %c0_i32_0 = arith.constant 0 : i32
    %c0_i32_1 = arith.constant 0 : i32
    return %arg0, %c0_i32, %c0_i32_0 : i32, i32, i32
  }
  func.func @transform_1(%arg0: i32) -> (i32, i32) {
    %c0_i32 = arith.constant 0 : i32
    %c0_i32_0 = arith.constant 0 : i32
    return %arg0, %c0_i32 : i32, i32
  }
  func.func @transform_2(%arg0: i32) -> (i32, i32, i32) {
    %c0_i32 = arith.constant 0 : i32
    %c0_i32_0 = arith.constant 0 : i32
    %c0_i32_1 = arith.constant 0 : i32
    %c0_i32_2 = arith.constant 0 : i32
    return %c0_i32, %c0_i32_0, %c0_i32_1 : i32, i32, i32
  }
  func.func @transform_3(%arg0: i32) -> (i32, i32) {
    %c0_i32 = arith.constant 0 : i32
    %c0_i32_0 = arith.constant 0 : i32
    %c0_i32_1 = arith.constant 0 : i32
    return %c0_i32, %c0_i32_0 : i32, i32
  }
  func.func @transform_4(%arg0: i32) -> (i32, i32) {
    %c0_i32 = arith.constant 0 : i32
    %c0_i32_0 = arith.constant 0 : i32
    return %arg0, %c0_i32 : i32, i32
  }
}

module attributes {stable_mosaic.version = 11 : i64} {
  func.func @_parse_graph_kernel(%arg0: i32, %arg1: memref<15x16x16xbf16, #tpu.memory_space<vmem>>, %arg2: memref<240x128xbf16, #tpu.memory_space<vmem>>, %arg3: memref<4x128x128xbf16, #tpu.memory_space<vmem>>, %arg4: memref<3x128xf32, #tpu.memory_space<vmem>>, %arg5: memref<240x128xf32, #tpu.memory_space<vmem>>) attributes {dimension_semantics = [#tpu.dimension_semantics<parallel>], iteration_bounds = array<i64: 2>, scalar_prefetch = 0 : i64, scratch_operands = 0 : i64, tpu.core_type = #tpu.core_type<tc>, window_params = [{transform_indices = @transform_0, window_bounds = array<i64: 15, 16, 16>}, {transform_indices = @transform_1, window_bounds = array<i64: 240, 128>}, {pipeline_mode = #tpu.pipeline_mode<synchronous>, transform_indices = @transform_2, window_bounds = array<i64: 4, 128, 128>}, {pipeline_mode = #tpu.pipeline_mode<synchronous>, transform_indices = @transform_3, window_bounds = array<i64: 3, 128>}, {transform_indices = @transform_4, window_bounds = array<i64: 240, 128>}]} {
    %c0 = arith.constant 0 : index
    %c0_0 = arith.constant 0 : index
    %c0_1 = arith.constant 0 : index
    %0 = vector.load %arg1[%c0, %c0_0, %c0_1] : memref<15x16x16xbf16, #tpu.memory_space<vmem>>, vector<15x16x16xbf16>
    %c0_2 = arith.constant 0 : index
    %c0_3 = arith.constant 0 : index
    %1 = vector.load %arg2[%c0_2, %c0_3] : memref<240x128xbf16, #tpu.memory_space<vmem>>, vector<240x128xbf16>
    %2 = arith.extf %0 : vector<15x16x16xbf16> to vector<15x16x16xf32>
    %cst = arith.constant dense<0.000000e+00> : vector<15x16xf32>
    %3 = vector.multi_reduction <add>, %2, %cst [2] : vector<15x16x16xf32> to vector<15x16xf32>
    %4 = vector.shape_cast %3 : vector<15x16xf32> to vector<15x16x1xf32>
    %cst_4 = arith.constant 0.000000e+00 : f32
    %5 = vector.broadcast %cst_4 : f32 to vector<15x16x1xf32>
    %6 = arith.cmpf ogt, %4, %5 : vector<15x16x1xf32>
    %7 = math.rsqrt %4 : vector<15x16x1xf32>
    %cst_5 = arith.constant 0.000000e+00 : f32
    %8 = vector.broadcast %cst_5 : f32 to vector<15x16x1xf32>
    %9 = arith.select %6, %7, %8 : vector<15x16x1xi1>, vector<15x16x1xf32>
    %c0_6 = arith.constant 0 : index
    %c0_7 = arith.constant 0 : index
    %c0_8 = arith.constant 0 : index
    %10 = vector.load %arg3[%c0_6, %c0_7, %c0_8] : memref<4x128x128xbf16, #tpu.memory_space<vmem>>, vector<1x128x128xbf16>
    %11 = vector.shape_cast %10 : vector<1x128x128xbf16> to vector<128x128xbf16>
    %c1 = arith.constant 1 : index
    %c0_9 = arith.constant 0 : index
    %c0_10 = arith.constant 0 : index
    %12 = vector.load %arg3[%c1, %c0_9, %c0_10] : memref<4x128x128xbf16, #tpu.memory_space<vmem>>, vector<1x128x128xbf16>
    %13 = vector.shape_cast %12 : vector<1x128x128xbf16> to vector<128x128xbf16>
    %c2 = arith.constant 2 : index
    %c0_11 = arith.constant 0 : index
    %c0_12 = arith.constant 0 : index
    %14 = vector.load %arg3[%c2, %c0_11, %c0_12] : memref<4x128x128xbf16, #tpu.memory_space<vmem>>, vector<1x128x128xbf16>
    %15 = vector.shape_cast %14 : vector<1x128x128xbf16> to vector<128x128xbf16>
    %c3 = arith.constant 3 : index
    %c0_13 = arith.constant 0 : index
    %c0_14 = arith.constant 0 : index
    %16 = vector.load %arg3[%c3, %c0_13, %c0_14] : memref<4x128x128xbf16, #tpu.memory_space<vmem>>, vector<1x128x128xbf16>
    %17 = vector.shape_cast %16 : vector<1x128x128xbf16> to vector<128x128xbf16>
    %c0_15 = arith.constant 0 : index
    %c0_16 = arith.constant 0 : index
    %18 = vector.load %arg4[%c0_15, %c0_16] : memref<3x128xf32, #tpu.memory_space<vmem>>, vector<1x128xf32>
    %c1_17 = arith.constant 1 : index
    %c0_18 = arith.constant 0 : index
    %19 = vector.load %arg4[%c1_17, %c0_18] : memref<3x128xf32, #tpu.memory_space<vmem>>, vector<1x128xf32>
    %c2_19 = arith.constant 2 : index
    %c0_20 = arith.constant 0 : index
    %20 = vector.load %arg4[%c2_19, %c0_20] : memref<3x128xf32, #tpu.memory_space<vmem>>, vector<1x128xf32>
    %21 = vector.shape_cast %1 : vector<240x128xbf16> to vector<15x16x128xbf16>
    %22 = arith.extf %21 : vector<15x16x128xbf16> to vector<15x16x128xf32>
    %23 = vector.broadcast %9 : vector<15x16x1xf32> to vector<15x16x128xf32>
    %24 = arith.mulf %23, %22 : vector<15x16x128xf32>
    %25 = arith.truncf %24 : vector<15x16x128xf32> to vector<15x16x128xbf16>
    "tpu.trace_start"() <{level = 10 : i32, message = "bij,bjh->bih"}> : () -> ()
    %cst_21 = arith.constant dense<0.000000e+00> : vector<15x16x128xf32>
    %26 = tpu.matmul %0, %25, %cst_21 {dimension_numbers = #tpu.dot_dimension_numbers<[2], [1], [1], [2], [0, 0, 0, 1, 1, 2], [0], [0]>} : vector<15x16x16xbf16>, vector<15x16x128xbf16>, vector<15x16x128xf32> -> vector<15x16x128xf32>
    "tpu.trace_stop"() : () -> ()
    %27 = vector.broadcast %9 : vector<15x16x1xf32> to vector<15x16x128xf32>
    %28 = arith.mulf %27, %26 : vector<15x16x128xf32>
    %29 = vector.shape_cast %28 : vector<15x16x128xf32> to vector<240x128xf32>
    %30 = arith.truncf %29 : vector<240x128xf32> to vector<240x128xbf16>
    %cst_22 = arith.constant dense<0.000000e+00> : vector<240x128xf32>
    %31 = tpu.matmul %30, %11, %cst_22 {dimension_numbers = #tpu.dot_dimension_numbers<[1], [0], [0], [1], [0, 0, 1, 1], [], []>} : vector<240x128xbf16>, vector<128x128xbf16>, vector<240x128xf32> -> vector<240x128xf32>
    %32 = vector.broadcast %18 : vector<1x128xf32> to vector<240x128xf32>
    %33 = arith.addf %31, %32 : vector<240x128xf32>
    %cst_23 = arith.constant 0.000000e+00 : f32
    %34 = vector.broadcast %cst_23 : f32 to vector<240x128xf32>
    %35 = arith.maximumf %33, %34 : vector<240x128xf32>
    %36 = vector.shape_cast %35 : vector<240x128xf32> to vector<15x16x128xf32>
    %37 = vector.broadcast %9 : vector<15x16x1xf32> to vector<15x16x128xf32>
    %38 = arith.mulf %37, %36 : vector<15x16x128xf32>
    %39 = arith.truncf %38 : vector<15x16x128xf32> to vector<15x16x128xbf16>
    "tpu.trace_start"() <{level = 10 : i32, message = "bij,bjh->bih"}> : () -> ()
    %cst_24 = arith.constant dense<0.000000e+00> : vector<15x16x128xf32>
    %40 = tpu.matmul %0, %39, %cst_24 {dimension_numbers = #tpu.dot_dimension_numbers<[2], [1], [1], [2], [0, 0, 0, 1, 1, 2], [0], [0]>} : vector<15x16x16xbf16>, vector<15x16x128xbf16>, vector<15x16x128xf32> -> vector<15x16x128xf32>
    "tpu.trace_stop"() : () -> ()
    %41 = vector.broadcast %9 : vector<15x16x1xf32> to vector<15x16x128xf32>
    %42 = arith.mulf %41, %40 : vector<15x16x128xf32>
    %43 = vector.shape_cast %42 : vector<15x16x128xf32> to vector<240x128xf32>
    %44 = arith.truncf %43 : vector<240x128xf32> to vector<240x128xbf16>
    %cst_25 = arith.constant dense<0.000000e+00> : vector<240x128xf32>
    %45 = tpu.matmul %44, %13, %cst_25 {dimension_numbers = #tpu.dot_dimension_numbers<[1], [0], [0], [1], [0, 0, 1, 1], [], []>} : vector<240x128xbf16>, vector<128x128xbf16>, vector<240x128xf32> -> vector<240x128xf32>
    %46 = vector.broadcast %19 : vector<1x128xf32> to vector<240x128xf32>
    %47 = arith.addf %45, %46 : vector<240x128xf32>
    %cst_26 = arith.constant 0.000000e+00 : f32
    %48 = vector.broadcast %cst_26 : f32 to vector<240x128xf32>
    %49 = arith.maximumf %47, %48 : vector<240x128xf32>
    %cst_27 = arith.constant dense<0.000000e+00> : vector<240x128xf32>
    %50 = tpu.matmul %1, %15, %cst_27 {dimension_numbers = #tpu.dot_dimension_numbers<[1], [0], [0], [1], [0, 0, 1, 1], [], []>} : vector<240x128xbf16>, vector<128x128xbf16>, vector<240x128xf32> -> vector<240x128xf32>
    %51 = arith.truncf %49 : vector<240x128xf32> to vector<240x128xbf16>
    %cst_28 = arith.constant dense<0.000000e+00> : vector<240x128xf32>
    %52 = tpu.matmul %51, %17, %cst_28 {dimension_numbers = #tpu.dot_dimension_numbers<[1], [0], [0], [1], [0, 0, 1, 1], [], []>} : vector<240x128xbf16>, vector<128x128xbf16>, vector<240x128xf32> -> vector<240x128xf32>
    %53 = arith.addf %50, %52 : vector<240x128xf32>
    %54 = vector.broadcast %20 : vector<1x128xf32> to vector<240x128xf32>
    %55 = arith.addf %53, %54 : vector<240x128xf32>
    %cst_29 = arith.constant 0.000000e+00 : f32
    %56 = vector.broadcast %cst_29 : f32 to vector<240x128xf32>
    %57 = arith.maximumf %55, %56 : vector<240x128xf32>
    %c0_30 = arith.constant 0 : index
    %c0_31 = arith.constant 0 : index
    %58 = vector.load %arg5[%c0_30, %c0_31] : memref<240x128xf32, #tpu.memory_space<vmem>>, vector<240x128xf32>
    tpu.vector_store %arg5[%c0_30, %c0_31], %57 {strides = array<i32>} : memref<240x128xf32, #tpu.memory_space<vmem>>, vector<240x128xf32>,
    return
  }
  func.func @transform_0(%arg0: i32) -> (i32, i32, i32) {
    %c0_i32 = arith.constant 0 : i32
    %c0_i32_0 = arith.constant 0 : i32
    %c0_i32_1 = arith.constant 0 : i32
    return %arg0, %c0_i32, %c0_i32_0 : i32, i32, i32
  }
  func.func @transform_1(%arg0: i32) -> (i32, i32) {
    %c0_i32 = arith.constant 0 : i32
    %c0_i32_0 = arith.constant 0 : i32
    return %arg0, %c0_i32 : i32, i32
  }
  func.func @transform_2(%arg0: i32) -> (i32, i32, i32) {
    %c0_i32 = arith.constant 0 : i32
    %c0_i32_0 = arith.constant 0 : i32
    %c0_i32_1 = arith.constant 0 : i32
    %c0_i32_2 = arith.constant 0 : i32
    return %c0_i32, %c0_i32_0, %c0_i32_1 : i32, i32, i32
  }
  func.func @transform_3(%arg0: i32) -> (i32, i32) {
    %c0_i32 = arith.constant 0 : i32
    %c0_i32_0 = arith.constant 0 : i32
    %c0_i32_1 = arith.constant 0 : i32
    return %c0_i32, %c0_i32_0 : i32, i32
  }
  func.func @transform_4(%arg0: i32) -> (i32, i32) {
    %c0_i32 = arith.constant 0 : i32
    %c0_i32_0 = arith.constant 0 : i32
    return %arg0, %c0_i32 : i32, i32
  }
}

</mosaic_0001>

<llo_original>
// kernel: tpu_custom_call.1
$region0: #{tpu_custom_call.1}
  #allocation0 [shape = 'u32[]', space=smem, size = 0x4, offset = 0x4, fixed_abs, tag = 'smem constant byte address 0x4 - core index']
  #allocation1 [shape = 'u32[72,128]{1,0:T(1,128)}', space=vmem, size = 0x9000, scoped, tag = 'internal scratch']
  %s0 = inlined_call_operand.vmem [shape: bf16[30,16,16], index: 0, kind: input, shape index: {}]
  %s1 = inlined_call_operand.hbm [shape: bf16[480,128], index: 1, kind: input, shape index: {}]
  %s2 = inlined_call_operand.vmem [shape: bf16[4,128,128], index: 2, kind: input, shape index: {}]
  %s3 = inlined_call_operand.vmem [shape: f32[3,128], index: 3, kind: input, shape index: {}]
  %s4 = inlined_call_operand.hbm [shape: f32[480,128], index: 4, kind: output, shape index: {}]
  %s5 = sld [smem:[#allocation0]]
  $region53: #{tpu_custom_call.1} parent=0
    _
  %s7 = ssub.s32 1, %s5
  %s8 = scalar_select 0, %s7, %s5
  $region1: #{tpu_custom_call.1} parent=0
    #allocation2 [shape = 'u8[122880]{0}', space=vmem, size = 0x1e000, scoped, tag = 'input window, operand 1']
    #allocation3 [shape = 's32[2]{0}', space=sflag, size = 0x8, scoped, tag = 'scoped memory for tpu_custom_call.1']
    #allocation4 [shape = 's32[2]{0}', space=sflag, size = 0x8, scoped, tag = 'scoped memory for tpu_custom_call.1']
    #allocation5 [shape = 'u8[245760]{0}', space=vmem, size = 0x3c000, scoped, tag = 'output window, operand 0']
    %9 = vsyncpa [#allocation3], 0
    %s10 = scalar_lea.sflag [#allocation3], 1
    %11 = vsyncpa %s10, 0
    %12 = vsyncpa [#allocation4], 0
    %s13 = scalar_lea.sflag [#allocation4], 1
    %14 = vsyncpa %s13, 0
    loop: start=0, step=1, limit=4
    $region2: #{tpu_custom_call.1} parent=1 // loop_pre_header
      _
    $region3: #{tpu_custom_call.1} parent=1 // loop_header
      %s16 = sphi 0, %s20
      %p17 = scmp.ge.s32.totalorder %s16, 4
      %s26 = sphi 0, %s28
      %s29 = sphi 0, %s26
      %s30 = sphi 0, %s29
      %s46 = sphi 0, %s30
      %s52 = sphi 0, %s54
      %s55 = sphi 0, %s52
      %s56 = sphi 0, %s55
      %s72 = sphi 0, %s56
      %s76 = sphi 0, %s76
      %s78 = sphi 0, %s76
      %s79 = sphi 0, %s78
      %s93 = sphi 0, %s79
      %s97 = sphi 0, %s97
      %s99 = sphi 0, %s97
      %s100 = sphi 0, %s99
      %s114 = sphi 0, %s100
      %s120 = sphi 0, %s122
      %s123 = sphi 0, %s120
      %s124 = sphi 0, %s123
      %s140 = sphi 0, %s124
    $region4: #{tpu_custom_call.1} parent=1 // loop_header_branch
      %19 = sbr.rel (%p17) target = $region8
    $region5: #{tpu_custom_call.1} parent=1 // loop_body
      %s21 = ssub.s32 %s16, 1
      %s22 = ssub.s32 %s16, 2
      %s23 = sadd.s32 %s16, 1
      %s24 = ssub.s32 %s16, %s23
      %p25 = scmp.eq.s32.totalorder %s24, 0
      %s27 = sadd.s32 %s26, 1
      %s28 = scalar_select %p25, %s26, %s27
      %p31 = pneg %p25
      %p32 = scmp.eq.s32.totalorder %s16, 1
      %p33 = por %p31, %p32
      %p34 = scmp.ne.s32.totalorder %s26, %s29
      %p35 = scmp.eq.s32.totalorder %s16, 0
      %p36 = por %p34, %p35
      %p37 = scmp.ne.s32.totalorder %s26, %s29
      %p38 = scmp.eq.s32.totalorder %s21, 1
      %p39 = por %p37, %p38
      %p40 = scmp.ne.s32.totalorder %s29, %s30
      %p41 = scmp.eq.s32.totalorder %s21, 0
      %p42 = por %p40, %p41
      %p43 = scmp.ne.s32.totalorder %s29, %s30
      %p44 = scmp.eq.s32.totalorder %s22, 1
      %p45 = por %p43, %p44
      %p47 = scmp.ne.s32.totalorder %s30, %s46
      %p48 = scmp.eq.s32.totalorder %s22, 0
      %p49 = por %p47, %p48
      %s50 = ssub.s32 %s16, %s23
      %p51 = scmp.eq.s32.totalorder %s50, 0
      %s53 = sadd.s32 %s52, 1
      %s54 = scalar_select %p51, %s52, %s53
      %p57 = pneg %p51
      %p58 = scmp.eq.s32.totalorder %s16, 1
      %p59 = por %p57, %p58
      %p60 = scmp.ne.s32.totalorder %s52, %s55
      %p61 = scmp.eq.s32.totalorder %s16, 0
      %p62 = por %p60, %p61
      %p63 = scmp.ne.s32.totalorder %s52, %s55
      %p64 = scmp.eq.s32.totalorder %s21, 1
      %p65 = por %p63, %p64
      %p66 = scmp.ne.s32.totalorder %s55, %s56
      %p67 = scmp.eq.s32.totalorder %s21, 0
      %p68 = por %p66, %p67
      %p69 = scmp.ne.s32.totalorder %s55, %s56
      %p70 = scmp.eq.s32.totalorder %s22, 1
      %p71 = por %p69, %p70
      %p73 = scmp.ne.s32.totalorder %s56, %s72
      %p74 = scmp.eq.s32.totalorder %s22, 0
      %p75 = por %p73, %p74
      %s77 = sadd.s32 %s76, 1
      %p80 = scmp.eq.s32.totalorder %s16, 1
      %p81 = scmp.ne.s32.totalorder %s76, %s78
      %p82 = scmp.eq.s32.totalorder %s16, 0
      %p83 = por %p81, %p82
      %p84 = scmp.ne.s32.totalorder %s76, %s78
      %p85 = scmp.eq.s32.totalorder %s21, 1
      %p86 = por %p84, %p85
      %p87 = scmp.ne.s32.totalorder %s78, %s79
      %p88 = scmp.eq.s32.totalorder %s21, 0
      %p89 = por %p87, %p88
      %p90 = scmp.ne.s32.totalorder %s78, %s79
      %p91 = scmp.eq.s32.totalorder %s22, 1
      %p92 = por %p90, %p91
      %p94 = scmp.ne.s32.totalorder %s79, %s93
      %p95 = scmp.eq.s32.totalorder %s22, 0
      %p96 = por %p94, %p95
      %s98 = sadd.s32 %s97, 1
      %p101 = scmp.eq.s32.totalorder %s16, 1
      %p102 = scmp.ne.s32.totalorder %s97, %s99
      %p103 = scmp.eq.s32.totalorder %s16, 0
      %p104 = por %p102, %p103
      %p105 = scmp.ne.s32.totalorder %s97, %s99
      %p106 = scmp.eq.s32.totalorder %s21, 1
      %p107 = por %p105, %p106
      %p108 = scmp.ne.s32.totalorder %s99, %s100
      %p109 = scmp.eq.s32.totalorder %s21, 0
      %p110 = por %p108, %p109
      %p111 = scmp.ne.s32.totalorder %s99, %s100
      %p112 = scmp.eq.s32.totalorder %s22, 1
      %p113 = por %p111, %p112
      %p115 = scmp.ne.s32.totalorder %s100, %s114
      %p116 = scmp.eq.s32.totalorder %s22, 0
      %p117 = por %p115, %p116
      %s118 = ssub.s32 %s16, %s23
      %p119 = scmp.eq.s32.totalorder %s118, 0
      %s121 = sadd.s32 %s120, 1
      %s122 = scalar_select %p119, %s120, %s121
      %p125 = pneg %p119
      %p126 = scmp.eq.s32.totalorder %s16, 1
      %p127 = por %p125, %p126
      %p128 = scmp.ne.s32.totalorder %s120, %s123
      %p129 = scmp.eq.s32.totalorder %s16, 0
      %p130 = por %p128, %p129
      %p131 = scmp.ne.s32.totalorder %s120, %s123
      %p132 = scmp.eq.s32.totalorder %s21, 1
      %p133 = por %p131, %p132
      %p134 = scmp.ne.s32.totalorder %s123, %s124
      %p135 = scmp.eq.s32.totalorder %s21, 0
      %p136 = por %p134, %p135
      %p137 = scmp.ne.s32.totalorder %s123, %s124
      %p138 = scmp.eq.s32.totalorder %s22, 1
      %p139 = por %p137, %p138
      %p141 = scmp.ne.s32.totalorder %s124, %s140
      %p142 = scmp.eq.s32.totalorder %s22, 0
      %p143 = por %p141, %p142
      %p144 = scmp.le.s32.totalorder 1, %s16
      %p145 = scmp.lt.s32.totalorder %s16, 3
      %p146 = pnand %p144, %p145
      %p147 = pneg %p146
      // Predicated region
      $region9: #{tpu_custom_call.1} parent=5 // pred_check
        _
      $region10: #{tpu_custom_call.1} parent=5 // pred_check_branch
        %149 = sbr.rel (%p146) target = $region12
      $region11: #{tpu_custom_call.1} parent=5 // pred_region
        %s150 = ssub.s32 %s16, 1
        // Predicated region
        $region13: #{tpu_custom_call.1} parent=11 // pred_check
          %p151 = pneg %p89
        $region14: #{tpu_custom_call.1} parent=11 // pred_check_branch
          %153 = sbr.rel (%p151) target = $region16
        $region15: #{tpu_custom_call.1} parent=11 // pred_region
          _
        $region16: #{tpu_custom_call.1} parent=11 // pred_fallthru
          _
        // Predicated region
        $region17: #{tpu_custom_call.1} parent=11 // pred_check
          %p154 = pneg %p110
        $region18: #{tpu_custom_call.1} parent=11 // pred_check_branch
          %156 = sbr.rel (%p154) target = $region20
        $region19: #{tpu_custom_call.1} parent=11 // pred_region
          _
        $region20: #{tpu_custom_call.1} parent=11 // pred_fallthru
          _
      $region12: #{tpu_custom_call.1} parent=5 // pred_fallthru
        _
      %p157 = scmp.lt.s32.totalorder %s16, 2
      // Predicated region
      $region21: #{tpu_custom_call.1} parent=5 // pred_check
        %p158 = pneg %p157
      $region22: #{tpu_custom_call.1} parent=5 // pred_check_branch
        %160 = sbr.rel (%p158) target = $region24
      $region23: #{tpu_custom_call.1} parent=5 // pred_region
        // Predicated region
        $region25: #{tpu_custom_call.1} parent=23 // pred_check
          %p161 = pneg %p36
        $region26: #{tpu_custom_call.1} parent=23 // pred_check_branch
          %163 = sbr.rel (%p161) target = $region28
        $region27: #{tpu_custom_call.1} parent=23 // pred_region
          %s164 = smul.u32 15, %s16
          %p165 = scmp.lt.s32.totalorder %s164, 29
          %s166 = scalar_select %p165, %s164, 29
          %s167 = smul.addr %s166, 2
          %s168 = smul.addr %s167, 4
          %s169 = scalar_lea.vmem %s0, %s168
          %s170 = smul.u32 15, %s16
        $region28: #{tpu_custom_call.1} parent=23 // pred_fallthru
          _
        // Predicated region
        $region29: #{tpu_custom_call.1} parent=23 // pred_check
          %p171 = pneg %p62
        $region30: #{tpu_custom_call.1} parent=23 // pred_check_branch
          %173 = sbr.rel (%p171) target = $region32
        $region31: #{tpu_custom_call.1} parent=23 // pred_region
          %s174 = sand.u32 %s52, 1
          %s175 = scalar_lea.sflag [#allocation3], %s174
          %s176 = sand.u32 %s52, 1
          %s177 = smul.addr %s176, 120
          %s178 = scalar_lea.vmem [#allocation2], %s177
          %s179 = smul.u32 30, %s16
          %181 = vsyncadd %s175, 0
          %s182 = smul.addr %s179, 4
          %s183 = scalar_lea.hbm %s1, %s182
          %s184 = sshll.u32 %s183, 4
          %s185 = int_to_ptr.hbm [resolvable:$true] %s184
          %s186 = sshll.u32 %s178, 4
          %s187 = int_to_ptr.vmem [resolvable:$true] %s186
          %192 = dma.hbm_to_vmem [thread:$0]  %s185, 1920, %s187, %s175, 64, 64, 4
        $region32: #{tpu_custom_call.1} parent=23 // pred_fallthru
          _
      $region24: #{tpu_custom_call.1} parent=5 // pred_fallthru
        _
      %p193 = scmp.le.s32.totalorder 1, %s16
      %p194 = scmp.lt.s32.totalorder %s16, 3
      %p195 = pnand %p193, %p194
      %p196 = pneg %p195
      // Predicated region
      $region33: #{tpu_custom_call.1} parent=5 // pred_check
        _
      $region34: #{tpu_custom_call.1} parent=5 // pred_check_branch
        %198 = sbr.rel (%p195) target = $region36
      $region35: #{tpu_custom_call.1} parent=5 // pred_region
        %s199 = ssub.s32 %s16, 1
        %s200 = sand.u32 %s55, 1
        %s201 = scalar_lea.sflag [#allocation3], %s200
        %s202 = sand.u32 %s55, 1
        %s203 = smul.addr %s202, 120
        %s204 = scalar_lea.vmem [#allocation2], %s203
        // Predicated region
        $region37: #{tpu_custom_call.1} parent=35 // pred_check
          %p205 = pneg %p68
        $region38: #{tpu_custom_call.1} parent=35 // pred_check_branch
          %207 = sbr.rel (%p205) target = $region40
        $region39: #{tpu_custom_call.1} parent=35 // pred_region
          %209 = dma.done %s201, 1920
        $region40: #{tpu_custom_call.1} parent=35 // pred_fallthru
          _
        %s210 = smul.u32 15, %s21
        %p211 = scmp.lt.s32.totalorder %s210, 29
        %s212 = scalar_select %p211, %s210, 29
        %s213 = smul.addr %s212, 2
        %s214 = smul.addr %s213, 4
        %s215 = scalar_lea.vmem %s0, %s214
        %p216 = pneg %p42
        %p217 = pneg %p39
        %s218 = sand.u32 %s55, 1
        %s219 = scalar_lea.sflag [#allocation3], %s218
        %s220 = sand.u32 %s55, 1
        %s221 = smul.addr %s220, 120
        %s222 = scalar_lea.vmem [#allocation2], %s221
        %p223 = pneg %p68
        %p224 = pneg %p65
        %p225 = pneg %p89
        %p226 = pneg %p86
        %p227 = pneg %p110
        %p228 = pneg %p107
        %p229 = pneg %p136
        %p230 = pneg %p133
        %s231 = sand.u32 %s123, 1
        %s232 = scalar_lea.sflag [#allocation4], %s231
        %s233 = sand.u32 %s123, 1
        %s234 = smul.addr %s233, 240
        %s235 = scalar_lea.vmem [#allocation5], %s234
        %s236 = smul.u32 15, %s21
        %p237 = scmp.lt.s32.totalorder %s236, 29
        %s238 = scalar_select %p237, %s236, 29
        %s239 = smul.addr %s238, 2
        %s240 = smul.addr %s239, 4
        %s241 = scalar_lea.vmem %s0, %s240
        %s242 = smul.u32 15, %s21
        %s243 = smul.u32 30, %s21
        %s244 = smul.u32 30, %s21
        %v246 = vld [vmem:[%s241] sm:$0xf]
        %v247 = vld [vmem:[%s241 + $0x4] sm:$0xf]
        %v248 = vld [vmem:[%s241 + $0x8] sm:$0xf]
        %v249 = vld [vmem:[%s241 + $0xc] sm:$0xf]
        %v250 = vld [vmem:[%s241 + $0x10] sm:$0xf]
        %v251 = vld [vmem:[%s241 + $0x14] sm:$0xf]
        %v252 = vld [vmem:[%s241 + $0x18] sm:$0xf]
        %v253 = vld [vmem:[%s241 + $0x1c] sm:$0xf]
        %v254 = vld [vmem:[%s241 + $0x20] sm:$0xf]
        %v255 = vld [vmem:[%s241 + $0x24] sm:$0xf]
        %v256 = vld [vmem:[%s241 + $0x28] sm:$0xf]
        %v257 = vld [vmem:[%s241 + $0x2c] sm:$0xf]
        %v258 = vld [vmem:[%s241 + $0x30] sm:$0xf]
        %v259 = vld [vmem:[%s241 + $0x34] sm:$0xf]
        %v260 = vld [vmem:[%s241 + $0x38] sm:$0xf]
        %v261 = vld [vmem:[%s241 + $0x3c] sm:$0xf]
        %v262 = vld [vmem:[%s241 + $0x40] sm:$0xf]
        %v263 = vld [vmem:[%s241 + $0x44] sm:$0xf]
        %v264 = vld [vmem:[%s241 + $0x48] sm:$0xf]
        %v265 = vld [vmem:[%s241 + $0x4c] sm:$0xf]
        %v266 = vld [vmem:[%s241 + $0x50] sm:$0xf]
        %v267 = vld [vmem:[%s241 + $0x54] sm:$0xf]
        %v268 = vld [vmem:[%s241 + $0x58] sm:$0xf]
        %v269 = vld [vmem:[%s241 + $0x5c] sm:$0xf]
        %v270 = vld [vmem:[%s241 + $0x60] sm:$0xf]
        %v271 = vld [vmem:[%s241 + $0x64] sm:$0xf]
        %v272 = vld [vmem:[%s241 + $0x68] sm:$0xf]
        %v273 = vld [vmem:[%s241 + $0x6c] sm:$0xf]
        %v274 = vld [vmem:[%s241 + $0x70] sm:$0xf]
        %v275 = vld [vmem:[%s241 + $0x74] sm:$0xf]
        %v276 = vld [vmem:[%s204] sm:$0xf]
        %v277 = vld [vmem:[%s204 + $0x4] sm:$0xf]
        %v278 = vld [vmem:[%s204 + $0x8] sm:$0xf]
        %v279 = vld [vmem:[%s204 + $0xc] sm:$0xf]
        %v280 = vld [vmem:[%s204 + $0x10] sm:$0xf]
        %v281 = vld [vmem:[%s204 + $0x14] sm:$0xf]
        %v282 = vld [vmem:[%s204 + $0x18] sm:$0xf]
        %v283 = vld [vmem:[%s204 + $0x1c] sm:$0xf]
        %v284 = vld [vmem:[%s204 + $0x20] sm:$0xf]
        %v285 = vld [vmem:[%s204 + $0x24] sm:$0xf]
        %v286 = vld [vmem:[%s204 + $0x28] sm:$0xf]
        %v287 = vld [vmem:[%s204 + $0x2c] sm:$0xf]
        %v288 = vld [vmem:[%s204 + $0x30] sm:$0xf]
        %v289 = vld [vmem:[%s204 + $0x34] sm:$0xf]
        %v290 = vld [vmem:[%s204 + $0x38] sm:$0xf]
        %v291 = vld [vmem:[%s204 + $0x3c] sm:$0xf]
        %v292 = vld [vmem:[%s204 + $0x40] sm:$0xf]
        %v293 = vld [vmem:[%s204 + $0x44] sm:$0xf]
        %v294 = vld [vmem:[%s204 + $0x48] sm:$0xf]
        %v295 = vld [vmem:[%s204 + $0x4c] sm:$0xf]
        %v296 = vld [vmem:[%s204 + $0x50] sm:$0xf]
        %v297 = vld [vmem:[%s204 + $0x54] sm:$0xf]
        %v298 = vld [vmem:[%s204 + $0x58] sm:$0xf]
        %v299 = vld [vmem:[%s204 + $0x5c] sm:$0xf]
        %v300 = vld [vmem:[%s204 + $0x60] sm:$0xf]
        %v301 = vld [vmem:[%s204 + $0x64] sm:$0xf]
        %v302 = vld [vmem:[%s204 + $0x68] sm:$0xf]
        %v303 = vld [vmem:[%s204 + $0x6c] sm:$0xf]
        %v304 = vld [vmem:[%s204 + $0x70] sm:$0xf]
        %v305 = vld [vmem:[%s204 + $0x74] sm:$0xf]
        %v306 = vunpack.c.l.bf16 %v246
        %v307 = vunpack.c.l.bf16 %v247
        %v308 = vunpack.c.l.bf16 %v248
        %v309 = vunpack.c.l.bf16 %v249
        %v310 = vunpack.c.l.bf16 %v250
        %v311 = vunpack.c.l.bf16 %v251
        %v312 = vunpack.c.l.bf16 %v252
        %v313 = vunpack.c.l.bf16 %v253
        %v314 = vunpack.c.l.bf16 %v254
        %v315 = vunpack.c.l.bf16 %v255
        %v316 = vunpack.c.l.bf16 %v256
        %v317 = vunpack.c.l.bf16 %v257
        %v318 = vunpack.c.l.bf16 %v258
        %v319 = vunpack.c.l.bf16 %v259
        %v320 = vunpack.c.l.bf16 %v260
        %v321 = vunpack.c.l.bf16 %v261
        %v322 = vunpack.c.l.bf16 %v262
        %v323 = vunpack.c.l.bf16 %v263
        %v324 = vunpack.c.l.bf16 %v264
        %v325 = vunpack.c.l.bf16 %v265
        %v326 = vunpack.c.l.bf16 %v266
        %v327 = vunpack.c.l.bf16 %v267
        %v328 = vunpack.c.l.bf16 %v268
        %v329 = vunpack.c.l.bf16 %v269
        %v330 = vunpack.c.l.bf16 %v270
        %v331 = vunpack.c.l.bf16 %v271
        %v332 = vunpack.c.l.bf16 %v272
        %v333 = vunpack.c.l.bf16 %v273
        %v334 = vunpack.c.l.bf16 %v274
        %v335 = vunpack.c.l.bf16 %v275
        %vm336 = vcmask 130048
        %v337 = vsel %vm336, %v306, 0.0
        %338 = vadd.xlane.f32.xlu0 %v337
        %v339 = vpop.xlane.xlu0 %338
        %v340 = vsel %vm336, %v307, 0.0
        %341 = vadd.xlane.f32.xlu0 %v340
        %v342 = vpop.xlane.xlu0 %341
        %v343 = vsel %vm336, %v308, 0.0
        %344 = vadd.xlane.f32.xlu0 %v343
        %v345 = vpop.xlane.xlu0 %344
        %v346 = vsel %vm336, %v309, 0.0
        %347 = vadd.xlane.f32.xlu0 %v346
        %v348 = vpop.xlane.xlu0 %347
        %v349 = vsel %vm336, %v310, 0.0
        %350 = vadd.xlane.f32.xlu0 %v349
        %v351 = vpop.xlane.xlu0 %350
        %v352 = vsel %vm336, %v311, 0.0
        %353 = vadd.xlane.f32.xlu0 %v352
        %v354 = vpop.xlane.xlu0 %353
        %v355 = vsel %vm336, %v312, 0.0
        %356 = vadd.xlane.f32.xlu0 %v355
        %v357 = vpop.xlane.xlu0 %356
        %v358 = vsel %vm336, %v313, 0.0
        %359 = vadd.xlane.f32.xlu0 %v358
        %v360 = vpop.xlane.xlu0 %359
        %v361 = vsel %vm336, %v314, 0.0
        %362 = vadd.xlane.f32.xlu0 %v361
        %v363 = vpop.xlane.xlu0 %362
        %v364 = vsel %vm336, %v315, 0.0
        %365 = vadd.xlane.f32.xlu0 %v364
        %v366 = vpop.xlane.xlu0 %365
        %v367 = vsel %vm336, %v316, 0.0
        %368 = vadd.xlane.f32.xlu0 %v367
        %v369 = vpop.xlane.xlu0 %368
        %v370 = vsel %vm336, %v317, 0.0
        %371 = vadd.xlane.f32.xlu0 %v370
        %v372 = vpop.xlane.xlu0 %371
        %v373 = vsel %vm336, %v318, 0.0
        %374 = vadd.xlane.f32.xlu0 %v373
        %v375 = vpop.xlane.xlu0 %374
        %v376 = vsel %vm336, %v319, 0.0
        %377 = vadd.xlane.f32.xlu0 %v376
        %v378 = vpop.xlane.xlu0 %377
        %v379 = vsel %vm336, %v320, 0.0
        %380 = vadd.xlane.f32.xlu0 %v379
        %v381 = vpop.xlane.xlu0 %380
        %v382 = vsel %vm336, %v321, 0.0
        %383 = vadd.xlane.f32.xlu0 %v382
        %v384 = vpop.xlane.xlu0 %383
        %v385 = vsel %vm336, %v322, 0.0
        %386 = vadd.xlane.f32.xlu0 %v385
        %v387 = vpop.xlane.xlu0 %386
        %v388 = vsel %vm336, %v323, 0.0
        %389 = vadd.xlane.f32.xlu0 %v388
        %v390 = vpop.xlane.xlu0 %389
        %v391 = vsel %vm336, %v324, 0.0
        %392 = vadd.xlane.f32.xlu0 %v391
        %v393 = vpop.xlane.xlu0 %392
        %v394 = vsel %vm336, %v325, 0.0
        %395 = vadd.xlane.f32.xlu0 %v394
        %v396 = vpop.xlane.xlu0 %395
        %v397 = vsel %vm336, %v326, 0.0
        %398 = vadd.xlane.f32.xlu0 %v397
        %v399 = vpop.xlane.xlu0 %398
        %v400 = vsel %vm336, %v327, 0.0
        %401 = vadd.xlane.f32.xlu0 %v400
        %v402 = vpop.xlane.xlu0 %401
        %v403 = vsel %vm336, %v328, 0.0
        %404 = vadd.xlane.f32.xlu0 %v403
        %v405 = vpop.xlane.xlu0 %404
        %v406 = vsel %vm336, %v329, 0.0
        %407 = vadd.xlane.f32.xlu0 %v406
        %v408 = vpop.xlane.xlu0 %407
        %v409 = vsel %vm336, %v330, 0.0
        %410 = vadd.xlane.f32.xlu0 %v409
        %v411 = vpop.xlane.xlu0 %410
        %v412 = vsel %vm336, %v331, 0.0
        %413 = vadd.xlane.f32.xlu0 %v412
        %v414 = vpop.xlane.xlu0 %413
        %v415 = vsel %vm336, %v332, 0.0
        %416 = vadd.xlane.f32.xlu0 %v415
        %v417 = vpop.xlane.xlu0 %416
        %v418 = vsel %vm336, %v333, 0.0
        %419 = vadd.xlane.f32.xlu0 %v418
        %v420 = vpop.xlane.xlu0 %419
        %v421 = vsel %vm336, %v334, 0.0
        %422 = vadd.xlane.f32.xlu0 %v421
        %v423 = vpop.xlane.xlu0 %422
        %v424 = vsel %vm336, %v335, 0.0
        %425 = vadd.xlane.f32.xlu0 %v424
        %v426 = vpop.xlane.xlu0 %425
        %vm427 = vcmp.gt.f32.partialorder %v339, 0.0
        %vm428 = vcmp.gt.f32.partialorder %v342, 0.0
        %vm429 = vcmp.gt.f32.partialorder %v345, 0.0
        %vm430 = vcmp.gt.f32.partialorder %v348, 0.0
        %vm431 = vcmp.gt.f32.partialorder %v351, 0.0
        %vm432 = vcmp.gt.f32.partialorder %v354, 0.0
        %vm433 = vcmp.gt.f32.partialorder %v357, 0.0
        %vm434 = vcmp.gt.f32.partialorder %v360, 0.0
        %vm435 = vcmp.gt.f32.partialorder %v363, 0.0
        %vm436 = vcmp.gt.f32.partialorder %v366, 0.0
        %vm437 = vcmp.gt.f32.partialorder %v369, 0.0
        %vm438 = vcmp.gt.f32.partialorder %v372, 0.0
        %vm439 = vcmp.gt.f32.partialorder %v375, 0.0
        %vm440 = vcmp.gt.f32.partialorder %v378, 0.0
        %vm441 = vcmp.gt.f32.partialorder %v381, 0.0
        %vm442 = vcmp.gt.f32.partialorder %v384, 0.0
        %vm443 = vcmp.gt.f32.partialorder %v387, 0.0
        %vm444 = vcmp.gt.f32.partialorder %v390, 0.0
        %vm445 = vcmp.gt.f32.partialorder %v393, 0.0
        %vm446 = vcmp.gt.f32.partialorder %v396, 0.0
        %vm447 = vcmp.gt.f32.partialorder %v399, 0.0
        %vm448 = vcmp.gt.f32.partialorder %v402, 0.0
        %vm449 = vcmp.gt.f32.partialorder %v405, 0.0
        %vm450 = vcmp.gt.f32.partialorder %v408, 0.0
        %vm451 = vcmp.gt.f32.partialorder %v411, 0.0
        %vm452 = vcmp.gt.f32.partialorder %v414, 0.0
        %vm453 = vcmp.gt.f32.partialorder %v417, 0.0
        %vm454 = vcmp.gt.f32.partialorder %v420, 0.0
        %vm455 = vcmp.gt.f32.partialorder %v423, 0.0
        %vm456 = vcmp.gt.f32.partialorder %v426, 0.0
        %v457 = vrsqrt.pop %v339
        %v458 = vmul.f32 %v457, %v339
        %v459 = vmul.f32 %v458, %v457
        %v460 = vmul.f32 0.5, %v459
        %v461 = vsub.f32 1.5, %v460
        %v462 = vmul.f32 %v457, %v461
        %vm463 = vweird.f32 %v339
        %vm464 = vweird.f32 %v457
        %vm465 = vmor %vm463, %vm464
        %v466 = vsel %vm465, %v457, %v462
        %v467 = vrsqrt.pop %v342
        %v468 = vmul.f32 %v467, %v342
        %v469 = vmul.f32 %v468, %v467
        %v470 = vmul.f32 0.5, %v469
        %v471 = vsub.f32 1.5, %v470
        %v472 = vmul.f32 %v467, %v471
        %vm473 = vweird.f32 %v342
        %vm474 = vweird.f32 %v467
        %vm475 = vmor %vm473, %vm474
        %v476 = vsel %vm475, %v467, %v472
        %v477 = vrsqrt.pop %v345
        %v478 = vmul.f32 %v477, %v345
        %v479 = vmul.f32 %v478, %v477
        %v480 = vmul.f32 0.5, %v479
        %v481 = vsub.f32 1.5, %v480
        %v482 = vmul.f32 %v477, %v481
        %vm483 = vweird.f32 %v345
        %vm484 = vweird.f32 %v477
        %vm485 = vmor %vm483, %vm484
        %v486 = vsel %vm485, %v477, %v482
        %v487 = vrsqrt.pop %v348
        %v488 = vmul.f32 %v487, %v348
        %v489 = vmul.f32 %v488, %v487
        %v490 = vmul.f32 0.5, %v489
        %v491 = vsub.f32 1.5, %v490
        %v492 = vmul.f32 %v487, %v491
        %vm493 = vweird.f32 %v348
        %vm494 = vweird.f32 %v487
        %vm495 = vmor %vm493, %vm494
        %v496 = vsel %vm495, %v487, %v492
        %v497 = vrsqrt.pop %v351
        %v498 = vmul.f32 %v497, %v351
        %v499 = vmul.f32 %v498, %v497
        %v500 = vmul.f32 0.5, %v499
        %v501 = vsub.f32 1.5, %v500
        %v502 = vmul.f32 %v497, %v501
        %vm503 = vweird.f32 %v351
        %vm504 = vweird.f32 %v497
        %vm505 = vmor %vm503, %vm504
        %v506 = vsel %vm505, %v497, %v502
        %v507 = vrsqrt.pop %v354
        %v508 = vmul.f32 %v507, %v354
        %v509 = vmul.f32 %v508, %v507
        %v510 = vmul.f32 0.5, %v509
        %v511 = vsub.f32 1.5, %v510
        %v512 = vmul.f32 %v507, %v511
        %vm513 = vweird.f32 %v354
        %vm514 = vweird.f32 %v507
        %vm515 = vmor %vm513, %vm514
        %v516 = vsel %vm515, %v507, %v512
        %v517 = vrsqrt.pop %v357
        %v518 = vmul.f32 %v517, %v357
        %v519 = vmul.f32 %v518, %v517
        %v520 = vmul.f32 0.5, %v519
        %v521 = vsub.f32 1.5, %v520
        %v522 = vmul.f32 %v517, %v521
        %vm523 = vweird.f32 %v357
        %vm524 = vweird.f32 %v517
        %vm525 = vmor %vm523, %vm524
        %v526 = vsel %vm525, %v517, %v522
        %v527 = vrsqrt.pop %v360
        %v528 = vmul.f32 %v527, %v360
        %v529 = vmul.f32 %v528, %v527
        %v530 = vmul.f32 0.5, %v529
        %v531 = vsub.f32 1.5, %v530
        %v532 = vmul.f32 %v527, %v531
        %vm533 = vweird.f32 %v360
        %vm534 = vweird.f32 %v527
        %vm535 = vmor %vm533, %vm534
        %v536 = vsel %vm535, %v527, %v532
        %v537 = vrsqrt.pop %v363
        %v538 = vmul.f32 %v537, %v363
        %v539 = vmul.f32 %v538, %v537
        %v540 = vmul.f32 0.5, %v539
        %v541 = vsub.f32 1.5, %v540
        %v542 = vmul.f32 %v537, %v541
        %vm543 = vweird.f32 %v363
        %vm544 = vweird.f32 %v537
        %vm545 = vmor %vm543, %vm544
        %v546 = vsel %vm545, %v537, %v542
        %v547 = vrsqrt.pop %v366
        %v548 = vmul.f32 %v547, %v366
        %v549 = vmul.f32 %v548, %v547
        %v550 = vmul.f32 0.5, %v549
        %v551 = vsub.f32 1.5, %v550
        %v552 = vmul.f32 %v547, %v551
        %vm553 = vweird.f32 %v366
        %vm554 = vweird.f32 %v547
        %vm555 = vmor %vm553, %vm554
        %v556 = vsel %vm555, %v547, %v552
        %v557 = vrsqrt.pop %v369
        %v558 = vmul.f32 %v557, %v369
        %v559 = vmul.f32 %v558, %v557
        %v560 = vmul.f32 0.5, %v559
        %v561 = vsub.f32 1.5, %v560
        %v562 = vmul.f32 %v557, %v561
        %vm563 = vweird.f32 %v369
        %vm564 = vweird.f32 %v557
        %vm565 = vmor %vm563, %vm564
        %v566 = vsel %vm565, %v557, %v562
        %v567 = vrsqrt.pop %v372
        %v568 = vmul.f32 %v567, %v372
        %v569 = vmul.f32 %v568, %v567
        %v570 = vmul.f32 0.5, %v569
        %v571 = vsub.f32 1.5, %v570
        %v572 = vmul.f32 %v567, %v571
        %vm573 = vweird.f32 %v372
        %vm574 = vweird.f32 %v567
        %vm575 = vmor %vm573, %vm574
        %v576 = vsel %vm575, %v567, %v572
        %v577 = vrsqrt.pop %v375
        %v578 = vmul.f32 %v577, %v375
        %v579 = vmul.f32 %v578, %v577
        %v580 = vmul.f32 0.5, %v579
        %v581 = vsub.f32 1.5, %v580
        %v582 = vmul.f32 %v577, %v581
        %vm583 = vweird.f32 %v375
        %vm584 = vweird.f32 %v577
        %vm585 = vmor %vm583, %vm584
        %v586 = vsel %vm585, %v577, %v582
        %v587 = vrsqrt.pop %v378
        %v588 = vmul.f32 %v587, %v378
        %v589 = vmul.f32 %v588, %v587
        %v590 = vmul.f32 0.5, %v589
        %v591 = vsub.f32 1.5, %v590
        %v592 = vmul.f32 %v587, %v591
        %vm593 = vweird.f32 %v378
        %vm594 = vweird.f32 %v587
        %vm595 = vmor %vm593, %vm594
        %v596 = vsel %vm595, %v587, %v592
        %v597 = vrsqrt.pop %v381
        %v598 = vmul.f32 %v597, %v381
        %v599 = vmul.f32 %v598, %v597
        %v600 = vmul.f32 0.5, %v599
        %v601 = vsub.f32 1.5, %v600
        %v602 = vmul.f32 %v597, %v601
        %vm603 = vweird.f32 %v381
        %vm604 = vweird.f32 %v597
        %vm605 = vmor %vm603, %vm604
        %v606 = vsel %vm605, %v597, %v602
        %v607 = vrsqrt.pop %v384
        %v608 = vmul.f32 %v607, %v384
        %v609 = vmul.f32 %v608, %v607
        %v610 = vmul.f32 0.5, %v609
        %v611 = vsub.f32 1.5, %v610
        %v612 = vmul.f32 %v607, %v611
        %vm613 = vweird.f32 %v384
        %vm614 = vweird.f32 %v607
        %vm615 = vmor %vm613, %vm614
        %v616 = vsel %vm615, %v607, %v612
        %v617 = vrsqrt.pop %v387
        %v618 = vmul.f32 %v617, %v387
        %v619 = vmul.f32 %v618, %v617
        %v620 = vmul.f32 0.5, %v619
        %v621 = vsub.f32 1.5, %v620
        %v622 = vmul.f32 %v617, %v621
        %vm623 = vweird.f32 %v387
        %vm624 = vweird.f32 %v617
        %vm625 = vmor %vm623, %vm624
        %v626 = vsel %vm625, %v617, %v622
        %v627 = vrsqrt.pop %v390
        %v628 = vmul.f32 %v627, %v390
        %v629 = vmul.f32 %v628, %v627
        %v630 = vmul.f32 0.5, %v629
        %v631 = vsub.f32 1.5, %v630
        %v632 = vmul.f32 %v627, %v631
        %vm633 = vweird.f32 %v390
        %vm634 = vweird.f32 %v627
        %vm635 = vmor %vm633, %vm634
        %v636 = vsel %vm635, %v627, %v632
        %v637 = vrsqrt.pop %v393
        %v638 = vmul.f32 %v637, %v393
        %v639 = vmul.f32 %v638, %v637
        %v640 = vmul.f32 0.5, %v639
        %v641 = vsub.f32 1.5, %v640
        %v642 = vmul.f32 %v637, %v641
        %vm643 = vweird.f32 %v393
        %vm644 = vweird.f32 %v637
        %vm645 = vmor %vm643, %vm644
        %v646 = vsel %vm645, %v637, %v642
        %v647 = vrsqrt.pop %v396
        %v648 = vmul.f32 %v647, %v396
        %v649 = vmul.f32 %v648, %v647
        %v650 = vmul.f32 0.5, %v649
        %v651 = vsub.f32 1.5, %v650
        %v652 = vmul.f32 %v647, %v651
        %vm653 = vweird.f32 %v396
        %vm654 = vweird.f32 %v647
        %vm655 = vmor %vm653, %vm654
        %v656 = vsel %vm655, %v647, %v652
        %v657 = vrsqrt.pop %v399
        %v658 = vmul.f32 %v657, %v399
        %v659 = vmul.f32 %v658, %v657
        %v660 = vmul.f32 0.5, %v659
        %v661 = vsub.f32 1.5, %v660
        %v662 = vmul.f32 %v657, %v661
        %vm663 = vweird.f32 %v399
        %vm664 = vweird.f32 %v657
        %vm665 = vmor %vm663, %vm664
        %v666 = vsel %vm665, %v657, %v662
        %v667 = vrsqrt.pop %v402
        %v668 = vmul.f32 %v667, %v402
        %v669 = vmul.f32 %v668, %v667
        %v670 = vmul.f32 0.5, %v669
        %v671 = vsub.f32 1.5, %v670
        %v672 = vmul.f32 %v667, %v671
        %vm673 = vweird.f32 %v402
        %vm674 = vweird.f32 %v667
        %vm675 = vmor %vm673, %vm674
        %v676 = vsel %vm675, %v667, %v672
        %v677 = vrsqrt.pop %v405
        %v678 = vmul.f32 %v677, %v405
        %v679 = vmul.f32 %v678, %v677
        %v680 = vmul.f32 0.5, %v679
        %v681 = vsub.f32 1.5, %v680
        %v682 = vmul.f32 %v677, %v681
        %vm683 = vweird.f32 %v405
        %vm684 = vweird.f32 %v677
        %vm685 = vmor %vm683, %vm684
        %v686 = vsel %vm685, %v677, %v682
        %v687 = vrsqrt.pop %v408
        %v688 = vmul.f32 %v687, %v408
        %v689 = vmul.f32 %v688, %v687
        %v690 = vmul.f32 0.5, %v689
        %v691 = vsub.f32 1.5, %v690
        %v692 = vmul.f32 %v687, %v691
        %vm693 = vweird.f32 %v408
        %vm694 = vweird.f32 %v687
        %vm695 = vmor %vm693, %vm694
        %v696 = vsel %vm695, %v687, %v692
        %v697 = vrsqrt.pop %v411
        %v698 = vmul.f32 %v697, %v411
        %v699 = vmul.f32 %v698, %v697
        %v700 = vmul.f32 0.5, %v699
        %v701 = vsub.f32 1.5, %v700
        %v702 = vmul.f32 %v697, %v701
        %vm703 = vweird.f32 %v411
        %vm704 = vweird.f32 %v697
        %vm705 = vmor %vm703, %vm704
        %v706 = vsel %vm705, %v697, %v702
        %v707 = vrsqrt.pop %v414
        %v708 = vmul.f32 %v707, %v414
        %v709 = vmul.f32 %v708, %v707
        %v710 = vmul.f32 0.5, %v709
        %v711 = vsub.f32 1.5, %v710
        %v712 = vmul.f32 %v707, %v711
        %vm713 = vweird.f32 %v414
        %vm714 = vweird.f32 %v707
        %vm715 = vmor %vm713, %vm714
        %v716 = vsel %vm715, %v707, %v712
        %v717 = vrsqrt.pop %v417
        %v718 = vmul.f32 %v717, %v417
        %v719 = vmul.f32 %v718, %v717
        %v720 = vmul.f32 0.5, %v719
        %v721 = vsub.f32 1.5, %v720
        %v722 = vmul.f32 %v717, %v721
        %vm723 = vweird.f32 %v417
        %vm724 = vweird.f32 %v717
        %vm725 = vmor %vm723, %vm724
        %v726 = vsel %vm725, %v717, %v722
        %v727 = vrsqrt.pop %v420
        %v728 = vmul.f32 %v727, %v420
        %v729 = vmul.f32 %v728, %v727
        %v730 = vmul.f32 0.5, %v729
        %v731 = vsub.f32 1.5, %v730
        %v732 = vmul.f32 %v727, %v731
        %vm733 = vweird.f32 %v420
        %vm734 = vweird.f32 %v727
        %vm735 = vmor %vm733, %vm734
        %v736 = vsel %vm735, %v727, %v732
        %v737 = vrsqrt.pop %v423
        %v738 = vmul.f32 %v737, %v423
        %v739 = vmul.f32 %v738, %v737
        %v740 = vmul.f32 0.5, %v739
        %v741 = vsub.f32 1.5, %v740
        %v742 = vmul.f32 %v737, %v741
        %vm743 = vweird.f32 %v423
        %vm744 = vweird.f32 %v737
        %vm745 = vmor %vm743, %vm744
        %v746 = vsel %vm745, %v737, %v742
        %v747 = vrsqrt.pop %v426
        %v748 = vmul.f32 %v747, %v426
        %v749 = vmul.f32 %v748, %v747
        %v750 = vmul.f32 0.5, %v749
        %v751 = vsub.f32 1.5, %v750
        %v752 = vmul.f32 %v747, %v751
        %vm753 = vweird.f32 %v426
        %vm754 = vweird.f32 %v747
        %vm755 = vmor %vm753, %vm754
        %v756 = vsel %vm755, %v747, %v752
        %v757 = vsel %vm427, %v466, 0.0
        %v758 = vsel %vm428, %v476, 0.0
        %v759 = vsel %vm429, %v486, 0.0
        %v760 = vsel %vm430, %v496, 0.0
        %v761 = vsel %vm431, %v506, 0.0
        %v762 = vsel %vm432, %v516, 0.0
        %v763 = vsel %vm433, %v526, 0.0
        %v764 = vsel %vm434, %v536, 0.0
        %v765 = vsel %vm435, %v546, 0.0
        %v766 = vsel %vm436, %v556, 0.0
        %v767 = vsel %vm437, %v566, 0.0
        %v768 = vsel %vm438, %v576, 0.0
        %v769 = vsel %vm439, %v586, 0.0
        %v770 = vsel %vm440, %v596, 0.0
        %v771 = vsel %vm441, %v606, 0.0
        %v772 = vsel %vm442, %v616, 0.0
        %v773 = vsel %vm443, %v626, 0.0
        %v774 = vsel %vm444, %v636, 0.0
        %v775 = vsel %vm445, %v646, 0.0
        %v776 = vsel %vm446, %v656, 0.0
        %v777 = vsel %vm447, %v666, 0.0
        %v778 = vsel %vm448, %v676, 0.0
        %v779 = vsel %vm449, %v686, 0.0
        %v780 = vsel %vm450, %v696, 0.0
        %v781 = vsel %vm451, %v706, 0.0
        %v782 = vsel %vm452, %v716, 0.0
        %v783 = vsel %vm453, %v726, 0.0
        %v784 = vsel %vm454, %v736, 0.0
        %v785 = vsel %vm455, %v746, 0.0
        %v786 = vsel %vm456, %v756, 0.0
        %v787 = vld [vmem:[%s2] sm:$0xf]
        %v788 = vld [vmem:[%s2 + $0x4] sm:$0xf]
        %v789 = vld [vmem:[%s2 + $0x8] sm:$0xf]
        %v790 = vld [vmem:[%s2 + $0xc] sm:$0xf]
        %v791 = vld [vmem:[%s2 + $0x10] sm:$0xf]
        %v792 = vld [vmem:[%s2 + $0x14] sm:$0xf]
        %v793 = vld [vmem:[%s2 + $0x18] sm:$0xf]
        %v794 = vld [vmem:[%s2 + $0x1c] sm:$0xf]
        %v795 = vld [vmem:[%s2 + $0x20] sm:$0xf]
        %v796 = vld [vmem:[%s2 + $0x24] sm:$0xf]
        %v797 = vld [vmem:[%s2 + $0x28] sm:$0xf]
        %v798 = vld [vmem:[%s2 + $0x2c] sm:$0xf]
        %v799 = vld [vmem:[%s2 + $0x30] sm:$0xf]
        %v800 = vld [vmem:[%s2 + $0x34] sm:$0xf]
        %v801 = vld [vmem:[%s2 + $0x38] sm:$0xf]
        %v802 = vld [vmem:[%s2 + $0x3c] sm:$0xf]
        %s803 = scalar_lea.vmem %s2, 64
        %v804 = vld [vmem:[%s803] sm:$0xf]
        %v805 = vld [vmem:[%s803 + $0x4] sm:$0xf]
        %v806 = vld [vmem:[%s803 + $0x8] sm:$0xf]
        %v807 = vld [vmem:[%s803 + $0xc] sm:$0xf]
        %v808 = vld [vmem:[%s803 + $0x10] sm:$0xf]
        %v809 = vld [vmem:[%s803 + $0x14] sm:$0xf]
        %v810 = vld [vmem:[%s803 + $0x18] sm:$0xf]
        %v811 = vld [vmem:[%s803 + $0x1c] sm:$0xf]
        %v812 = vld [vmem:[%s803 + $0x20] sm:$0xf]
        %v813 = vld [vmem:[%s803 + $0x24] sm:$0xf]
        %v814 = vld [vmem:[%s803 + $0x28] sm:$0xf]
        %v815 = vld [vmem:[%s803 + $0x2c] sm:$0xf]
        %v816 = vld [vmem:[%s803 + $0x30] sm:$0xf]
        %v817 = vld [vmem:[%s803 + $0x34] sm:$0xf]
        %v818 = vld [vmem:[%s803 + $0x38] sm:$0xf]
        %v819 = vld [vmem:[%s803 + $0x3c] sm:$0xf]
        %s820 = scalar_lea.vmem %s2, 128
        %v821 = vld [vmem:[%s820] sm:$0xf]
        %v822 = vld [vmem:[%s820 + $0x4] sm:$0xf]
        %v823 = vld [vmem:[%s820 + $0x8] sm:$0xf]
        %v824 = vld [vmem:[%s820 + $0xc] sm:$0xf]
        %v825 = vld [vmem:[%s820 + $0x10] sm:$0xf]
        %v826 = vld [vmem:[%s820 + $0x14] sm:$0xf]
        %v827 = vld [vmem:[%s820 + $0x18] sm:$0xf]
        %v828 = vld [vmem:[%s820 + $0x1c] sm:$0xf]
        %v829 = vld [vmem:[%s820 + $0x20] sm:$0xf]
        %v830 = vld [vmem:[%s820 + $0x24] sm:$0xf]
        %v831 = vld [vmem:[%s820 + $0x28] sm:$0xf]
        %v832 = vld [vmem:[%s820 + $0x2c] sm:$0xf]
        %v833 = vld [vmem:[%s820 + $0x30] sm:$0xf]
        %v834 = vld [vmem:[%s820 + $0x34] sm:$0xf]
        %v835 = vld [vmem:[%s820 + $0x38] sm:$0xf]
        %v836 = vld [vmem:[%s820 + $0x3c] sm:$0xf]
        %s837 = scalar_lea.vmem %s2, 192
        %v838 = vld [vmem:[%s837] sm:$0xf]
        %v839 = vld [vmem:[%s837 + $0x4] sm:$0xf]
        %v840 = vld [vmem:[%s837 + $0x8] sm:$0xf]
        %v841 = vld [vmem:[%s837 + $0xc] sm:$0xf]
        %v842 = vld [vmem:[%s837 + $0x10] sm:$0xf]
        %v843 = vld [vmem:[%s837 + $0x14] sm:$0xf]
        %v844 = vld [vmem:[%s837 + $0x18] sm:$0xf]
        %v845 = vld [vmem:[%s837 + $0x1c] sm:$0xf]
        %v846 = vld [vmem:[%s837 + $0x20] sm:$0xf]
        %v847 = vld [vmem:[%s837 + $0x24] sm:$0xf]
        %v848 = vld [vmem:[%s837 + $0x28] sm:$0xf]
        %v849 = vld [vmem:[%s837 + $0x2c] sm:$0xf]
        %v850 = vld [vmem:[%s837 + $0x30] sm:$0xf]
        %v851 = vld [vmem:[%s837 + $0x34] sm:$0xf]
        %v852 = vld [vmem:[%s837 + $0x38] sm:$0xf]
        %v853 = vld [vmem:[%s837 + $0x3c] sm:$0xf]
        %v854 = vld [vmem:[%s3] sm:$0x1]
        %v855 = vld [vmem:[%s3 + $0x1] sm:$0x1]
        %v856 = vld [vmem:[%s3 + $0x2] sm:$0x1]
        %v857 = vunpack.c.l.bf16 %v276
        %v858 = vunpack.c.l.bf16 %v277
        %v859 = vunpack.c.l.bf16 %v278
        %v860 = vunpack.c.l.bf16 %v279
        %v861 = vunpack.c.l.bf16 %v280
        %v862 = vunpack.c.l.bf16 %v281
        %v863 = vunpack.c.l.bf16 %v282
        %v864 = vunpack.c.l.bf16 %v283
        %v865 = vunpack.c.l.bf16 %v284
        %v866 = vunpack.c.l.bf16 %v285
        %v867 = vunpack.c.l.bf16 %v286
        %v868 = vunpack.c.l.bf16 %v287
        %v869 = vunpack.c.l.bf16 %v288
        %v870 = vunpack.c.l.bf16 %v289
        %v871 = vunpack.c.l.bf16 %v290
        %v872 = vunpack.c.l.bf16 %v291
        %v873 = vunpack.c.l.bf16 %v292
        %v874 = vunpack.c.l.bf16 %v293
        %v875 = vunpack.c.l.bf16 %v294
        %v876 = vunpack.c.l.bf16 %v295
        %v877 = vunpack.c.l.bf16 %v296
        %v878 = vunpack.c.l.bf16 %v297
        %v879 = vunpack.c.l.bf16 %v298
        %v880 = vunpack.c.l.bf16 %v299
        %v881 = vunpack.c.l.bf16 %v300
        %v882 = vunpack.c.l.bf16 %v301
        %v883 = vunpack.c.l.bf16 %v302
        %v884 = vunpack.c.l.bf16 %v303
        %v885 = vunpack.c.l.bf16 %v304
        %v886 = vunpack.c.l.bf16 %v305
        %v887 = vmul.f32 %v757, %v857
        %v888 = vmul.f32 %v758, %v858
        %v889 = vmul.f32 %v759, %v859
        %v890 = vmul.f32 %v760, %v860
        %v891 = vmul.f32 %v761, %v861
        %v892 = vmul.f32 %v762, %v862
        %v893 = vmul.f32 %v763, %v863
        %v894 = vmul.f32 %v764, %v864
        %v895 = vmul.f32 %v765, %v865
        %v896 = vmul.f32 %v766, %v866
        %v897 = vmul.f32 %v767, %v867
        %v898 = vmul.f32 %v768, %v868
        %v899 = vmul.f32 %v769, %v869
        %v900 = vmul.f32 %v770, %v870
        %v901 = vmul.f32 %v771, %v871
        %v902 = vmul.f32 %v772, %v872
        %v903 = vmul.f32 %v773, %v873
        %v904 = vmul.f32 %v774, %v874
        %v905 = vmul.f32 %v775, %v875
        %v906 = vmul.f32 %v776, %v876
        %v907 = vmul.f32 %v777, %v877
        %v908 = vmul.f32 %v778, %v878
        %v909 = vmul.f32 %v779, %v879
        %v910 = vmul.f32 %v780, %v880
        %v911 = vmul.f32 %v781, %v881
        %v912 = vmul.f32 %v782, %v882
        %v913 = vmul.f32 %v783, %v883
        %v914 = vmul.f32 %v784, %v884
        %v915 = vmul.f32 %v785, %v885
        %v916 = vmul.f32 %v786, %v886
        %v917 = vpack.c.bf16 %v887, %v887
        %v918 = vpack.c.bf16 %v888, %v888
        %v919 = vpack.c.bf16 %v889, %v889
        %v920 = vpack.c.bf16 %v890, %v890
        %v921 = vpack.c.bf16 %v891, %v891
        %v922 = vpack.c.bf16 %v892, %v892
        %v923 = vpack.c.bf16 %v893, %v893
        %v924 = vpack.c.bf16 %v894, %v894
        %v925 = vpack.c.bf16 %v895, %v895
        %v926 = vpack.c.bf16 %v896, %v896
        %v927 = vpack.c.bf16 %v897, %v897
        %v928 = vpack.c.bf16 %v898, %v898
        %v929 = vpack.c.bf16 %v899, %v899
        %v930 = vpack.c.bf16 %v900, %v900
        %v931 = vpack.c.bf16 %v901, %v901
        %v932 = vpack.c.bf16 %v902, %v902
        %v933 = vpack.c.bf16 %v903, %v903
        %v934 = vpack.c.bf16 %v904, %v904
        %v935 = vpack.c.bf16 %v905, %v905
        %v936 = vpack.c.bf16 %v906, %v906
        %v937 = vpack.c.bf16 %v907, %v907
        %v938 = vpack.c.bf16 %v908, %v908
        %v939 = vpack.c.bf16 %v909, %v909
        %v940 = vpack.c.bf16 %v910, %v910
        %v941 = vpack.c.bf16 %v911, %v911
        %v942 = vpack.c.bf16 %v912, %v912
        %v943 = vpack.c.bf16 %v913, %v913
        %v944 = vpack.c.bf16 %v914, %v914
        %v945 = vpack.c.bf16 %v915, %v915
        %v946 = vpack.c.bf16 %v916, %v916
        %v949 = vunpack.c.l.b16 %v246
        %v950 = vunpack.c.l.b16 %v247
        %v951 = vpack.c.b16 %v950, %v949
        %v954 = vunpack.c.l.b16 %v917
        %v955 = vunpack.c.l.b16 %v918
        %v956 = vpack.c.b16 %v955, %v954
        %v959 = vsel %vm336, %v951, 0
        %961 = vmatpush.bf16.msra.mxu0 0
        %962 = vmatpush.bf16.msra.mxu0 0
        %963 = vmatpush.bf16.msra.mxu0 0
        %964 = vmatpush.bf16.msra.mxu0 0
        %965 = vmatpush.bf16.msra.mxu0 0
        %966 = vmatpush.bf16.msra.mxu0 0
        %967 = vmatpush.bf16.msra.mxu0 0
        %968 = vmatpush.bf16.msra.mxu0 %v956
        %969 = vmatmul.bf16.gmra.mxu0 %v959
        %v970 = vpop.f32.mrf.mxu0
        %v971 = vadd.f32 0.0, %v970
        %v972 = vpop.f32.mrf.mxu0
        %v973 = vadd.f32 0.0, %v972
        %974 = vdwg.mxu0
        %v977 = vunpack.c.l.b16 %v248
        %v978 = vunpack.c.l.b16 %v249
        %v979 = vpack.c.b16 %v978, %v977
        %v982 = vunpack.c.l.b16 %v919
        %v983 = vunpack.c.l.b16 %v920
        %v984 = vpack.c.b16 %v983, %v982
        %v987 = vsel %vm336, %v979, 0
        %989 = vmatpush.bf16.msra.mxu0 0
        %990 = vmatpush.bf16.msra.mxu0 0
        %991 = vmatpush.bf16.msra.mxu0 0
        %992 = vmatpush.bf16.msra.mxu0 0
        %993 = vmatpush.bf16.msra.mxu0 0
        %994 = vmatpush.bf16.msra.mxu0 0
        %995 = vmatpush.bf16.msra.mxu0 0
        %996 = vmatpush.bf16.msra.mxu0 %v984
        %997 = vmatmul.bf16.gmra.mxu0 %v987
        %v998 = vpop.f32.mrf.mxu0
        %v999 = vadd.f32 0.0, %v998
        %v1000 = vpop.f32.mrf.mxu0
        %v1001 = vadd.f32 0.0, %v1000
        %1002 = vdwg.mxu0
        %v1005 = vunpack.c.l.b16 %v250
        %v1006 = vunpack.c.l.b16 %v251
        %v1007 = vpack.c.b16 %v1006, %v1005
        %v1010 = vunpack.c.l.b16 %v921
        %v1011 = vunpack.c.l.b16 %v922
        %v1012 = vpack.c.b16 %v1011, %v1010
        %v1015 = vsel %vm336, %v1007, 0
        %1017 = vmatpush.bf16.msra.mxu0 0
        %1018 = vmatpush.bf16.msra.mxu0 0
        %1019 = vmatpush.bf16.msra.mxu0 0
        %1020 = vmatpush.bf16.msra.mxu0 0
        %1021 = vmatpush.bf16.msra.mxu0 0
        %1022 = vmatpush.bf16.msra.mxu0 0
        %1023 = vmatpush.bf16.msra.mxu0 0
        %1024 = vmatpush.bf16.msra.mxu0 %v1012
        %1025 = vmatmul.bf16.gmra.mxu0 %v1015
        %v1026 = vpop.f32.mrf.mxu0
        %v1027 = vadd.f32 0.0, %v1026
        %v1028 = vpop.f32.mrf.mxu0
        %v1029 = vadd.f32 0.0, %v1028
        %1030 = vdwg.mxu0
        %v1033 = vunpack.c.l.b16 %v252
        %v1034 = vunpack.c.l.b16 %v253
        %v1035 = vpack.c.b16 %v1034, %v1033
        %v1038 = vunpack.c.l.b16 %v923
        %v1039 = vunpack.c.l.b16 %v924
        %v1040 = vpack.c.b16 %v1039, %v1038
        %v1043 = vsel %vm336, %v1035, 0
        %1045 = vmatpush.bf16.msra.mxu0 0
        %1046 = vmatpush.bf16.msra.mxu0 0
        %1047 = vmatpush.bf16.msra.mxu0 0
        %1048 = vmatpush.bf16.msra.mxu0 0
        %1049 = vmatpush.bf16.msra.mxu0 0
        %1050 = vmatpush.bf16.msra.mxu0 0
        %1051 = vmatpush.bf16.msra.mxu0 0
        %1052 = vmatpush.bf16.msra.mxu0 %v1040
        %1053 = vmatmul.bf16.gmra.mxu0 %v1043
        %v1054 = vpop.f32.mrf.mxu0
        %v1055 = vadd.f32 0.0, %v1054
        %v1056 = vpop.f32.mrf.mxu0
        %v1057 = vadd.f32 0.0, %v1056
        %1058 = vdwg.mxu0
        %v1061 = vunpack.c.l.b16 %v254
        %v1062 = vunpack.c.l.b16 %v255
        %v1063 = vpack.c.b16 %v1062, %v1061
        %v1066 = vunpack.c.l.b16 %v925
        %v1067 = vunpack.c.l.b16 %v926
        %v1068 = vpack.c.b16 %v1067, %v1066
        %v1071 = vsel %vm336, %v1063, 0
        %1073 = vmatpush.bf16.msra.mxu0 0
        %1074 = vmatpush.bf16.msra.mxu0 0
        %1075 = vmatpush.bf16.msra.mxu0 0
        %1076 = vmatpush.bf16.msra.mxu0 0
        %1077 = vmatpush.bf16.msra.mxu0 0
        %1078 = vmatpush.bf16.msra.mxu0 0
        %1079 = vmatpush.bf16.msra.mxu0 0
        %1080 = vmatpush.bf16.msra.mxu0 %v1068
        %1081 = vmatmul.bf16.gmra.mxu0 %v1071
        %v1082 = vpop.f32.mrf.mxu0
        %v1083 = vadd.f32 0.0, %v1082
        %v1084 = vpop.f32.mrf.mxu0
        %v1085 = vadd.f32 0.0, %v1084
        %1086 = vdwg.mxu0
        %v1089 = vunpack.c.l.b16 %v256
        %v1090 = vunpack.c.l.b16 %v257
        %v1091 = vpack.c.b16 %v1090, %v1089
        %v1094 = vunpack.c.l.b16 %v927
        %v1095 = vunpack.c.l.b16 %v928
        %v1096 = vpack.c.b16 %v1095, %v1094
        %v1099 = vsel %vm336, %v1091, 0
        %1101 = vmatpush.bf16.msra.mxu0 0
        %1102 = vmatpush.bf16.msra.mxu0 0
        %1103 = vmatpush.bf16.msra.mxu0 0
        %1104 = vmatpush.bf16.msra.mxu0 0
        %1105 = vmatpush.bf16.msra.mxu0 0
        %1106 = vmatpush.bf16.msra.mxu0 0
        %1107 = vmatpush.bf16.msra.mxu0 0
        %1108 = vmatpush.bf16.msra.mxu0 %v1096
        %1109 = vmatmul.bf16.gmra.mxu0 %v1099
        %v1110 = vpop.f32.mrf.mxu0
        %v1111 = vadd.f32 0.0, %v1110
        %v1112 = vpop.f32.mrf.mxu0
        %v1113 = vadd.f32 0.0, %v1112
        %1114 = vdwg.mxu0
        %v1117 = vunpack.c.l.b16 %v258
        %v1118 = vunpack.c.l.b16 %v259
        %v1119 = vpack.c.b16 %v1118, %v1117
        %v1122 = vunpack.c.l.b16 %v929
        %v1123 = vunpack.c.l.b16 %v930
        %v1124 = vpack.c.b16 %v1123, %v1122
        %v1127 = vsel %vm336, %v1119, 0
        %1129 = vmatpush.bf16.msra.mxu0 0
        %1130 = vmatpush.bf16.msra.mxu0 0
        %1131 = vmatpush.bf16.msra.mxu0 0
        %1132 = vmatpush.bf16.msra.mxu0 0
        %1133 = vmatpush.bf16.msra.mxu0 0
        %1134 = vmatpush.bf16.msra.mxu0 0
        %1135 = vmatpush.bf16.msra.mxu0 0
        %1136 = vmatpush.bf16.msra.mxu0 %v1124
        %1137 = vmatmul.bf16.gmra.mxu0 %v1127
        %v1138 = vpop.f32.mrf.mxu0
        %v1139 = vadd.f32 0.0, %v1138
        %v1140 = vpop.f32.mrf.mxu0
        %v1141 = vadd.f32 0.0, %v1140
        %1142 = vdwg.mxu0
        %v1145 = vunpack.c.l.b16 %v260
        %v1146 = vunpack.c.l.b16 %v261
        %v1147 = vpack.c.b16 %v1146, %v1145
        %v1150 = vunpack.c.l.b16 %v931
        %v1151 = vunpack.c.l.b16 %v932
        %v1152 = vpack.c.b16 %v1151, %v1150
        %v1155 = vsel %vm336, %v1147, 0
        %1157 = vmatpush.bf16.msra.mxu0 0
        %1158 = vmatpush.bf16.msra.mxu0 0
        %1159 = vmatpush.bf16.msra.mxu0 0
        %1160 = vmatpush.bf16.msra.mxu0 0
        %1161 = vmatpush.bf16.msra.mxu0 0
        %1162 = vmatpush.bf16.msra.mxu0 0
        %1163 = vmatpush.bf16.msra.mxu0 0
        %1164 = vmatpush.bf16.msra.mxu0 %v1152
        %1165 = vmatmul.bf16.gmra.mxu0 %v1155
        %v1166 = vpop.f32.mrf.mxu0
        %v1167 = vadd.f32 0.0, %v1166
        %v1168 = vpop.f32.mrf.mxu0
        %v1169 = vadd.f32 0.0, %v1168
        %1170 = vdwg.mxu0
        %v1173 = vunpack.c.l.b16 %v262
        %v1174 = vunpack.c.l.b16 %v263
        %v1175 = vpack.c.b16 %v1174, %v1173
        %v1178 = vunpack.c.l.b16 %v933
        %v1179 = vunpack.c.l.b16 %v934
        %v1180 = vpack.c.b16 %v1179, %v1178
        %v1183 = vsel %vm336, %v1175, 0
        %1185 = vmatpush.bf16.msra.mxu0 0
        %1186 = vmatpush.bf16.msra.mxu0 0
        %1187 = vmatpush.bf16.msra.mxu0 0
        %1188 = vmatpush.bf16.msra.mxu0 0
        %1189 = vmatpush.bf16.msra.mxu0 0
        %1190 = vmatpush.bf16.msra.mxu0 0
        %1191 = vmatpush.bf16.msra.mxu0 0
        %1192 = vmatpush.bf16.msra.mxu0 %v1180
        %1193 = vmatmul.bf16.gmra.mxu0 %v1183
        %v1194 = vpop.f32.mrf.mxu0
        %v1195 = vadd.f32 0.0, %v1194
        %v1196 = vpop.f32.mrf.mxu0
        %v1197 = vadd.f32 0.0, %v1196
        %1198 = vdwg.mxu0
        %v1201 = vunpack.c.l.b16 %v264
        %v1202 = vunpack.c.l.b16 %v265
        %v1203 = vpack.c.b16 %v1202, %v1201
        %v1206 = vunpack.c.l.b16 %v935
        %v1207 = vunpack.c.l.b16 %v936
        %v1208 = vpack.c.b16 %v1207, %v1206
        %v1211 = vsel %vm336, %v1203, 0
        %1213 = vmatpush.bf16.msra.mxu0 0
        %1214 = vmatpush.bf16.msra.mxu0 0
        %1215 = vmatpush.bf16.msra.mxu0 0
        %1216 = vmatpush.bf16.msra.mxu0 0
        %1217 = vmatpush.bf16.msra.mxu0 0
        %1218 = vmatpush.bf16.msra.mxu0 0
        %1219 = vmatpush.bf16.msra.mxu0 0
        %1220 = vmatpush.bf16.msra.mxu0 %v1208
        %1221 = vmatmul.bf16.gmra.mxu0 %v1211
        %v1222 = vpop.f32.mrf.mxu0
        %v1223 = vadd.f32 0.0, %v1222
        %v1224 = vpop.f32.mrf.mxu0
        %v1225 = vadd.f32 0.0, %v1224
        %1226 = vdwg.mxu0
        %v1229 = vunpack.c.l.b16 %v266
        %v1230 = vunpack.c.l.b16 %v267
        %v1231 = vpack.c.b16 %v1230, %v1229
        %v1234 = vunpack.c.l.b16 %v937
        %v1235 = vunpack.c.l.b16 %v938
        %v1236 = vpack.c.b16 %v1235, %v1234
        %v1239 = vsel %vm336, %v1231, 0
        %1241 = vmatpush.bf16.msra.mxu0 0
        %1242 = vmatpush.bf16.msra.mxu0 0
        %1243 = vmatpush.bf16.msra.mxu0 0
        %1244 = vmatpush.bf16.msra.mxu0 0
        %1245 = vmatpush.bf16.msra.mxu0 0
        %1246 = vmatpush.bf16.msra.mxu0 0
        %1247 = vmatpush.bf16.msra.mxu0 0
        %1248 = vmatpush.bf16.msra.mxu0 %v1236
        %1249 = vmatmul.bf16.gmra.mxu0 %v1239
        %v1250 = vpop.f32.mrf.mxu0
        %v1251 = vadd.f32 0.0, %v1250
        %v1252 = vpop.f32.mrf.mxu0
        %v1253 = vadd.f32 0.0, %v1252
        %1254 = vdwg.mxu0
        %v1257 = vunpack.c.l.b16 %v268
        %v1258 = vunpack.c.l.b16 %v269
        %v1259 = vpack.c.b16 %v1258, %v1257
        %v1262 = vunpack.c.l.b16 %v939
        %v1263 = vunpack.c.l.b16 %v940
        %v1264 = vpack.c.b16 %v1263, %v1262
        %v1267 = vsel %vm336, %v1259, 0
        %1269 = vmatpush.bf16.msra.mxu0 0
        %1270 = vmatpush.bf16.msra.mxu0 0
        %1271 = vmatpush.bf16.msra.mxu0 0
        %1272 = vmatpush.bf16.msra.mxu0 0
        %1273 = vmatpush.bf16.msra.mxu0 0
        %1274 = vmatpush.bf16.msra.mxu0 0
        %1275 = vmatpush.bf16.msra.mxu0 0
        %1276 = vmatpush.bf16.msra.mxu0 %v1264
        %1277 = vmatmul.bf16.gmra.mxu0 %v1267
        %v1278 = vpop.f32.mrf.mxu0
        %v1279 = vadd.f32 0.0, %v1278
        %v1280 = vpop.f32.mrf.mxu0
        %v1281 = vadd.f32 0.0, %v1280
        %1282 = vdwg.mxu0
        %v1285 = vunpack.c.l.b16 %v270
        %v1286 = vunpack.c.l.b16 %v271
        %v1287 = vpack.c.b16 %v1286, %v1285
        %v1290 = vunpack.c.l.b16 %v941
        %v1291 = vunpack.c.l.b16 %v942
        %v1292 = vpack.c.b16 %v1291, %v1290
        %v1295 = vsel %vm336, %v1287, 0
        %1297 = vmatpush.bf16.msra.mxu0 0
        %1298 = vmatpush.bf16.msra.mxu0 0
        %1299 = vmatpush.bf16.msra.mxu0 0
        %1300 = vmatpush.bf16.msra.mxu0 0
        %1301 = vmatpush.bf16.msra.mxu0 0
        %1302 = vmatpush.bf16.msra.mxu0 0
        %1303 = vmatpush.bf16.msra.mxu0 0
        %1304 = vmatpush.bf16.msra.mxu0 %v1292
        %1305 = vmatmul.bf16.gmra.mxu0 %v1295
        %v1306 = vpop.f32.mrf.mxu0
        %v1307 = vadd.f32 0.0, %v1306
        %v1308 = vpop.f32.mrf.mxu0
        %v1309 = vadd.f32 0.0, %v1308
        %1310 = vdwg.mxu0
        %v1313 = vunpack.c.l.b16 %v272
        %v1314 = vunpack.c.l.b16 %v273
        %v1315 = vpack.c.b16 %v1314, %v1313
        %v1318 = vunpack.c.l.b16 %v943
        %v1319 = vunpack.c.l.b16 %v944
        %v1320 = vpack.c.b16 %v1319, %v1318
        %v1323 = vsel %vm336, %v1315, 0
        %1325 = vmatpush.bf16.msra.mxu0 0
        %1326 = vmatpush.bf16.msra.mxu0 0
        %1327 = vmatpush.bf16.msra.mxu0 0
        %1328 = vmatpush.bf16.msra.mxu0 0
        %1329 = vmatpush.bf16.msra.mxu0 0
        %1330 = vmatpush.bf16.msra.mxu0 0
        %1331 = vmatpush.bf16.msra.mxu0 0
        %1332 = vmatpush.bf16.msra.mxu0 %v1320
        %1333 = vmatmul.bf16.gmra.mxu0 %v1323
        %v1334 = vpop.f32.mrf.mxu0
        %v1335 = vadd.f32 0.0, %v1334
        %v1336 = vpop.f32.mrf.mxu0
        %v1337 = vadd.f32 0.0, %v1336
        %1338 = vdwg.mxu0
        %v1341 = vunpack.c.l.b16 %v274
        %v1342 = vunpack.c.l.b16 %v275
        %v1343 = vpack.c.b16 %v1342, %v1341
        %v1346 = vunpack.c.l.b16 %v945
        %v1347 = vunpack.c.l.b16 %v946
        %v1348 = vpack.c.b16 %v1347, %v1346
        %v1351 = vsel %vm336, %v1343, 0
        %1353 = vmatpush.bf16.msra.mxu0 0
        %1354 = vmatpush.bf16.msra.mxu0 0
        %1355 = vmatpush.bf16.msra.mxu0 0
        %1356 = vmatpush.bf16.msra.mxu0 0
        %1357 = vmatpush.bf16.msra.mxu0 0
        %1358 = vmatpush.bf16.msra.mxu0 0
        %1359 = vmatpush.bf16.msra.mxu0 0
        %1360 = vmatpush.bf16.msra.mxu0 %v1348
        %1361 = vmatmul.bf16.gmra.mxu0 %v1351
        %v1362 = vpop.f32.mrf.mxu0
        %v1363 = vadd.f32 0.0, %v1362
        %v1364 = vpop.f32.mrf.mxu0
        %v1365 = vadd.f32 0.0, %v1364
        %1366 = vdwg.mxu0
        %v1367 = vmul.f32 %v757, %v971
        %v1368 = vmul.f32 %v758, %v973
        %v1369 = vmul.f32 %v759, %v999
        %v1370 = vmul.f32 %v760, %v1001
        %v1371 = vmul.f32 %v761, %v1027
        %v1372 = vmul.f32 %v762, %v1029
        %v1373 = vmul.f32 %v763, %v1055
        %v1374 = vmul.f32 %v764, %v1057
        %v1375 = vmul.f32 %v765, %v1083
        %v1376 = vmul.f32 %v766, %v1085
        %v1377 = vmul.f32 %v767, %v1111
        %v1378 = vmul.f32 %v768, %v1113
        %v1379 = vmul.f32 %v769, %v1139
        %v1380 = vmul.f32 %v770, %v1141
        %v1381 = vmul.f32 %v771, %v1167
        %v1382 = vmul.f32 %v772, %v1169
        %v1383 = vmul.f32 %v773, %v1195
        %v1384 = vmul.f32 %v774, %v1197
        %v1385 = vmul.f32 %v775, %v1223
        %v1386 = vmul.f32 %v776, %v1225
        %v1387 = vmul.f32 %v777, %v1251
        %v1388 = vmul.f32 %v778, %v1253
        %v1389 = vmul.f32 %v779, %v1279
        %v1390 = vmul.f32 %v780, %v1281
        %v1391 = vmul.f32 %v781, %v1307
        %v1392 = vmul.f32 %v782, %v1309
        %v1393 = vmul.f32 %v783, %v1335
        %v1394 = vmul.f32 %v784, %v1337
        %v1395 = vmul.f32 %v785, %v1363
        %v1396 = vmul.f32 %v786, %v1365
        %v1397 = vpack.c.bf16 %v1368, %v1367
        %v1398 = vpack.c.bf16 %v1370, %v1369
        %v1399 = vpack.c.bf16 %v1372, %v1371
        %v1400 = vpack.c.bf16 %v1374, %v1373
        %v1401 = vpack.c.bf16 %v1376, %v1375
        %v1402 = vpack.c.bf16 %v1378, %v1377
        %v1403 = vpack.c.bf16 %v1380, %v1379
        %v1404 = vpack.c.bf16 %v1382, %v1381
        %v1405 = vpack.c.bf16 %v1384, %v1383
        %v1406 = vpack.c.bf16 %v1386, %v1385
        %v1407 = vpack.c.bf16 %v1388, %v1387
        %v1408 = vpack.c.bf16 %v1390, %v1389
        %v1409 = vpack.c.bf16 %v1392, %v1391
        %v1410 = vpack.c.bf16 %v1394, %v1393
        %v1411 = vpack.c.bf16 %v1396, %v1395
        %v1412 = vperm.slane %v854, 0
        %v1429 = vunpack.c.l.b16 %v787
        %v1430 = vunpack.c.l.b16 %v788
        %v1431 = vunpack.c.l.b16 %v789
        %v1432 = vunpack.c.l.b16 %v790
        %v1433 = vunpack.c.l.b16 %v791
        %v1434 = vunpack.c.l.b16 %v792
        %v1435 = vunpack.c.l.b16 %v793
        %v1436 = vunpack.c.l.b16 %v794
        %v1437 = vunpack.c.l.b16 %v795
        %v1438 = vunpack.c.l.b16 %v796
        %v1439 = vunpack.c.l.b16 %v797
        %v1440 = vunpack.c.l.b16 %v798
        %v1441 = vunpack.c.l.b16 %v799
        %v1442 = vunpack.c.l.b16 %v800
        %v1443 = vunpack.c.l.b16 %v801
        %v1444 = vunpack.c.l.b16 %v802
        %v1445 = vpack.c.b16 %v1430, %v1429
        %v1446 = vpack.c.b16 %v1432, %v1431
        %v1447 = vpack.c.b16 %v1434, %v1433
        %v1448 = vpack.c.b16 %v1436, %v1435
        %v1449 = vpack.c.b16 %v1438, %v1437
        %v1450 = vpack.c.b16 %v1440, %v1439
        %v1451 = vpack.c.b16 %v1442, %v1441
        %v1452 = vpack.c.b16 %v1444, %v1443
        %1461 = vmatpush.bf16.msra.mxu0 %v1452
        %1462 = vmatpush.bf16.msra.mxu0 %v1451
        %1463 = vmatpush.bf16.msra.mxu0 %v1450
        %1464 = vmatpush.bf16.msra.mxu0 %v1449
        %1465 = vmatpush.bf16.msra.mxu0 %v1448
        %1466 = vmatpush.bf16.msra.mxu0 %v1447
        %1467 = vmatpush.bf16.msra.mxu0 %v1446
        %1468 = vmatpush.bf16.msra.mxu0 %v1445
        %1469 = vmatmul.bf16.gmra.mxu0 %v1397
        %v1470 = vpop.f32.mrf.mxu0
        %v1471 = vadd.f32 %v1412, %v1470
        %v1472 = vpop.f32.mrf.mxu0
        %v1473 = vadd.f32 %v1412, %v1472
        %1474 = vmatmul.bf16.gmra.mxu0 %v1398
        %v1475 = vpop.f32.mrf.mxu0
        %v1476 = vadd.f32 %v1412, %v1475
        %v1477 = vpop.f32.mrf.mxu0
        %v1478 = vadd.f32 %v1412, %v1477
        %1479 = vmatmul.bf16.gmra.mxu0 %v1399
        %v1480 = vpop.f32.mrf.mxu0
        %v1481 = vadd.f32 %v1412, %v1480
        %v1482 = vpop.f32.mrf.mxu0
        %v1483 = vadd.f32 %v1412, %v1482
        %1484 = vmatmul.bf16.gmra.mxu0 %v1400
        %v1485 = vpop.f32.mrf.mxu0
        %v1486 = vadd.f32 %v1412, %v1485
        %v1487 = vpop.f32.mrf.mxu0
        %v1488 = vadd.f32 %v1412, %v1487
        %1489 = vmatmul.bf16.gmra.mxu0 %v1401
        %v1490 = vpop.f32.mrf.mxu0
        %v1491 = vadd.f32 %v1412, %v1490
        %v1492 = vpop.f32.mrf.mxu0
        %v1493 = vadd.f32 %v1412, %v1492
        %1494 = vmatmul.bf16.gmra.mxu0 %v1402
        %v1495 = vpop.f32.mrf.mxu0
        %v1496 = vadd.f32 %v1412, %v1495
        %v1497 = vpop.f32.mrf.mxu0
        %v1498 = vadd.f32 %v1412, %v1497
        %1499 = vmatmul.bf16.gmra.mxu0 %v1403
        %v1500 = vpop.f32.mrf.mxu0
        %v1501 = vadd.f32 %v1412, %v1500
        %v1502 = vpop.f32.mrf.mxu0
        %v1503 = vadd.f32 %v1412, %v1502
        %1504 = vmatmul.bf16.gmra.mxu0 %v1404
        %v1505 = vpop.f32.mrf.mxu0
        %v1506 = vadd.f32 %v1412, %v1505
        %v1507 = vpop.f32.mrf.mxu0
        %v1508 = vadd.f32 %v1412, %v1507
        %1509 = vmatmul.bf16.gmra.mxu0 %v1405
        %v1510 = vpop.f32.mrf.mxu0
        %v1511 = vadd.f32 %v1412, %v1510
        %v1512 = vpop.f32.mrf.mxu0
        %v1513 = vadd.f32 %v1412, %v1512
        %1514 = vmatmul.bf16.gmra.mxu0 %v1406
        %v1515 = vpop.f32.mrf.mxu0
        %v1516 = vadd.f32 %v1412, %v1515
        %v1517 = vpop.f32.mrf.mxu0
        %v1518 = vadd.f32 %v1412, %v1517
        %1519 = vmatmul.bf16.gmra.mxu0 %v1407
        %v1520 = vpop.f32.mrf.mxu0
        %v1521 = vadd.f32 %v1412, %v1520
        %v1522 = vpop.f32.mrf.mxu0
        %v1523 = vadd.f32 %v1412, %v1522
        %1524 = vmatmul.bf16.gmra.mxu0 %v1408
        %v1525 = vpop.f32.mrf.mxu0
        %v1526 = vadd.f32 %v1412, %v1525
        %v1527 = vpop.f32.mrf.mxu0
        %v1528 = vadd.f32 %v1412, %v1527
        %1529 = vmatmul.bf16.gmra.mxu0 %v1409
        %v1530 = vpop.f32.mrf.mxu0
        %v1531 = vadd.f32 %v1412, %v1530
        %v1532 = vpop.f32.mrf.mxu0
        %v1533 = vadd.f32 %v1412, %v1532
        %1534 = vmatmul.bf16.gmra.mxu0 %v1410
        %v1535 = vpop.f32.mrf.mxu0
        %v1536 = vadd.f32 %v1412, %v1535
        %v1537 = vpop.f32.mrf.mxu0
        %v1538 = vadd.f32 %v1412, %v1537
        %1539 = vmatmul.bf16.gmra.mxu0 %v1411
        %v1540 = vpop.f32.mrf.mxu0
        %v1541 = vadd.f32 %v1412, %v1540
        %v1542 = vpop.f32.mrf.mxu0
        %v1543 = vadd.f32 %v1412, %v1542
        %1544 = vdwg.mxu0
        %v1545 = vmax.f32 %v1471, 0.0
        %v1546 = vmax.f32 %v1473, 0.0
        %v1547 = vmax.f32 %v1476, 0.0
        %v1548 = vmax.f32 %v1478, 0.0
        %v1549 = vmax.f32 %v1481, 0.0
        %v1550 = vmax.f32 %v1483, 0.0
        %v1551 = vmax.f32 %v1486, 0.0
        %v1552 = vmax.f32 %v1488, 0.0
        %v1553 = vmax.f32 %v1491, 0.0
        %v1554 = vmax.f32 %v1493, 0.0
        %v1555 = vmax.f32 %v1496, 0.0
        %v1556 = vmax.f32 %v1498, 0.0
        %v1557 = vmax.f32 %v1501, 0.0
        %v1558 = vmax.f32 %v1503, 0.0
        %v1559 = vmax.f32 %v1506, 0.0
        %v1560 = vmax.f32 %v1508, 0.0
        %v1561 = vmax.f32 %v1511, 0.0
        %v1562 = vmax.f32 %v1513, 0.0
        %v1563 = vmax.f32 %v1516, 0.0
        %v1564 = vmax.f32 %v1518, 0.0
        %v1565 = vmax.f32 %v1521, 0.0
        %v1566 = vmax.f32 %v1523, 0.0
        %v1567 = vmax.f32 %v1526, 0.0
        %v1568 = vmax.f32 %v1528, 0.0
        %v1569 = vmax.f32 %v1531, 0.0
        %v1570 = vmax.f32 %v1533, 0.0
        %v1571 = vmax.f32 %v1536, 0.0
        %v1572 = vmax.f32 %v1538, 0.0
        %v1573 = vmax.f32 %v1541, 0.0
        %v1574 = vmax.f32 %v1543, 0.0
        %v1575 = vmul.f32 %v757, %v1545
        %v1576 = vmul.f32 %v758, %v1546
        %v1577 = vmul.f32 %v759, %v1547
        %v1578 = vmul.f32 %v760, %v1548
        %v1579 = vmul.f32 %v761, %v1549
        %v1580 = vmul.f32 %v762, %v1550
        %v1581 = vmul.f32 %v763, %v1551
        %v1582 = vmul.f32 %v764, %v1552
        %v1583 = vmul.f32 %v765, %v1553
        %v1584 = vmul.f32 %v766, %v1554
        %v1585 = vmul.f32 %v767, %v1555
        %v1586 = vmul.f32 %v768, %v1556
        %v1587 = vmul.f32 %v769, %v1557
        %v1588 = vmul.f32 %v770, %v1558
        %v1589 = vmul.f32 %v771, %v1559
        %v1590 = vmul.f32 %v772, %v1560
        %v1591 = vmul.f32 %v773, %v1561
        %v1592 = vmul.f32 %v774, %v1562
        %v1593 = vmul.f32 %v775, %v1563
        %v1594 = vmul.f32 %v776, %v1564
        %v1595 = vmul.f32 %v777, %v1565
        %v1596 = vmul.f32 %v778, %v1566
        %v1597 = vmul.f32 %v779, %v1567
        %v1598 = vmul.f32 %v780, %v1568
        %v1599 = vmul.f32 %v781, %v1569
        %v1600 = vmul.f32 %v782, %v1570
        %v1601 = vmul.f32 %v783, %v1571
        %v1602 = vmul.f32 %v784, %v1572
        %v1603 = vmul.f32 %v785, %v1573
        %v1604 = vmul.f32 %v786, %v1574
        %v1605 = vpack.c.bf16 %v1575, %v1575
        %v1606 = vpack.c.bf16 %v1576, %v1576
        %v1607 = vpack.c.bf16 %v1577, %v1577
        %v1608 = vpack.c.bf16 %v1578, %v1578
        %v1609 = vpack.c.bf16 %v1579, %v1579
        %v1610 = vpack.c.bf16 %v1580, %v1580
        %v1611 = vpack.c.bf16 %v1581, %v1581
        %v1612 = vpack.c.bf16 %v1582, %v1582
        %v1613 = vpack.c.bf16 %v1583, %v1583
        %v1614 = vpack.c.bf16 %v1584, %v1584
        %v1615 = vpack.c.bf16 %v1585, %v1585
        %v1616 = vpack.c.bf16 %v1586, %v1586
        %v1617 = vpack.c.bf16 %v1587, %v1587
        %v1618 = vpack.c.bf16 %v1588, %v1588
        %v1619 = vpack.c.bf16 %v1589, %v1589
        %v1620 = vpack.c.bf16 %v1590, %v1590
        %v1621 = vpack.c.bf16 %v1591, %v1591
        %v1622 = vpack.c.bf16 %v1592, %v1592
        %v1623 = vpack.c.bf16 %v1593, %v1593
        %v1624 = vpack.c.bf16 %v1594, %v1594
        %v1625 = vpack.c.bf16 %v1595, %v1595
        %v1626 = vpack.c.bf16 %v1596, %v1596
        %v1627 = vpack.c.bf16 %v1597, %v1597
        %v1628 = vpack.c.bf16 %v1598, %v1598
        %v1629 = vpack.c.bf16 %v1599, %v1599
        %v1630 = vpack.c.bf16 %v1600, %v1600
        %v1631 = vpack.c.bf16 %v1601, %v1601
        %v1632 = vpack.c.bf16 %v1602, %v1602
        %v1633 = vpack.c.bf16 %v1603, %v1603
        %v1634 = vpack.c.bf16 %v1604, %v1604
        %v1637 = vunpack.c.l.b16 %v1605
        %v1638 = vunpack.c.l.b16 %v1606
        %v1639 = vpack.c.b16 %v1638, %v1637
        %1641 = vmatpush.bf16.msra.mxu0 0
        %1642 = vmatpush.bf16.msra.mxu0 0
        %1643 = vmatpush.bf16.msra.mxu0 0
        %1644 = vmatpush.bf16.msra.mxu0 0
        %1645 = vmatpush.bf16.msra.mxu0 0
        %1646 = vmatpush.bf16.msra.mxu0 0
        %1647 = vmatpush.bf16.msra.mxu0 0
        %1648 = vmatpush.bf16.msra.mxu0 %v1639
        %1649 = vmatmul.bf16.gmra.mxu0 %v959
        %v1650 = vpop.f32.mrf.mxu0
        %v1651 = vadd.f32 0.0, %v1650
        %v1652 = vpop.f32.mrf.mxu0
        %v1653 = vadd.f32 0.0, %v1652
        %1654 = vdwg.mxu0
        %v1657 = vunpack.c.l.b16 %v1607
        %v1658 = vunpack.c.l.b16 %v1608
        %v1659 = vpack.c.b16 %v1658, %v1657
        %1661 = vmatpush.bf16.msra.mxu0 0
        %1662 = vmatpush.bf16.msra.mxu0 0
        %1663 = vmatpush.bf16.msra.mxu0 0
        %1664 = vmatpush.bf16.msra.mxu0 0
        %1665 = vmatpush.bf16.msra.mxu0 0
        %1666 = vmatpush.bf16.msra.mxu0 0
        %1667 = vmatpush.bf16.msra.mxu0 0
        %1668 = vmatpush.bf16.msra.mxu0 %v1659
        %1669 = vmatmul.bf16.gmra.mxu0 %v987
        %v1670 = vpop.f32.mrf.mxu0
        %v1671 = vadd.f32 0.0, %v1670
        %v1672 = vpop.f32.mrf.mxu0
        %v1673 = vadd.f32 0.0, %v1672
        %1674 = vdwg.mxu0
        %v1677 = vunpack.c.l.b16 %v1609
        %v1678 = vunpack.c.l.b16 %v1610
        %v1679 = vpack.c.b16 %v1678, %v1677
        %1681 = vmatpush.bf16.msra.mxu0 0
        %1682 = vmatpush.bf16.msra.mxu0 0
        %1683 = vmatpush.bf16.msra.mxu0 0
        %1684 = vmatpush.bf16.msra.mxu0 0
        %1685 = vmatpush.bf16.msra.mxu0 0
        %1686 = vmatpush.bf16.msra.mxu0 0
        %1687 = vmatpush.bf16.msra.mxu0 0
        %1688 = vmatpush.bf16.msra.mxu0 %v1679
        %1689 = vmatmul.bf16.gmra.mxu0 %v1015
        %v1690 = vpop.f32.mrf.mxu0
        %v1691 = vadd.f32 0.0, %v1690
        %v1692 = vpop.f32.mrf.mxu0
        %v1693 = vadd.f32 0.0, %v1692
        %1694 = vdwg.mxu0
        %v1697 = vunpack.c.l.b16 %v1611
        %v1698 = vunpack.c.l.b16 %v1612
        %v1699 = vpack.c.b16 %v1698, %v1697
        %1701 = vmatpush.bf16.msra.mxu0 0
        %1702 = vmatpush.bf16.msra.mxu0 0
        %1703 = vmatpush.bf16.msra.mxu0 0
        %1704 = vmatpush.bf16.msra.mxu0 0
        %1705 = vmatpush.bf16.msra.mxu0 0
        %1706 = vmatpush.bf16.msra.mxu0 0
        %1707 = vmatpush.bf16.msra.mxu0 0
        %1708 = vmatpush.bf16.msra.mxu0 %v1699
        %1709 = vmatmul.bf16.gmra.mxu0 %v1043
        %v1710 = vpop.f32.mrf.mxu0
        %v1711 = vadd.f32 0.0, %v1710
        %v1712 = vpop.f32.mrf.mxu0
        %v1713 = vadd.f32 0.0, %v1712
        %1714 = vdwg.mxu0
        %v1717 = vunpack.c.l.b16 %v1613
        %v1718 = vunpack.c.l.b16 %v1614
        %v1719 = vpack.c.b16 %v1718, %v1717
        %1721 = vmatpush.bf16.msra.mxu0 0
        %1722 = vmatpush.bf16.msra.mxu0 0
        %1723 = vmatpush.bf16.msra.mxu0 0
        %1724 = vmatpush.bf16.msra.mxu0 0
        %1725 = vmatpush.bf16.msra.mxu0 0
        %1726 = vmatpush.bf16.msra.mxu0 0
        %1727 = vmatpush.bf16.msra.mxu0 0
        %1728 = vmatpush.bf16.msra.mxu0 %v1719
        %1729 = vmatmul.bf16.gmra.mxu0 %v1071
        %v1730 = vpop.f32.mrf.mxu0
        %v1731 = vadd.f32 0.0, %v1730
        %v1732 = vpop.f32.mrf.mxu0
        %v1733 = vadd.f32 0.0, %v1732
        %1734 = vdwg.mxu0
        %v1737 = vunpack.c.l.b16 %v1615
        %v1738 = vunpack.c.l.b16 %v1616
        %v1739 = vpack.c.b16 %v1738, %v1737
        %1741 = vmatpush.bf16.msra.mxu0 0
        %1742 = vmatpush.bf16.msra.mxu0 0
        %1743 = vmatpush.bf16.msra.mxu0 0
        %1744 = vmatpush.bf16.msra.mxu0 0
        %1745 = vmatpush.bf16.msra.mxu0 0
        %1746 = vmatpush.bf16.msra.mxu0 0
        %1747 = vmatpush.bf16.msra.mxu0 0
        %1748 = vmatpush.bf16.msra.mxu0 %v1739
        %1749 = vmatmul.bf16.gmra.mxu0 %v1099
        %v1750 = vpop.f32.mrf.mxu0
        %v1751 = vadd.f32 0.0, %v1750
        %v1752 = vpop.f32.mrf.mxu0
        %v1753 = vadd.f32 0.0, %v1752
        %1754 = vdwg.mxu0
        %v1757 = vunpack.c.l.b16 %v1617
        %v1758 = vunpack.c.l.b16 %v1618
        %v1759 = vpack.c.b16 %v1758, %v1757
        %1761 = vmatpush.bf16.msra.mxu0 0
        %1762 = vmatpush.bf16.msra.mxu0 0
        %1763 = vmatpush.bf16.msra.mxu0 0
        %1764 = vmatpush.bf16.msra.mxu0 0
        %1765 = vmatpush.bf16.msra.mxu0 0
        %1766 = vmatpush.bf16.msra.mxu0 0
        %1767 = vmatpush.bf16.msra.mxu0 0
        %1768 = vmatpush.bf16.msra.mxu0 %v1759
        %1769 = vmatmul.bf16.gmra.mxu0 %v1127
        %v1770 = vpop.f32.mrf.mxu0
        %v1771 = vadd.f32 0.0, %v1770
        %v1772 = vpop.f32.mrf.mxu0
        %v1773 = vadd.f32 0.0, %v1772
        %1774 = vdwg.mxu0
        %v1777 = vunpack.c.l.b16 %v1619
        %v1778 = vunpack.c.l.b16 %v1620
        %v1779 = vpack.c.b16 %v1778, %v1777
        %1781 = vmatpush.bf16.msra.mxu0 0
        %1782 = vmatpush.bf16.msra.mxu0 0
        %1783 = vmatpush.bf16.msra.mxu0 0
        %1784 = vmatpush.bf16.msra.mxu0 0
        %1785 = vmatpush.bf16.msra.mxu0 0
        %1786 = vmatpush.bf16.msra.mxu0 0
        %1787 = vmatpush.bf16.msra.mxu0 0
        %1788 = vmatpush.bf16.msra.mxu0 %v1779
        %1789 = vmatmul.bf16.gmra.mxu0 %v1155
        %v1790 = vpop.f32.mrf.mxu0
        %v1791 = vadd.f32 0.0, %v1790
        %v1792 = vpop.f32.mrf.mxu0
        %v1793 = vadd.f32 0.0, %v1792
        %1794 = vdwg.mxu0
        %v1797 = vunpack.c.l.b16 %v1621
        %v1798 = vunpack.c.l.b16 %v1622
        %v1799 = vpack.c.b16 %v1798, %v1797
        %1801 = vmatpush.bf16.msra.mxu0 0
        %1802 = vmatpush.bf16.msra.mxu0 0
        %1803 = vmatpush.bf16.msra.mxu0 0
        %1804 = vmatpush.bf16.msra.mxu0 0
        %1805 = vmatpush.bf16.msra.mxu0 0
        %1806 = vmatpush.bf16.msra.mxu0 0
        %1807 = vmatpush.bf16.msra.mxu0 0
        %1808 = vmatpush.bf16.msra.mxu0 %v1799
        %1809 = vmatmul.bf16.gmra.mxu0 %v1183
        %v1810 = vpop.f32.mrf.mxu0
        %v1811 = vadd.f32 0.0, %v1810
        %v1812 = vpop.f32.mrf.mxu0
        %v1813 = vadd.f32 0.0, %v1812
        %1814 = vdwg.mxu0
        %v1817 = vunpack.c.l.b16 %v1623
        %v1818 = vunpack.c.l.b16 %v1624
        %v1819 = vpack.c.b16 %v1818, %v1817
        %1821 = vmatpush.bf16.msra.mxu0 0
        %1822 = vmatpush.bf16.msra.mxu0 0
        %1823 = vmatpush.bf16.msra.mxu0 0
        %1824 = vmatpush.bf16.msra.mxu0 0
        %1825 = vmatpush.bf16.msra.mxu0 0
        %1826 = vmatpush.bf16.msra.mxu0 0
        %1827 = vmatpush.bf16.msra.mxu0 0
        %1828 = vmatpush.bf16.msra.mxu0 %v1819
        %1829 = vmatmul.bf16.gmra.mxu0 %v1211
        %v1830 = vpop.f32.mrf.mxu0
        %v1831 = vadd.f32 0.0, %v1830
        %v1832 = vpop.f32.mrf.mxu0
        %v1833 = vadd.f32 0.0, %v1832
        %1834 = vdwg.mxu0
        %v1837 = vunpack.c.l.b16 %v1625
        %v1838 = vunpack.c.l.b16 %v1626
        %v1839 = vpack.c.b16 %v1838, %v1837
        %1841 = vmatpush.bf16.msra.mxu0 0
        %1842 = vmatpush.bf16.msra.mxu0 0
        %1843 = vmatpush.bf16.msra.mxu0 0
        %1844 = vmatpush.bf16.msra.mxu0 0
        %1845 = vmatpush.bf16.msra.mxu0 0
        %1846 = vmatpush.bf16.msra.mxu0 0
        %1847 = vmatpush.bf16.msra.mxu0 0
        %1848 = vmatpush.bf16.msra.mxu0 %v1839
        %1849 = vmatmul.bf16.gmra.mxu0 %v1239
        %v1850 = vpop.f32.mrf.mxu0
        %v1851 = vadd.f32 0.0, %v1850
        %v1852 = vpop.f32.mrf.mxu0
        %v1853 = vadd.f32 0.0, %v1852
        %1854 = vdwg.mxu0
        %v1857 = vunpack.c.l.b16 %v1627
        %v1858 = vunpack.c.l.b16 %v1628
        %v1859 = vpack.c.b16 %v1858, %v1857
        %1861 = vmatpush.bf16.msra.mxu0 0
        %1862 = vmatpush.bf16.msra.mxu0 0
        %1863 = vmatpush.bf16.msra.mxu0 0
        %1864 = vmatpush.bf16.msra.mxu0 0
        %1865 = vmatpush.bf16.msra.mxu0 0
        %1866 = vmatpush.bf16.msra.mxu0 0
        %1867 = vmatpush.bf16.msra.mxu0 0
        %1868 = vmatpush.bf16.msra.mxu0 %v1859
        %1869 = vmatmul.bf16.gmra.mxu0 %v1267
        %v1870 = vpop.f32.mrf.mxu0
        %v1871 = vadd.f32 0.0, %v1870
        %v1872 = vpop.f32.mrf.mxu0
        %v1873 = vadd.f32 0.0, %v1872
        %1874 = vdwg.mxu0
        %v1877 = vunpack.c.l.b16 %v1629
        %v1878 = vunpack.c.l.b16 %v1630
        %v1879 = vpack.c.b16 %v1878, %v1877
        %1881 = vmatpush.bf16.msra.mxu0 0
        %1882 = vmatpush.bf16.msra.mxu0 0
        %1883 = vmatpush.bf16.msra.mxu0 0
        %1884 = vmatpush.bf16.msra.mxu0 0
        %1885 = vmatpush.bf16.msra.mxu0 0
        %1886 = vmatpush.bf16.msra.mxu0 0
        %1887 = vmatpush.bf16.msra.mxu0 0
        %1888 = vmatpush.bf16.msra.mxu0 %v1879
        %1889 = vmatmul.bf16.gmra.mxu0 %v1295
        %v1890 = vpop.f32.mrf.mxu0
        %v1891 = vadd.f32 0.0, %v1890
        %v1892 = vpop.f32.mrf.mxu0
        %v1893 = vadd.f32 0.0, %v1892
        %1894 = vdwg.mxu0
        %v1897 = vunpack.c.l.b16 %v1631
        %v1898 = vunpack.c.l.b16 %v1632
        %v1899 = vpack.c.b16 %v1898, %v1897
        %1901 = vmatpush.bf16.msra.mxu0 0
        %1902 = vmatpush.bf16.msra.mxu0 0
        %1903 = vmatpush.bf16.msra.mxu0 0
        %1904 = vmatpush.bf16.msra.mxu0 0
        %1905 = vmatpush.bf16.msra.mxu0 0
        %1906 = vmatpush.bf16.msra.mxu0 0
        %1907 = vmatpush.bf16.msra.mxu0 0
        %1908 = vmatpush.bf16.msra.mxu0 %v1899
        %1909 = vmatmul.bf16.gmra.mxu0 %v1323
        %v1910 = vpop.f32.mrf.mxu0
        %v1911 = vadd.f32 0.0, %v1910
        %v1912 = vpop.f32.mrf.mxu0
        %v1913 = vadd.f32 0.0, %v1912
        %1914 = vdwg.mxu0
        %v1917 = vunpack.c.l.b16 %v1633
        %v1918 = vunpack.c.l.b16 %v1634
        %v1919 = vpack.c.b16 %v1918, %v1917
        %1921 = vmatpush.bf16.msra.mxu0 0
        %1922 = vmatpush.bf16.msra.mxu0 0
        %1923 = vmatpush.bf16.msra.mxu0 0
        %1924 = vmatpush.bf16.msra.mxu0 0
        %1925 = vmatpush.bf16.msra.mxu0 0
        %1926 = vmatpush.bf16.msra.mxu0 0
        %1927 = vmatpush.bf16.msra.mxu0 0
        %1928 = vmatpush.bf16.msra.mxu0 %v1919
        %1929 = vmatmul.bf16.gmra.mxu0 %v1351
        %v1930 = vpop.f32.mrf.mxu0
        %v1931 = vadd.f32 0.0, %v1930
        %v1932 = vpop.f32.mrf.mxu0
        %v1933 = vadd.f32 0.0, %v1932
        %1934 = vdwg.mxu0
        %v1935 = vmul.f32 %v757, %v1651
        %v1936 = vmul.f32 %v758, %v1653
        %v1937 = vmul.f32 %v759, %v1671
        %v1938 = vmul.f32 %v760, %v1673
        %v1939 = vmul.f32 %v761, %v1691
        %v1940 = vmul.f32 %v762, %v1693
        %v1941 = vmul.f32 %v763, %v1711
        %v1942 = vmul.f32 %v764, %v1713
        %v1943 = vmul.f32 %v765, %v1731
        %v1944 = vmul.f32 %v766, %v1733
        %v1945 = vmul.f32 %v767, %v1751
        %v1946 = vmul.f32 %v768, %v1753
        %v1947 = vmul.f32 %v769, %v1771
        %v1948 = vmul.f32 %v770, %v1773
        %v1949 = vmul.f32 %v771, %v1791
        %v1950 = vmul.f32 %v772, %v1793
        %v1951 = vmul.f32 %v773, %v1811
        %v1952 = vmul.f32 %v774, %v1813
        %v1953 = vmul.f32 %v775, %v1831
        %v1954 = vmul.f32 %v776, %v1833
        %v1955 = vmul.f32 %v777, %v1851
        %v1956 = vmul.f32 %v778, %v1853
        %v1957 = vmul.f32 %v779, %v1871
        %v1958 = vmul.f32 %v780, %v1873
        %v1959 = vmul.f32 %v781, %v1891
        %v1960 = vmul.f32 %v782, %v1893
        %v1961 = vmul.f32 %v783, %v1911
        %v1962 = vmul.f32 %v784, %v1913
        %v1963 = vmul.f32 %v785, %v1931
        %v1964 = vmul.f32 %v786, %v1933
        %v1965 = vpack.c.bf16 %v1936, %v1935
        %v1966 = vpack.c.bf16 %v1938, %v1937
        %v1967 = vpack.c.bf16 %v1940, %v1939
        %v1968 = vpack.c.bf16 %v1942, %v1941
        %v1969 = vpack.c.bf16 %v1944, %v1943
        %v1970 = vpack.c.bf16 %v1946, %v1945
        %v1971 = vpack.c.bf16 %v1948, %v1947
        %v1972 = vpack.c.bf16 %v1950, %v1949
        %v1973 = vpack.c.bf16 %v1952, %v1951
        %v1974 = vpack.c.bf16 %v1954, %v1953
        %v1975 = vpack.c.bf16 %v1956, %v1955
        %v1976 = vpack.c.bf16 %v1958, %v1957
        %v1977 = vpack.c.bf16 %v1960, %v1959
        %v1978 = vpack.c.bf16 %v1962, %v1961
        %v1979 = vpack.c.bf16 %v1964, %v1963
        %v1980 = vperm.slane %v855, 0
        %v1997 = vunpack.c.l.b16 %v804
        %v1998 = vunpack.c.l.b16 %v805
        %v1999 = vunpack.c.l.b16 %v806
        %v2000 = vunpack.c.l.b16 %v807
        %v2001 = vunpack.c.l.b16 %v808
        %v2002 = vunpack.c.l.b16 %v809
        %v2003 = vunpack.c.l.b16 %v810
        %v2004 = vunpack.c.l.b16 %v811
        %v2005 = vunpack.c.l.b16 %v812
        %v2006 = vunpack.c.l.b16 %v813
        %v2007 = vunpack.c.l.b16 %v814
        %v2008 = vunpack.c.l.b16 %v815
        %v2009 = vunpack.c.l.b16 %v816
        %v2010 = vunpack.c.l.b16 %v817
        %v2011 = vunpack.c.l.b16 %v818
        %v2012 = vunpack.c.l.b16 %v819
        %v2013 = vpack.c.b16 %v1998, %v1997
        %v2014 = vpack.c.b16 %v2000, %v1999
        %v2015 = vpack.c.b16 %v2002, %v2001
        %v2016 = vpack.c.b16 %v2004, %v2003
        %v2017 = vpack.c.b16 %v2006, %v2005
        %v2018 = vpack.c.b16 %v2008, %v2007
        %v2019 = vpack.c.b16 %v2010, %v2009
        %v2020 = vpack.c.b16 %v2012, %v2011
        %2029 = vmatpush.bf16.msra.mxu0 %v2020
        %2030 = vmatpush.bf16.msra.mxu0 %v2019
        %2031 = vmatpush.bf16.msra.mxu0 %v2018
        %2032 = vmatpush.bf16.msra.mxu0 %v2017
        %2033 = vmatpush.bf16.msra.mxu0 %v2016
        %2034 = vmatpush.bf16.msra.mxu0 %v2015
        %2035 = vmatpush.bf16.msra.mxu0 %v2014
        %2036 = vmatpush.bf16.msra.mxu0 %v2013
        %2037 = vmatmul.bf16.gmra.mxu0 %v1965
        %v2038 = vpop.f32.mrf.mxu0
        %v2039 = vadd.f32 %v1980, %v2038
        %v2040 = vpop.f32.mrf.mxu0
        %v2041 = vadd.f32 %v1980, %v2040
        %2042 = vmatmul.bf16.gmra.mxu0 %v1966
        %v2043 = vpop.f32.mrf.mxu0
        %v2044 = vadd.f32 %v1980, %v2043
        %v2045 = vpop.f32.mrf.mxu0
        %v2046 = vadd.f32 %v1980, %v2045
        %2047 = vmatmul.bf16.gmra.mxu0 %v1967
        %v2048 = vpop.f32.mrf.mxu0
        %v2049 = vadd.f32 %v1980, %v2048
        %v2050 = vpop.f32.mrf.mxu0
        %v2051 = vadd.f32 %v1980, %v2050
        %2052 = vmatmul.bf16.gmra.mxu0 %v1968
        %v2053 = vpop.f32.mrf.mxu0
        %v2054 = vadd.f32 %v1980, %v2053
        %v2055 = vpop.f32.mrf.mxu0
        %v2056 = vadd.f32 %v1980, %v2055
        %2057 = vmatmul.bf16.gmra.mxu0 %v1969
        %v2058 = vpop.f32.mrf.mxu0
        %v2059 = vadd.f32 %v1980, %v2058
        %v2060 = vpop.f32.mrf.mxu0
        %v2061 = vadd.f32 %v1980, %v2060
        %2062 = vmatmul.bf16.gmra.mxu0 %v1970
        %v2063 = vpop.f32.mrf.mxu0
        %v2064 = vadd.f32 %v1980, %v2063
        %v2065 = vpop.f32.mrf.mxu0
        %v2066 = vadd.f32 %v1980, %v2065
        %2067 = vmatmul.bf16.gmra.mxu0 %v1971
        %v2068 = vpop.f32.mrf.mxu0
        %v2069 = vadd.f32 %v1980, %v2068
        %v2070 = vpop.f32.mrf.mxu0
        %v2071 = vadd.f32 %v1980, %v2070
        %2072 = vmatmul.bf16.gmra.mxu0 %v1972
        %v2073 = vpop.f32.mrf.mxu0
        %v2074 = vadd.f32 %v1980, %v2073
        %v2075 = vpop.f32.mrf.mxu0
        %v2076 = vadd.f32 %v1980, %v2075
        %2077 = vmatmul.bf16.gmra.mxu0 %v1973
        %v2078 = vpop.f32.mrf.mxu0
        %v2079 = vadd.f32 %v1980, %v2078
        %v2080 = vpop.f32.mrf.mxu0
        %v2081 = vadd.f32 %v1980, %v2080
        %2082 = vmatmul.bf16.gmra.mxu0 %v1974
        %v2083 = vpop.f32.mrf.mxu0
        %v2084 = vadd.f32 %v1980, %v2083
        %v2085 = vpop.f32.mrf.mxu0
        %v2086 = vadd.f32 %v1980, %v2085
        %2087 = vmatmul.bf16.gmra.mxu0 %v1975
        %v2088 = vpop.f32.mrf.mxu0
        %v2089 = vadd.f32 %v1980, %v2088
        %v2090 = vpop.f32.mrf.mxu0
        %v2091 = vadd.f32 %v1980, %v2090
        %2092 = vmatmul.bf16.gmra.mxu0 %v1976
        %v2093 = vpop.f32.mrf.mxu0
        %v2094 = vadd.f32 %v1980, %v2093
        %v2095 = vpop.f32.mrf.mxu0
        %v2096 = vadd.f32 %v1980, %v2095
        %2097 = vmatmul.bf16.gmra.mxu0 %v1977
        %v2098 = vpop.f32.mrf.mxu0
        %v2099 = vadd.f32 %v1980, %v2098
        %v2100 = vpop.f32.mrf.mxu0
        %v2101 = vadd.f32 %v1980, %v2100
        %2102 = vmatmul.bf16.gmra.mxu0 %v1978
        %v2103 = vpop.f32.mrf.mxu0
        %v2104 = vadd.f32 %v1980, %v2103
        %v2105 = vpop.f32.mrf.mxu0
        %v2106 = vadd.f32 %v1980, %v2105
        %2107 = vmatmul.bf16.gmra.mxu0 %v1979
        %v2108 = vpop.f32.mrf.mxu0
        %v2109 = vadd.f32 %v1980, %v2108
        %v2110 = vpop.f32.mrf.mxu0
        %v2111 = vadd.f32 %v1980, %v2110
        %2112 = vdwg.mxu0
        %v2113 = vmax.f32 %v2039, 0.0
        %v2114 = vmax.f32 %v2041, 0.0
        %v2115 = vmax.f32 %v2044, 0.0
        %v2116 = vmax.f32 %v2046, 0.0
        %v2117 = vmax.f32 %v2049, 0.0
        %v2118 = vmax.f32 %v2051, 0.0
        %v2119 = vmax.f32 %v2054, 0.0
        %v2120 = vmax.f32 %v2056, 0.0
        %v2121 = vmax.f32 %v2059, 0.0
        %v2122 = vmax.f32 %v2061, 0.0
        %v2123 = vmax.f32 %v2064, 0.0
        %v2124 = vmax.f32 %v2066, 0.0
        %v2125 = vmax.f32 %v2069, 0.0
        %v2126 = vmax.f32 %v2071, 0.0
        %v2127 = vmax.f32 %v2074, 0.0
        %v2128 = vmax.f32 %v2076, 0.0
        %v2129 = vmax.f32 %v2079, 0.0
        %v2130 = vmax.f32 %v2081, 0.0
        %v2131 = vmax.f32 %v2084, 0.0
        %v2132 = vmax.f32 %v2086, 0.0
        %v2133 = vmax.f32 %v2089, 0.0
        %v2134 = vmax.f32 %v2091, 0.0
        %v2135 = vmax.f32 %v2094, 0.0
        %v2136 = vmax.f32 %v2096, 0.0
        %v2137 = vmax.f32 %v2099, 0.0
        %v2138 = vmax.f32 %v2101, 0.0
        %v2139 = vmax.f32 %v2104, 0.0
        %v2140 = vmax.f32 %v2106, 0.0
        %v2141 = vmax.f32 %v2109, 0.0
        %v2142 = vmax.f32 %v2111, 0.0
        %v2143 = vpack.c.bf16 %v2114, %v2113
        %v2144 = vpack.c.bf16 %v2116, %v2115
        %v2145 = vpack.c.bf16 %v2118, %v2117
        %v2146 = vpack.c.bf16 %v2120, %v2119
        %v2147 = vpack.c.bf16 %v2122, %v2121
        %v2148 = vpack.c.bf16 %v2124, %v2123
        %v2149 = vpack.c.bf16 %v2126, %v2125
        %v2150 = vpack.c.bf16 %v2128, %v2127
        %v2151 = vpack.c.bf16 %v2130, %v2129
        %v2152 = vpack.c.bf16 %v2132, %v2131
        %v2153 = vpack.c.bf16 %v2134, %v2133
        %v2154 = vpack.c.bf16 %v2136, %v2135
        %v2155 = vpack.c.bf16 %v2138, %v2137
        %v2156 = vpack.c.bf16 %v2140, %v2139
        %v2157 = vpack.c.bf16 %v2142, %v2141
        %v2174 = vunpack.c.l.b16 %v838
        %v2175 = vunpack.c.l.b16 %v839
        %v2176 = vunpack.c.l.b16 %v840
        %v2177 = vunpack.c.l.b16 %v841
        %v2178 = vunpack.c.l.b16 %v842
        %v2179 = vunpack.c.l.b16 %v843
        %v2180 = vunpack.c.l.b16 %v844
        %v2181 = vunpack.c.l.b16 %v845
        %v2182 = vunpack.c.l.b16 %v846
        %v2183 = vunpack.c.l.b16 %v847
        %v2184 = vunpack.c.l.b16 %v848
        %v2185 = vunpack.c.l.b16 %v849
        %v2186 = vunpack.c.l.b16 %v850
        %v2187 = vunpack.c.l.b16 %v851
        %v2188 = vunpack.c.l.b16 %v852
        %v2189 = vunpack.c.l.b16 %v853
        %v2190 = vpack.c.b16 %v2175, %v2174
        %v2191 = vpack.c.b16 %v2177, %v2176
        %v2192 = vpack.c.b16 %v2179, %v2178
        %v2193 = vpack.c.b16 %v2181, %v2180
        %v2194 = vpack.c.b16 %v2183, %v2182
        %v2195 = vpack.c.b16 %v2185, %v2184
        %v2196 = vpack.c.b16 %v2187, %v2186
        %v2197 = vpack.c.b16 %v2189, %v2188
        %2206 = vmatpush.bf16.msra.mxu0 %v2197
        %2207 = vmatpush.bf16.msra.mxu0 %v2196
        %2208 = vmatpush.bf16.msra.mxu0 %v2195
        %2209 = vmatpush.bf16.msra.mxu0 %v2194
        %2210 = vmatpush.bf16.msra.mxu0 %v2193
        %2211 = vmatpush.bf16.msra.mxu0 %v2192
        %2212 = vmatpush.bf16.msra.mxu0 %v2191
        %2213 = vmatpush.bf16.msra.mxu0 %v2190
        %2214 = vmatmul.bf16.gmra.mxu0 %v2143
        %v2215 = vpop.f32.mrf.mxu0
        %v2216 = vadd.f32 0.0, %v2215
        %v2217 = vpop.f32.mrf.mxu0
        %v2218 = vadd.f32 0.0, %v2217
        %2219 = vmatmul.bf16.gmra.mxu0 %v2144
        %v2220 = vpop.f32.mrf.mxu0
        %v2221 = vadd.f32 0.0, %v2220
        %v2222 = vpop.f32.mrf.mxu0
        %v2223 = vadd.f32 0.0, %v2222
        %2224 = vmatmul.bf16.gmra.mxu0 %v2145
        %v2225 = vpop.f32.mrf.mxu0
        %v2226 = vadd.f32 0.0, %v2225
        %v2227 = vpop.f32.mrf.mxu0
        %v2228 = vadd.f32 0.0, %v2227
        %2229 = vmatmul.bf16.gmra.mxu0 %v2146
        %v2230 = vpop.f32.mrf.mxu0
        %v2231 = vadd.f32 0.0, %v2230
        %v2232 = vpop.f32.mrf.mxu0
        %v2233 = vadd.f32 0.0, %v2232
        %2234 = vmatmul.bf16.gmra.mxu0 %v2147
        %v2235 = vpop.f32.mrf.mxu0
        %v2236 = vadd.f32 0.0, %v2235
        %v2237 = vpop.f32.mrf.mxu0
        %v2238 = vadd.f32 0.0, %v2237
        %2239 = vmatmul.bf16.gmra.mxu0 %v2148
        %v2240 = vpop.f32.mrf.mxu0
        %v2241 = vadd.f32 0.0, %v2240
        %v2242 = vpop.f32.mrf.mxu0
        %v2243 = vadd.f32 0.0, %v2242
        %2244 = vmatmul.bf16.gmra.mxu0 %v2149
        %v2245 = vpop.f32.mrf.mxu0
        %v2246 = vadd.f32 0.0, %v2245
        %v2247 = vpop.f32.mrf.mxu0
        %v2248 = vadd.f32 0.0, %v2247
        %2249 = vmatmul.bf16.gmra.mxu0 %v2150
        %v2250 = vpop.f32.mrf.mxu0
        %v2251 = vadd.f32 0.0, %v2250
        %v2252 = vpop.f32.mrf.mxu0
        %v2253 = vadd.f32 0.0, %v2252
        %2254 = vmatmul.bf16.gmra.mxu0 %v2151
        %v2255 = vpop.f32.mrf.mxu0
        %v2256 = vadd.f32 0.0, %v2255
        %v2257 = vpop.f32.mrf.mxu0
        %v2258 = vadd.f32 0.0, %v2257
        %2259 = vmatmul.bf16.gmra.mxu0 %v2152
        %v2260 = vpop.f32.mrf.mxu0
        %v2261 = vadd.f32 0.0, %v2260
        %v2262 = vpop.f32.mrf.mxu0
        %v2263 = vadd.f32 0.0, %v2262
        %2264 = vmatmul.bf16.gmra.mxu0 %v2153
        %v2265 = vpop.f32.mrf.mxu0
        %v2266 = vadd.f32 0.0, %v2265
        %v2267 = vpop.f32.mrf.mxu0
        %v2268 = vadd.f32 0.0, %v2267
        %2269 = vmatmul.bf16.gmra.mxu0 %v2154
        %v2270 = vpop.f32.mrf.mxu0
        %v2271 = vadd.f32 0.0, %v2270
        %v2272 = vpop.f32.mrf.mxu0
        %v2273 = vadd.f32 0.0, %v2272
        %2274 = vmatmul.bf16.gmra.mxu0 %v2155
        %v2275 = vpop.f32.mrf.mxu0
        %v2276 = vadd.f32 0.0, %v2275
        %v2277 = vpop.f32.mrf.mxu0
        %v2278 = vadd.f32 0.0, %v2277
        %2279 = vmatmul.bf16.gmra.mxu0 %v2156
        %v2280 = vpop.f32.mrf.mxu0
        %v2281 = vadd.f32 0.0, %v2280
        %v2282 = vpop.f32.mrf.mxu0
        %v2283 = vadd.f32 0.0, %v2282
        %2284 = vmatmul.bf16.gmra.mxu0 %v2157
        %v2285 = vpop.f32.mrf.mxu0
        %v2286 = vadd.f32 0.0, %v2285
        %v2287 = vpop.f32.mrf.mxu0
        %v2288 = vadd.f32 0.0, %v2287
        %2289 = vdwg.mxu0
        %v2320 = vunpack.c.l.b16 %v276
        %v2321 = vunpack.c.l.b16 %v277
        %v2322 = vunpack.c.l.b16 %v278
        %v2323 = vunpack.c.l.b16 %v279
        %v2324 = vunpack.c.l.b16 %v280
        %v2325 = vunpack.c.l.b16 %v281
        %v2326 = vunpack.c.l.b16 %v282
        %v2327 = vunpack.c.l.b16 %v283
        %v2328 = vunpack.c.l.b16 %v284
        %v2329 = vunpack.c.l.b16 %v285
        %v2330 = vunpack.c.l.b16 %v286
        %v2331 = vunpack.c.l.b16 %v287
        %v2332 = vunpack.c.l.b16 %v288
        %v2333 = vunpack.c.l.b16 %v289
        %v2334 = vunpack.c.l.b16 %v290
        %v2335 = vunpack.c.l.b16 %v291
        %v2336 = vunpack.c.l.b16 %v292
        %v2337 = vunpack.c.l.b16 %v293
        %v2338 = vunpack.c.l.b16 %v294
        %v2339 = vunpack.c.l.b16 %v295
        %v2340 = vunpack.c.l.b16 %v296
        %v2341 = vunpack.c.l.b16 %v297
        %v2342 = vunpack.c.l.b16 %v298
        %v2343 = vunpack.c.l.b16 %v299
        %v2344 = vunpack.c.l.b16 %v300
        %v2345 = vunpack.c.l.b16 %v301
        %v2346 = vunpack.c.l.b16 %v302
        %v2347 = vunpack.c.l.b16 %v303
        %v2348 = vunpack.c.l.b16 %v304
        %v2349 = vunpack.c.l.b16 %v305
        %v2350 = vpack.c.b16 %v2321, %v2320
        %v2351 = vpack.c.b16 %v2323, %v2322
        %v2352 = vpack.c.b16 %v2325, %v2324
        %v2353 = vpack.c.b16 %v2327, %v2326
        %v2354 = vpack.c.b16 %v2329, %v2328
        %v2355 = vpack.c.b16 %v2331, %v2330
        %v2356 = vpack.c.b16 %v2333, %v2332
        %v2357 = vpack.c.b16 %v2335, %v2334
        %v2358 = vpack.c.b16 %v2337, %v2336
        %v2359 = vpack.c.b16 %v2339, %v2338
        %v2360 = vpack.c.b16 %v2341, %v2340
        %v2361 = vpack.c.b16 %v2343, %v2342
        %v2362 = vpack.c.b16 %v2345, %v2344
        %v2363 = vpack.c.b16 %v2347, %v2346
        %v2364 = vpack.c.b16 %v2349, %v2348
        %v2396 = vunpack.c.l.b16 %v821
        %v2397 = vunpack.c.l.b16 %v822
        %v2398 = vunpack.c.l.b16 %v823
        %v2399 = vunpack.c.l.b16 %v824
        %v2400 = vunpack.c.l.b16 %v825
        %v2401 = vunpack.c.l.b16 %v826
        %v2402 = vunpack.c.l.b16 %v827
        %v2403 = vunpack.c.l.b16 %v828
        %v2404 = vunpack.c.l.b16 %v829
        %v2405 = vunpack.c.l.b16 %v830
        %v2406 = vunpack.c.l.b16 %v831
        %v2407 = vunpack.c.l.b16 %v832
        %v2408 = vunpack.c.l.b16 %v833
        %v2409 = vunpack.c.l.b16 %v834
        %v2410 = vunpack.c.l.b16 %v835
        %v2411 = vunpack.c.l.b16 %v836
        %v2412 = vpack.c.b16 %v2397, %v2396
        %v2413 = vpack.c.b16 %v2399, %v2398
        %v2414 = vpack.c.b16 %v2401, %v2400
        %v2415 = vpack.c.b16 %v2403, %v2402
        %v2416 = vpack.c.b16 %v2405, %v2404
        %v2417 = vpack.c.b16 %v2407, %v2406
        %v2418 = vpack.c.b16 %v2409, %v2408
        %v2419 = vpack.c.b16 %v2411, %v2410
        %2428 = vmatpush.bf16.msra.mxu0 %v2419
        %2429 = vmatpush.bf16.msra.mxu0 %v2418
        %2430 = vmatpush.bf16.msra.mxu0 %v2417
        %2431 = vmatpush.bf16.msra.mxu0 %v2416
        %2432 = vmatpush.bf16.msra.mxu0 %v2415
        %2433 = vmatpush.bf16.msra.mxu0 %v2414
        %2434 = vmatpush.bf16.msra.mxu0 %v2413
        %2435 = vmatpush.bf16.msra.mxu0 %v2412
        %2436 = vmatmul.bf16.gmra.mxu0 %v2350
        %v2437 = vpop.f32.mrf.mxu0
        %v2438 = vadd.f32 %v2216, %v2437
        %v2439 = vpop.f32.mrf.mxu0
        %v2440 = vadd.f32 %v2218, %v2439
        %2441 = vmatmul.bf16.gmra.mxu0 %v2351
        %v2442 = vpop.f32.mrf.mxu0
        %v2443 = vadd.f32 %v2221, %v2442
        %v2444 = vpop.f32.mrf.mxu0
        %v2445 = vadd.f32 %v2223, %v2444
        %2446 = vmatmul.bf16.gmra.mxu0 %v2352
        %v2447 = vpop.f32.mrf.mxu0
        %v2448 = vadd.f32 %v2226, %v2447
        %v2449 = vpop.f32.mrf.mxu0
        %v2450 = vadd.f32 %v2228, %v2449
        %2451 = vmatmul.bf16.gmra.mxu0 %v2353
        %v2452 = vpop.f32.mrf.mxu0
        %v2453 = vadd.f32 %v2231, %v2452
        %v2454 = vpop.f32.mrf.mxu0
        %v2455 = vadd.f32 %v2233, %v2454
        %2456 = vmatmul.bf16.gmra.mxu0 %v2354
        %v2457 = vpop.f32.mrf.mxu0
        %v2458 = vadd.f32 %v2236, %v2457
        %v2459 = vpop.f32.mrf.mxu0
        %v2460 = vadd.f32 %v2238, %v2459
        %2461 = vmatmul.bf16.gmra.mxu0 %v2355
        %v2462 = vpop.f32.mrf.mxu0
        %v2463 = vadd.f32 %v2241, %v2462
        %v2464 = vpop.f32.mrf.mxu0
        %v2465 = vadd.f32 %v2243, %v2464
        %2466 = vmatmul.bf16.gmra.mxu0 %v2356
        %v2467 = vpop.f32.mrf.mxu0
        %v2468 = vadd.f32 %v2246, %v2467
        %v2469 = vpop.f32.mrf.mxu0
        %v2470 = vadd.f32 %v2248, %v2469
        %2471 = vmatmul.bf16.gmra.mxu0 %v2357
        %v2472 = vpop.f32.mrf.mxu0
        %v2473 = vadd.f32 %v2251, %v2472
        %v2474 = vpop.f32.mrf.mxu0
        %v2475 = vadd.f32 %v2253, %v2474
        %2476 = vmatmul.bf16.gmra.mxu0 %v2358
        %v2477 = vpop.f32.mrf.mxu0
        %v2478 = vadd.f32 %v2256, %v2477
        %v2479 = vpop.f32.mrf.mxu0
        %v2480 = vadd.f32 %v2258, %v2479
        %2481 = vmatmul.bf16.gmra.mxu0 %v2359
        %v2482 = vpop.f32.mrf.mxu0
        %v2483 = vadd.f32 %v2261, %v2482
        %v2484 = vpop.f32.mrf.mxu0
        %v2485 = vadd.f32 %v2263, %v2484
        %2486 = vmatmul.bf16.gmra.mxu0 %v2360
        %v2487 = vpop.f32.mrf.mxu0
        %v2488 = vadd.f32 %v2266, %v2487
        %v2489 = vpop.f32.mrf.mxu0
        %v2490 = vadd.f32 %v2268, %v2489
        %2491 = vmatmul.bf16.gmra.mxu0 %v2361
        %v2492 = vpop.f32.mrf.mxu0
        %v2493 = vadd.f32 %v2271, %v2492
        %v2494 = vpop.f32.mrf.mxu0
        %v2495 = vadd.f32 %v2273, %v2494
        %2496 = vmatmul.bf16.gmra.mxu0 %v2362
        %v2497 = vpop.f32.mrf.mxu0
        %v2498 = vadd.f32 %v2276, %v2497
        %v2499 = vpop.f32.mrf.mxu0
        %v2500 = vadd.f32 %v2278, %v2499
        %2501 = vmatmul.bf16.gmra.mxu0 %v2363
        %v2502 = vpop.f32.mrf.mxu0
        %v2503 = vadd.f32 %v2281, %v2502
        %v2504 = vpop.f32.mrf.mxu0
        %v2505 = vadd.f32 %v2283, %v2504
        %2506 = vmatmul.bf16.gmra.mxu0 %v2364
        %v2507 = vpop.f32.mrf.mxu0
        %v2508 = vadd.f32 %v2286, %v2507
        %v2509 = vpop.f32.mrf.mxu0
        %v2510 = vadd.f32 %v2288, %v2509
        %2511 = vdwg.mxu0
        %v2512 = vperm.slane %v856, 0
        %v2513 = vadd.f32 %v2438, %v2512
        %v2514 = vadd.f32 %v2440, %v2512
        %v2515 = vadd.f32 %v2443, %v2512
        %v2516 = vadd.f32 %v2445, %v2512
        %v2517 = vadd.f32 %v2448, %v2512
        %v2518 = vadd.f32 %v2450, %v2512
        %v2519 = vadd.f32 %v2453, %v2512
        %v2520 = vadd.f32 %v2455, %v2512
        %v2521 = vadd.f32 %v2458, %v2512
        %v2522 = vadd.f32 %v2460, %v2512
        %v2523 = vadd.f32 %v2463, %v2512
        %v2524 = vadd.f32 %v2465, %v2512
        %v2525 = vadd.f32 %v2468, %v2512
        %v2526 = vadd.f32 %v2470, %v2512
        %v2527 = vadd.f32 %v2473, %v2512
        %v2528 = vadd.f32 %v2475, %v2512
        %v2529 = vadd.f32 %v2478, %v2512
        %v2530 = vadd.f32 %v2480, %v2512
        %v2531 = vadd.f32 %v2483, %v2512
        %v2532 = vadd.f32 %v2485, %v2512
        %v2533 = vadd.f32 %v2488, %v2512
        %v2534 = vadd.f32 %v2490, %v2512
        %v2535 = vadd.f32 %v2493, %v2512
        %v2536 = vadd.f32 %v2495, %v2512
        %v2537 = vadd.f32 %v2498, %v2512
        %v2538 = vadd.f32 %v2500, %v2512
        %v2539 = vadd.f32 %v2503, %v2512
        %v2540 = vadd.f32 %v2505, %v2512
        %v2541 = vadd.f32 %v2508, %v2512
        %v2542 = vadd.f32 %v2510, %v2512
        %v2543 = vmax.f32 %v2513, 0.0
        %v2544 = vmax.f32 %v2514, 0.0
        %v2545 = vmax.f32 %v2515, 0.0
        %v2546 = vmax.f32 %v2516, 0.0
        %v2547 = vmax.f32 %v2517, 0.0
        %v2548 = vmax.f32 %v2518, 0.0
        %v2549 = vmax.f32 %v2519, 0.0
        %v2550 = vmax.f32 %v2520, 0.0
        %v2551 = vmax.f32 %v2521, 0.0
        %v2552 = vmax.f32 %v2522, 0.0
        %v2553 = vmax.f32 %v2523, 0.0
        %v2554 = vmax.f32 %v2524, 0.0
        %v2555 = vmax.f32 %v2525, 0.0
        %v2556 = vmax.f32 %v2526, 0.0
        %v2557 = vmax.f32 %v2527, 0.0
        %v2558 = vmax.f32 %v2528, 0.0
        %v2559 = vmax.f32 %v2529, 0.0
        %v2560 = vmax.f32 %v2530, 0.0
        %v2561 = vmax.f32 %v2531, 0.0
        %v2562 = vmax.f32 %v2532, 0.0
        %v2563 = vmax.f32 %v2533, 0.0
        %v2564 = vmax.f32 %v2534, 0.0
        %v2565 = vmax.f32 %v2535, 0.0
        %v2566 = vmax.f32 %v2536, 0.0
        %v2567 = vmax.f32 %v2537, 0.0
        %v2568 = vmax.f32 %v2538, 0.0
        %v2569 = vmax.f32 %v2539, 0.0
        %v2570 = vmax.f32 %v2540, 0.0
        %v2571 = vmax.f32 %v2541, 0.0
        %v2572 = vmax.f32 %v2542, 0.0
        %2573 = vst [vmem:[%s235] sm:$0xff] %v2543
        %2574 = vst [vmem:[%s235 + $0x8] sm:$0xff] %v2544
        %2575 = vst [vmem:[%s235 + $0x10] sm:$0xff] %v2545
        %2576 = vst [vmem:[%s235 + $0x18] sm:$0xff] %v2546
        %2577 = vst [vmem:[%s235 + $0x20] sm:$0xff] %v2547
        %2578 = vst [vmem:[%s235 + $0x28] sm:$0xff] %v2548
        %2579 = vst [vmem:[%s235 + $0x30] sm:$0xff] %v2549
        %2580 = vst [vmem:[%s235 + $0x38] sm:$0xff] %v2550
        %2581 = vst [vmem:[%s235 + $0x40] sm:$0xff] %v2551
        %2582 = vst [vmem:[%s235 + $0x48] sm:$0xff] %v2552
        %2583 = vst [vmem:[%s235 + $0x50] sm:$0xff] %v2553
        %2584 = vst [vmem:[%s235 + $0x58] sm:$0xff] %v2554
        %2585 = vst [vmem:[%s235 + $0x60] sm:$0xff] %v2555
        %2586 = vst [vmem:[%s235 + $0x68] sm:$0xff] %v2556
        %2587 = vst [vmem:[%s235 + $0x70] sm:$0xff] %v2557
        %2588 = vst [vmem:[%s235 + $0x78] sm:$0xff] %v2558
        %2589 = vst [vmem:[%s235 + $0x80] sm:$0xff] %v2559
        %2590 = vst [vmem:[%s235 + $0x88] sm:$0xff] %v2560
        %2591 = vst [vmem:[%s235 + $0x90] sm:$0xff] %v2561
        %2592 = vst [vmem:[%s235 + $0x98] sm:$0xff] %v2562
        %2593 = vst [vmem:[%s235 + $0xa0] sm:$0xff] %v2563
        %2594 = vst [vmem:[%s235 + $0xa8] sm:$0xff] %v2564
        %2595 = vst [vmem:[%s235 + $0xb0] sm:$0xff] %v2565
        %2596 = vst [vmem:[%s235 + $0xb8] sm:$0xff] %v2566
        %2597 = vst [vmem:[%s235 + $0xc0] sm:$0xff] %v2567
        %2598 = vst [vmem:[%s235 + $0xc8] sm:$0xff] %v2568
        %2599 = vst [vmem:[%s235 + $0xd0] sm:$0xff] %v2569
        %2600 = vst [vmem:[%s235 + $0xd8] sm:$0xff] %v2570
        %2601 = vst [vmem:[%s235 + $0xe0] sm:$0xff] %v2571
        %2602 = vst [vmem:[%s235 + $0xe8] sm:$0xff] %v2572
        %s2603 = sand.u32 %s123, 1
        %s2604 = scalar_lea.sflag [#allocation4], %s2603
        %s2605 = sand.u32 %s123, 1
        %s2606 = smul.addr %s2605, 240
        %s2607 = scalar_lea.vmem [#allocation5], %s2606
        // Predicated region
        $region41: #{tpu_custom_call.1} parent=35 // pred_check
          %p2608 = pneg %p133
        $region42: #{tpu_custom_call.1} parent=35 // pred_check_branch
          %2610 = sbr.rel (%p2608) target = $region44
        $region43: #{tpu_custom_call.1} parent=35 // pred_region
          %s2611 = smul.u32 30, %s21
          %2613 = vsyncadd %s2604, 0
          %s2614 = smul.addr %s2611, 8
          %s2615 = scalar_lea.hbm %s4, %s2614
          %s2616 = sshll.u32 %s2607, 4
          %s2617 = int_to_ptr.vmem [resolvable:$true] %s2616
          %s2618 = sshll.u32 %s2615, 4
          %s2619 = int_to_ptr.hbm [resolvable:$true] %s2618
          %2624 = dma.vmem_to_hbm [thread:$0]  %s2617, 3840, %s2619, %s2604, 128, 128, 8
        $region44: #{tpu_custom_call.1} parent=35 // pred_fallthru
          _
      $region36: #{tpu_custom_call.1} parent=5 // pred_fallthru
        _
      %p2625 = scmp.le.s32.totalorder 2, %s16
      // Predicated region
      $region45: #{tpu_custom_call.1} parent=5 // pred_check
        %p2626 = pneg %p2625
      $region46: #{tpu_custom_call.1} parent=5 // pred_check_branch
        %2628 = sbr.rel (%p2626) target = $region48
      $region47: #{tpu_custom_call.1} parent=5 // pred_region
        %s2629 = ssub.s32 %s16, 2
        // Predicated region
        $region49: #{tpu_custom_call.1} parent=47 // pred_check
          %p2630 = pneg %p139
        $region50: #{tpu_custom_call.1} parent=47 // pred_check_branch
          %2632 = sbr.rel (%p2630) target = $region52
        $region51: #{tpu_custom_call.1} parent=47 // pred_region
          %s2633 = sand.u32 %s124, 1
          %s2634 = scalar_lea.sflag [#allocation4], %s2633
          %s2635 = sand.u32 %s124, 1
          %s2636 = smul.addr %s2635, 240
          %s2637 = scalar_lea.vmem [#allocation5], %s2636
          %2639 = dma.done %s2634, 3840
        $region52: #{tpu_custom_call.1} parent=47 // pred_fallthru
          _
      $region48: #{tpu_custom_call.1} parent=5 // pred_fallthru
        _
    $region6: #{tpu_custom_call.1} parent=1 // loop_footer
      %s20 = sadd.s32 1, %s16
    $region7: #{tpu_custom_call.1} parent=1 // loop_footer_branch
      %15 = sbr.rel target = $region3
    $region8: #{tpu_custom_call.1} parent=1 // loop_exit
      _
    %2640 = vsyncpa [#allocation3], 1
    %s2641 = scalar_lea.sflag [#allocation3], 1
    %2642 = vsyncpa %s2641, 1
    %2643 = vsyncpa [#allocation4], 1
    %s2644 = scalar_lea.sflag [#allocation4], 1
    %2645 = vsyncpa %s2644, 1

// kernel: tpu_custom_call.1
$region0: #{tpu_custom_call.1}
  #allocation0 [shape = 'u32[]', space=smem, size = 0x4, offset = 0x4, fixed_abs, tag = 'smem constant byte address 0x4 - core index']
  #allocation1 [shape = 'u32[72,128]{1,0:T(1,128)}', space=vmem, size = 0x9000, scoped, tag = 'internal scratch']
  %s0 = inlined_call_operand.vmem [shape: bf16[30,16,16], index: 0, kind: input, shape index: {}]
  %s1 = inlined_call_operand.hbm [shape: bf16[480,128], index: 1, kind: input, shape index: {}]
  %s2 = inlined_call_operand.vmem [shape: bf16[4,128,128], index: 2, kind: input, shape index: {}]
  %s3 = inlined_call_operand.vmem [shape: f32[3,128], index: 3, kind: input, shape index: {}]
  %s4 = inlined_call_operand.hbm [shape: f32[480,128], index: 4, kind: output, shape index: {}]
  %s5 = sld [smem:[#allocation0]]
  $region53: #{tpu_custom_call.1} parent=0
    _
  %s7 = ssub.s32 1, %s5
  %s8 = scalar_select 0, %s7, %s5
  $region1: #{tpu_custom_call.1} parent=0
    #allocation2 [shape = 'u8[122880]{0}', space=vmem, size = 0x1e000, scoped, tag = 'input window, operand 1']
    #allocation3 [shape = 's32[2]{0}', space=sflag, size = 0x8, scoped, tag = 'scoped memory for tpu_custom_call.1']
    #allocation4 [shape = 's32[2]{0}', space=sflag, size = 0x8, scoped, tag = 'scoped memory for tpu_custom_call.1']
    #allocation5 [shape = 'u8[245760]{0}', space=vmem, size = 0x3c000, scoped, tag = 'output window, operand 0']
    %9 = vsyncpa [#allocation3], 0
    %s10 = scalar_lea.sflag [#allocation3], 1
    %11 = vsyncpa %s10, 0
    %12 = vsyncpa [#allocation4], 0
    %s13 = scalar_lea.sflag [#allocation4], 1
    %14 = vsyncpa %s13, 0
    loop: start=0, step=1, limit=4
    $region2: #{tpu_custom_call.1} parent=1 // loop_pre_header
      _
    $region3: #{tpu_custom_call.1} parent=1 // loop_header
      %s16 = sphi 0, %s20
      %p17 = scmp.ge.s32.totalorder %s16, 4
      %s26 = sphi 0, %s28
      %s29 = sphi 0, %s26
      %s30 = sphi 0, %s29
      %s46 = sphi 0, %s30
      %s52 = sphi 0, %s54
      %s55 = sphi 0, %s52
      %s56 = sphi 0, %s55
      %s72 = sphi 0, %s56
      %s76 = sphi 0, %s76
      %s78 = sphi 0, %s76
      %s79 = sphi 0, %s78
      %s93 = sphi 0, %s79
      %s97 = sphi 0, %s97
      %s99 = sphi 0, %s97
      %s100 = sphi 0, %s99
      %s114 = sphi 0, %s100
      %s120 = sphi 0, %s122
      %s123 = sphi 0, %s120
      %s124 = sphi 0, %s123
      %s140 = sphi 0, %s124
    $region4: #{tpu_custom_call.1} parent=1 // loop_header_branch
      %19 = sbr.rel (%p17) target = $region8
    $region5: #{tpu_custom_call.1} parent=1 // loop_body
      %s21 = ssub.s32 %s16, 1
      %s22 = ssub.s32 %s16, 2
      %s23 = sadd.s32 %s16, 1
      %s24 = ssub.s32 %s16, %s23
      %p25 = scmp.eq.s32.totalorder %s24, 0
      %s27 = sadd.s32 %s26, 1
      %s28 = scalar_select %p25, %s26, %s27
      %p31 = pneg %p25
      %p32 = scmp.eq.s32.totalorder %s16, 1
      %p33 = por %p31, %p32
      %p34 = scmp.ne.s32.totalorder %s26, %s29
      %p35 = scmp.eq.s32.totalorder %s16, 0
      %p36 = por %p34, %p35
      %p37 = scmp.ne.s32.totalorder %s26, %s29
      %p38 = scmp.eq.s32.totalorder %s21, 1
      %p39 = por %p37, %p38
      %p40 = scmp.ne.s32.totalorder %s29, %s30
      %p41 = scmp.eq.s32.totalorder %s21, 0
      %p42 = por %p40, %p41
      %p43 = scmp.ne.s32.totalorder %s29, %s30
      %p44 = scmp.eq.s32.totalorder %s22, 1
      %p45 = por %p43, %p44
      %p47 = scmp.ne.s32.totalorder %s30, %s46
      %p48 = scmp.eq.s32.totalorder %s22, 0
      %p49 = por %p47, %p48
      %s50 = ssub.s32 %s16, %s23
      %p51 = scmp.eq.s32.totalorder %s50, 0
      %s53 = sadd.s32 %s52, 1
      %s54 = scalar_select %p51, %s52, %s53
      %p57 = pneg %p51
      %p58 = scmp.eq.s32.totalorder %s16, 1
      %p59 = por %p57, %p58
      %p60 = scmp.ne.s32.totalorder %s52, %s55
      %p61 = scmp.eq.s32.totalorder %s16, 0
      %p62 = por %p60, %p61
      %p63 = scmp.ne.s32.totalorder %s52, %s55
      %p64 = scmp.eq.s32.totalorder %s21, 1
      %p65 = por %p63, %p64
      %p66 = scmp.ne.s32.totalorder %s55, %s56
      %p67 = scmp.eq.s32.totalorder %s21, 0
      %p68 = por %p66, %p67
      %p69 = scmp.ne.s32.totalorder %s55, %s56
      %p70 = scmp.eq.s32.totalorder %s22, 1
      %p71 = por %p69, %p70
      %p73 = scmp.ne.s32.totalorder %s56, %s72
      %p74 = scmp.eq.s32.totalorder %s22, 0
      %p75 = por %p73, %p74
      %s77 = sadd.s32 %s76, 1
      %p80 = scmp.eq.s32.totalorder %s16, 1
      %p81 = scmp.ne.s32.totalorder %s76, %s78
      %p82 = scmp.eq.s32.totalorder %s16, 0
      %p83 = por %p81, %p82
      %p84 = scmp.ne.s32.totalorder %s76, %s78
      %p85 = scmp.eq.s32.totalorder %s21, 1
      %p86 = por %p84, %p85
      %p87 = scmp.ne.s32.totalorder %s78, %s79
      %p88 = scmp.eq.s32.totalorder %s21, 0
      %p89 = por %p87, %p88
      %p90 = scmp.ne.s32.totalorder %s78, %s79
      %p91 = scmp.eq.s32.totalorder %s22, 1
      %p92 = por %p90, %p91
      %p94 = scmp.ne.s32.totalorder %s79, %s93
      %p95 = scmp.eq.s32.totalorder %s22, 0
      %p96 = por %p94, %p95
      %s98 = sadd.s32 %s97, 1
      %p101 = scmp.eq.s32.totalorder %s16, 1
      %p102 = scmp.ne.s32.totalorder %s97, %s99
      %p103 = scmp.eq.s32.totalorder %s16, 0
      %p104 = por %p102, %p103
      %p105 = scmp.ne.s32.totalorder %s97, %s99
      %p106 = scmp.eq.s32.totalorder %s21, 1
      %p107 = por %p105, %p106
      %p108 = scmp.ne.s32.totalorder %s99, %s100
      %p109 = scmp.eq.s32.totalorder %s21, 0
      %p110 = por %p108, %p109
      %p111 = scmp.ne.s32.totalorder %s99, %s100
      %p112 = scmp.eq.s32.totalorder %s22, 1
      %p113 = por %p111, %p112
      %p115 = scmp.ne.s32.totalorder %s100, %s114
      %p116 = scmp.eq.s32.totalorder %s22, 0
      %p117 = por %p115, %p116
      %s118 = ssub.s32 %s16, %s23
      %p119 = scmp.eq.s32.totalorder %s118, 0
      %s121 = sadd.s32 %s120, 1
      %s122 = scalar_select %p119, %s120, %s121
      %p125 = pneg %p119
      %p126 = scmp.eq.s32.totalorder %s16, 1
      %p127 = por %p125, %p126
      %p128 = scmp.ne.s32.totalorder %s120, %s123
      %p129 = scmp.eq.s32.totalorder %s16, 0
      %p130 = por %p128, %p129
      %p131 = scmp.ne.s32.totalorder %s120, %s123
      %p132 = scmp.eq.s32.totalorder %s21, 1
      %p133 = por %p131, %p132
      %p134 = scmp.ne.s32.totalorder %s123, %s124
      %p135 = scmp.eq.s32.totalorder %s21, 0
      %p136 = por %p134, %p135
      %p137 = scmp.ne.s32.totalorder %s123, %s124
      %p138 = scmp.eq.s32.totalorder %s22, 1
      %p139 = por %p137, %p138
      %p141 = scmp.ne.s32.totalorder %s124, %s140
      %p142 = scmp.eq.s32.totalorder %s22, 0
      %p143 = por %p141, %p142
      %p144 = scmp.le.s32.totalorder 1, %s16
      %p145 = scmp.lt.s32.totalorder %s16, 3
      %p146 = pnand %p144, %p145
      %p147 = pneg %p146
      // Predicated region
      $region9: #{tpu_custom_call.1} parent=5 // pred_check
        _
      $region10: #{tpu_custom_call.1} parent=5 // pred_check_branch
        %149 = sbr.rel (%p146) target = $region12
      $region11: #{tpu_custom_call.1} parent=5 // pred_region
        %s150 = ssub.s32 %s16, 1
        // Predicated region
        $region13: #{tpu_custom_call.1} parent=11 // pred_check
          %p151 = pneg %p89
        $region14: #{tpu_custom_call.1} parent=11 // pred_check_branch
          %153 = sbr.rel (%p151) target = $region16
        $region15: #{tpu_custom_call.1} parent=11 // pred_region
          _
        $region16: #{tpu_custom_call.1} parent=11 // pred_fallthru
          _
        // Predicated region
        $region17: #{tpu_custom_call.1} parent=11 // pred_check
          %p154 = pneg %p110
        $region18: #{tpu_custom_call.1} parent=11 // pred_check_branch
          %156 = sbr.rel (%p154) target = $region20
        $region19: #{tpu_custom_call.1} parent=11 // pred_region
          _
        $region20: #{tpu_custom_call.1} parent=11 // pred_fallthru
          _
      $region12: #{tpu_custom_call.1} parent=5 // pred_fallthru
        _
      %p157 = scmp.lt.s32.totalorder %s16, 2
      // Predicated region
      $region21: #{tpu_custom_call.1} parent=5 // pred_check
        %p158 = pneg %p157
      $region22: #{tpu_custom_call.1} parent=5 // pred_check_branch
        %160 = sbr.rel (%p158) target = $region24
      $region23: #{tpu_custom_call.1} parent=5 // pred_region
        // Predicated region
        $region25: #{tpu_custom_call.1} parent=23 // pred_check
          %p161 = pneg %p36
        $region26: #{tpu_custom_call.1} parent=23 // pred_check_branch
          %163 = sbr.rel (%p161) target = $region28
        $region27: #{tpu_custom_call.1} parent=23 // pred_region
          %s164 = smul.u32 15, %s16
          %p165 = scmp.lt.s32.totalorder %s164, 29
          %s166 = scalar_select %p165, %s164, 29
          %s167 = smul.addr %s166, 2
          %s168 = smul.addr %s167, 4
          %s169 = scalar_lea.vmem %s0, %s168
          %s170 = smul.u32 15, %s16
        $region28: #{tpu_custom_call.1} parent=23 // pred_fallthru
          _
        // Predicated region
        $region29: #{tpu_custom_call.1} parent=23 // pred_check
          %p171 = pneg %p62
        $region30: #{tpu_custom_call.1} parent=23 // pred_check_branch
          %173 = sbr.rel (%p171) target = $region32
        $region31: #{tpu_custom_call.1} parent=23 // pred_region
          %s174 = sand.u32 %s52, 1
          %s175 = scalar_lea.sflag [#allocation3], %s174
          %s176 = sand.u32 %s52, 1
          %s177 = smul.addr %s176, 120
          %s178 = scalar_lea.vmem [#allocation2], %s177
          %s179 = smul.u32 30, %s16
          %181 = vsyncadd %s175, 0
          %s182 = smul.addr %s179, 4
          %s183 = scalar_lea.hbm %s1, %s182
          %s184 = sshll.u32 %s183, 4
          %s185 = int_to_ptr.hbm [resolvable:$true] %s184
          %s186 = sshll.u32 %s178, 4
          %s187 = int_to_ptr.vmem [resolvable:$true] %s186
          %192 = dma.hbm_to_vmem [thread:$0]  %s185, 1920, %s187, %s175, 64, 64, 4
        $region32: #{tpu_custom_call.1} parent=23 // pred_fallthru
          _
      $region24: #{tpu_custom_call.1} parent=5 // pred_fallthru
        _
      %p193 = scmp.le.s32.totalorder 1, %s16
      %p194 = scmp.lt.s32.totalorder %s16, 3
      %p195 = pnand %p193, %p194
      %p196 = pneg %p195
      // Predicated region
      $region33: #{tpu_custom_call.1} parent=5 // pred_check
        _
      $region34: #{tpu_custom_call.1} parent=5 // pred_check_branch
        %198 = sbr.rel (%p195) target = $region36
      $region35: #{tpu_custom_call.1} parent=5 // pred_region
        %s199 = ssub.s32 %s16, 1
        %s200 = sand.u32 %s55, 1
        %s201 = scalar_lea.sflag [#allocation3], %s200
        %s202 = sand.u32 %s55, 1
        %s203 = smul.addr %s202, 120
        %s204 = scalar_lea.vmem [#allocation2], %s203
        // Predicated region
        $region37: #{tpu_custom_call.1} parent=35 // pred_check
          %p205 = pneg %p68
        $region38: #{tpu_custom_call.1} parent=35 // pred_check_branch
          %207 = sbr.rel (%p205) target = $region40
        $region39: #{tpu_custom_call.1} parent=35 // pred_region
          %209 = dma.done %s201, 1920
        $region40: #{tpu_custom_call.1} parent=35 // pred_fallthru
          _
        %s210 = smul.u32 15, %s21
        %p211 = scmp.lt.s32.totalorder %s210, 29
        %s212 = scalar_select %p211, %s210, 29
        %s213 = smul.addr %s212, 2
        %s214 = smul.addr %s213, 4
        %s215 = scalar_lea.vmem %s0, %s214
        %p216 = pneg %p42
        %p217 = pneg %p39
        %s218 = sand.u32 %s55, 1
        %s219 = scalar_lea.sflag [#allocation3], %s218
        %s220 = sand.u32 %s55, 1
        %s221 = smul.addr %s220, 120
        %s222 = scalar_lea.vmem [#allocation2], %s221
        %p223 = pneg %p68
        %p224 = pneg %p65
        %p225 = pneg %p89
        %p226 = pneg %p86
        %p227 = pneg %p110
        %p228 = pneg %p107
        %p229 = pneg %p136
        %p230 = pneg %p133
        %s231 = sand.u32 %s123, 1
        %s232 = scalar_lea.sflag [#allocation4], %s231
        %s233 = sand.u32 %s123, 1
        %s234 = smul.addr %s233, 240
        %s235 = scalar_lea.vmem [#allocation5], %s234
        %s236 = smul.u32 15, %s21
        %p237 = scmp.lt.s32.totalorder %s236, 29
        %s238 = scalar_select %p237, %s236, 29
        %s239 = smul.addr %s238, 2
        %s240 = smul.addr %s239, 4
        %s241 = scalar_lea.vmem %s0, %s240
        %s242 = smul.u32 15, %s21
        %s243 = smul.u32 30, %s21
        %s244 = smul.u32 30, %s21
        %v246 = vld [vmem:[%s241] sm:$0xf]
        %v247 = vld [vmem:[%s241 + $0x4] sm:$0xf]
        %v248 = vld [vmem:[%s241 + $0x8] sm:$0xf]
        %v249 = vld [vmem:[%s241 + $0xc] sm:$0xf]
        %v250 = vld [vmem:[%s241 + $0x10] sm:$0xf]
        %v251 = vld [vmem:[%s241 + $0x14] sm:$0xf]
        %v252 = vld [vmem:[%s241 + $0x18] sm:$0xf]
        %v253 = vld [vmem:[%s241 + $0x1c] sm:$0xf]
        %v254 = vld [vmem:[%s241 + $0x20] sm:$0xf]
        %v255 = vld [vmem:[%s241 + $0x24] sm:$0xf]
        %v256 = vld [vmem:[%s241 + $0x28] sm:$0xf]
        %v257 = vld [vmem:[%s241 + $0x2c] sm:$0xf]
        %v258 = vld [vmem:[%s241 + $0x30] sm:$0xf]
        %v259 = vld [vmem:[%s241 + $0x34] sm:$0xf]
        %v260 = vld [vmem:[%s241 + $0x38] sm:$0xf]
        %v261 = vld [vmem:[%s241 + $0x3c] sm:$0xf]
        %v262 = vld [vmem:[%s241 + $0x40] sm:$0xf]
        %v263 = vld [vmem:[%s241 + $0x44] sm:$0xf]
        %v264 = vld [vmem:[%s241 + $0x48] sm:$0xf]
        %v265 = vld [vmem:[%s241 + $0x4c] sm:$0xf]
        %v266 = vld [vmem:[%s241 + $0x50] sm:$0xf]
        %v267 = vld [vmem:[%s241 + $0x54] sm:$0xf]
        %v268 = vld [vmem:[%s241 + $0x58] sm:$0xf]
        %v269 = vld [vmem:[%s241 + $0x5c] sm:$0xf]
        %v270 = vld [vmem:[%s241 + $0x60] sm:$0xf]
        %v271 = vld [vmem:[%s241 + $0x64] sm:$0xf]
        %v272 = vld [vmem:[%s241 + $0x68] sm:$0xf]
        %v273 = vld [vmem:[%s241 + $0x6c] sm:$0xf]
        %v274 = vld [vmem:[%s241 + $0x70] sm:$0xf]
        %v275 = vld [vmem:[%s241 + $0x74] sm:$0xf]
        %v276 = vld [vmem:[%s204] sm:$0xf]
        %v277 = vld [vmem:[%s204 + $0x4] sm:$0xf]
        %v278 = vld [vmem:[%s204 + $0x8] sm:$0xf]
        %v279 = vld [vmem:[%s204 + $0xc] sm:$0xf]
        %v280 = vld [vmem:[%s204 + $0x10] sm:$0xf]
        %v281 = vld [vmem:[%s204 + $0x14] sm:$0xf]
        %v282 = vld [vmem:[%s204 + $0x18] sm:$0xf]
        %v283 = vld [vmem:[%s204 + $0x1c] sm:$0xf]
        %v284 = vld [vmem:[%s204 + $0x20] sm:$0xf]
        %v285 = vld [vmem:[%s204 + $0x24] sm:$0xf]
        %v286 = vld [vmem:[%s204 + $0x28] sm:$0xf]
        %v287 = vld [vmem:[%s204 + $0x2c] sm:$0xf]
        %v288 = vld [vmem:[%s204 + $0x30] sm:$0xf]
        %v289 = vld [vmem:[%s204 + $0x34] sm:$0xf]
        %v290 = vld [vmem:[%s204 + $0x38] sm:$0xf]
        %v291 = vld [vmem:[%s204 + $0x3c] sm:$0xf]
        %v292 = vld [vmem:[%s204 + $0x40] sm:$0xf]
        %v293 = vld [vmem:[%s204 + $0x44] sm:$0xf]
        %v294 = vld [vmem:[%s204 + $0x48] sm:$0xf]
        %v295 = vld [vmem:[%s204 + $0x4c] sm:$0xf]
        %v296 = vld [vmem:[%s204 + $0x50] sm:$0xf]
        %v297 = vld [vmem:[%s204 + $0x54] sm:$0xf]
        %v298 = vld [vmem:[%s204 + $0x58] sm:$0xf]
        %v299 = vld [vmem:[%s204 + $0x5c] sm:$0xf]
        %v300 = vld [vmem:[%s204 + $0x60] sm:$0xf]
        %v301 = vld [vmem:[%s204 + $0x64] sm:$0xf]
        %v302 = vld [vmem:[%s204 + $0x68] sm:$0xf]
        %v303 = vld [vmem:[%s204 + $0x6c] sm:$0xf]
        %v304 = vld [vmem:[%s204 + $0x70] sm:$0xf]
        %v305 = vld [vmem:[%s204 + $0x74] sm:$0xf]
        %v306 = vunpack.c.l.bf16 %v246
        %v307 = vunpack.c.l.bf16 %v247
        %v308 = vunpack.c.l.bf16 %v248
        %v309 = vunpack.c.l.bf16 %v249
        %v310 = vunpack.c.l.bf16 %v250
        %v311 = vunpack.c.l.bf16 %v251
        %v312 = vunpack.c.l.bf16 %v252
        %v313 = vunpack.c.l.bf16 %v253
        %v314 = vunpack.c.l.bf16 %v254
        %v315 = vunpack.c.l.bf16 %v255
        %v316 = vunpack.c.l.bf16 %v256
        %v317 = vunpack.c.l.bf16 %v257
        %v318 = vunpack.c.l.bf16 %v258
        %v319 = vunpack.c.l.bf16 %v259
        %v320 = vunpack.c.l.bf16 %v260
        %v321 = vunpack.c.l.bf16 %v261
        %v322 = vunpack.c.l.bf16 %v262
        %v323 = vunpack.c.l.bf16 %v263
        %v324 = vunpack.c.l.bf16 %v264
        %v325 = vunpack.c.l.bf16 %v265
        %v326 = vunpack.c.l.bf16 %v266
        %v327 = vunpack.c.l.bf16 %v267
        %v328 = vunpack.c.l.bf16 %v268
        %v329 = vunpack.c.l.bf16 %v269
        %v330 = vunpack.c.l.bf16 %v270
        %v331 = vunpack.c.l.bf16 %v271
        %v332 = vunpack.c.l.bf16 %v272
        %v333 = vunpack.c.l.bf16 %v273
        %v334 = vunpack.c.l.bf16 %v274
        %v335 = vunpack.c.l.bf16 %v275
        %vm336 = vcmask 130048
        %v337 = vsel %vm336, %v306, 0.0
        %338 = vadd.xlane.f32.xlu0 %v337
        %v339 = vpop.xlane.xlu0 %338
        %v340 = vsel %vm336, %v307, 0.0
        %341 = vadd.xlane.f32.xlu0 %v340
        %v342 = vpop.xlane.xlu0 %341
        %v343 = vsel %vm336, %v308, 0.0
        %344 = vadd.xlane.f32.xlu0 %v343
        %v345 = vpop.xlane.xlu0 %344
        %v346 = vsel %vm336, %v309, 0.0
        %347 = vadd.xlane.f32.xlu0 %v346
        %v348 = vpop.xlane.xlu0 %347
        %v349 = vsel %vm336, %v310, 0.0
        %350 = vadd.xlane.f32.xlu0 %v349
        %v351 = vpop.xlane.xlu0 %350
        %v352 = vsel %vm336, %v311, 0.0
        %353 = vadd.xlane.f32.xlu0 %v352
        %v354 = vpop.xlane.xlu0 %353
        %v355 = vsel %vm336, %v312, 0.0
        %356 = vadd.xlane.f32.xlu0 %v355
        %v357 = vpop.xlane.xlu0 %356
        %v358 = vsel %vm336, %v313, 0.0
        %359 = vadd.xlane.f32.xlu0 %v358
        %v360 = vpop.xlane.xlu0 %359
        %v361 = vsel %vm336, %v314, 0.0
        %362 = vadd.xlane.f32.xlu0 %v361
        %v363 = vpop.xlane.xlu0 %362
        %v364 = vsel %vm336, %v315, 0.0
        %365 = vadd.xlane.f32.xlu0 %v364
        %v366 = vpop.xlane.xlu0 %365
        %v367 = vsel %vm336, %v316, 0.0
        %368 = vadd.xlane.f32.xlu0 %v367
        %v369 = vpop.xlane.xlu0 %368
        %v370 = vsel %vm336, %v317, 0.0
        %371 = vadd.xlane.f32.xlu0 %v370
        %v372 = vpop.xlane.xlu0 %371
        %v373 = vsel %vm336, %v318, 0.0
        %374 = vadd.xlane.f32.xlu0 %v373
        %v375 = vpop.xlane.xlu0 %374
        %v376 = vsel %vm336, %v319, 0.0
        %377 = vadd.xlane.f32.xlu0 %v376
        %v378 = vpop.xlane.xlu0 %377
        %v379 = vsel %vm336, %v320, 0.0
        %380 = vadd.xlane.f32.xlu0 %v379
        %v381 = vpop.xlane.xlu0 %380
        %v382 = vsel %vm336, %v321, 0.0
        %383 = vadd.xlane.f32.xlu0 %v382
        %v384 = vpop.xlane.xlu0 %383
        %v385 = vsel %vm336, %v322, 0.0
        %386 = vadd.xlane.f32.xlu0 %v385
        %v387 = vpop.xlane.xlu0 %386
        %v388 = vsel %vm336, %v323, 0.0
        %389 = vadd.xlane.f32.xlu0 %v388
        %v390 = vpop.xlane.xlu0 %389
        %v391 = vsel %vm336, %v324, 0.0
        %392 = vadd.xlane.f32.xlu0 %v391
        %v393 = vpop.xlane.xlu0 %392
        %v394 = vsel %vm336, %v325, 0.0
        %395 = vadd.xlane.f32.xlu0 %v394
        %v396 = vpop.xlane.xlu0 %395
        %v397 = vsel %vm336, %v326, 0.0
        %398 = vadd.xlane.f32.xlu0 %v397
        %v399 = vpop.xlane.xlu0 %398
        %v400 = vsel %vm336, %v327, 0.0
        %401 = vadd.xlane.f32.xlu0 %v400
        %v402 = vpop.xlane.xlu0 %401
        %v403 = vsel %vm336, %v328, 0.0
        %404 = vadd.xlane.f32.xlu0 %v403
        %v405 = vpop.xlane.xlu0 %404
        %v406 = vsel %vm336, %v329, 0.0
        %407 = vadd.xlane.f32.xlu0 %v406
        %v408 = vpop.xlane.xlu0 %407
        %v409 = vsel %vm336, %v330, 0.0
        %410 = vadd.xlane.f32.xlu0 %v409
        %v411 = vpop.xlane.xlu0 %410
        %v412 = vsel %vm336, %v331, 0.0
        %413 = vadd.xlane.f32.xlu0 %v412
        %v414 = vpop.xlane.xlu0 %413
        %v415 = vsel %vm336, %v332, 0.0
        %416 = vadd.xlane.f32.xlu0 %v415
        %v417 = vpop.xlane.xlu0 %416
        %v418 = vsel %vm336, %v333, 0.0
        %419 = vadd.xlane.f32.xlu0 %v418
        %v420 = vpop.xlane.xlu0 %419
        %v421 = vsel %vm336, %v334, 0.0
        %422 = vadd.xlane.f32.xlu0 %v421
        %v423 = vpop.xlane.xlu0 %422
        %v424 = vsel %vm336, %v335, 0.0
        %425 = vadd.xlane.f32.xlu0 %v424
        %v426 = vpop.xlane.xlu0 %425
        %vm427 = vcmp.gt.f32.partialorder %v339, 0.0
        %vm428 = vcmp.gt.f32.partialorder %v342, 0.0
        %vm429 = vcmp.gt.f32.partialorder %v345, 0.0
        %vm430 = vcmp.gt.f32.partialorder %v348, 0.0
        %vm431 = vcmp.gt.f32.partialorder %v351, 0.0
        %vm432 = vcmp.gt.f32.partialorder %v354, 0.0
        %vm433 = vcmp.gt.f32.partialorder %v357, 0.0
        %vm434 = vcmp.gt.f32.partialorder %v360, 0.0
        %vm435 = vcmp.gt.f32.partialorder %v363, 0.0
        %vm436 = vcmp.gt.f32.partialorder %v366, 0.0
        %vm437 = vcmp.gt.f32.partialorder %v369, 0.0
        %vm438 = vcmp.gt.f32.partialorder %v372, 0.0
        %vm439 = vcmp.gt.f32.partialorder %v375, 0.0
        %vm440 = vcmp.gt.f32.partialorder %v378, 0.0
        %vm441 = vcmp.gt.f32.partialorder %v381, 0.0
        %vm442 = vcmp.gt.f32.partialorder %v384, 0.0
        %vm443 = vcmp.gt.f32.partialorder %v387, 0.0
        %vm444 = vcmp.gt.f32.partialorder %v390, 0.0
        %vm445 = vcmp.gt.f32.partialorder %v393, 0.0
        %vm446 = vcmp.gt.f32.partialorder %v396, 0.0
        %vm447 = vcmp.gt.f32.partialorder %v399, 0.0
        %vm448 = vcmp.gt.f32.partialorder %v402, 0.0
        %vm449 = vcmp.gt.f32.partialorder %v405, 0.0
        %vm450 = vcmp.gt.f32.partialorder %v408, 0.0
        %vm451 = vcmp.gt.f32.partialorder %v411, 0.0
        %vm452 = vcmp.gt.f32.partialorder %v414, 0.0
        %vm453 = vcmp.gt.f32.partialorder %v417, 0.0
        %vm454 = vcmp.gt.f32.partialorder %v420, 0.0
        %vm455 = vcmp.gt.f32.partialorder %v423, 0.0
        %vm456 = vcmp.gt.f32.partialorder %v426, 0.0
        %v457 = vrsqrt.pop %v339
        %v458 = vmul.f32 %v457, %v339
        %v459 = vmul.f32 %v458, %v457
        %v460 = vmul.f32 0.5, %v459
        %v461 = vsub.f32 1.5, %v460
        %v462 = vmul.f32 %v457, %v461
        %vm463 = vweird.f32 %v339
        %vm464 = vweird.f32 %v457
        %vm465 = vmor %vm463, %vm464
        %v466 = vsel %vm465, %v457, %v462
        %v467 = vrsqrt.pop %v342
        %v468 = vmul.f32 %v467, %v342
        %v469 = vmul.f32 %v468, %v467
        %v470 = vmul.f32 0.5, %v469
        %v471 = vsub.f32 1.5, %v470
        %v472 = vmul.f32 %v467, %v471
        %vm473 = vweird.f32 %v342
        %vm474 = vweird.f32 %v467
        %vm475 = vmor %vm473, %vm474
        %v476 = vsel %vm475, %v467, %v472
        %v477 = vrsqrt.pop %v345
        %v478 = vmul.f32 %v477, %v345
        %v479 = vmul.f32 %v478, %v477
        %v480 = vmul.f32 0.5, %v479
        %v481 = vsub.f32 1.5, %v480
        %v482 = vmul.f32 %v477, %v481
        %vm483 = vweird.f32 %v345
        %vm484 = vweird.f32 %v477
        %vm485 = vmor %vm483, %vm484
        %v486 = vsel %vm485, %v477, %v482
        %v487 = vrsqrt.pop %v348
        %v488 = vmul.f32 %v487, %v348
        %v489 = vmul.f32 %v488, %v487
        %v490 = vmul.f32 0.5, %v489
        %v491 = vsub.f32 1.5, %v490
        %v492 = vmul.f32 %v487, %v491
        %vm493 = vweird.f32 %v348
        %vm494 = vweird.f32 %v487
        %vm495 = vmor %vm493, %vm494
        %v496 = vsel %vm495, %v487, %v492
        %v497 = vrsqrt.pop %v351
        %v498 = vmul.f32 %v497, %v351
        %v499 = vmul.f32 %v498, %v497
        %v500 = vmul.f32 0.5, %v499
        %v501 = vsub.f32 1.5, %v500
        %v502 = vmul.f32 %v497, %v501
        %vm503 = vweird.f32 %v351
        %vm504 = vweird.f32 %v497
        %vm505 = vmor %vm503, %vm504
        %v506 = vsel %vm505, %v497, %v502
        %v507 = vrsqrt.pop %v354
        %v508 = vmul.f32 %v507, %v354
        %v509 = vmul.f32 %v508, %v507
        %v510 = vmul.f32 0.5, %v509
        %v511 = vsub.f32 1.5, %v510
        %v512 = vmul.f32 %v507, %v511
        %vm513 = vweird.f32 %v354
        %vm514 = vweird.f32 %v507
        %vm515 = vmor %vm513, %vm514
        %v516 = vsel %vm515, %v507, %v512
        %v517 = vrsqrt.pop %v357
        %v518 = vmul.f32 %v517, %v357
        %v519 = vmul.f32 %v518, %v517
        %v520 = vmul.f32 0.5, %v519
        %v521 = vsub.f32 1.5, %v520
        %v522 = vmul.f32 %v517, %v521
        %vm523 = vweird.f32 %v357
        %vm524 = vweird.f32 %v517
        %vm525 = vmor %vm523, %vm524
        %v526 = vsel %vm525, %v517, %v522
        %v527 = vrsqrt.pop %v360
        %v528 = vmul.f32 %v527, %v360
        %v529 = vmul.f32 %v528, %v527
        %v530 = vmul.f32 0.5, %v529
        %v531 = vsub.f32 1.5, %v530
        %v532 = vmul.f32 %v527, %v531
        %vm533 = vweird.f32 %v360
        %vm534 = vweird.f32 %v527
        %vm535 = vmor %vm533, %vm534
        %v536 = vsel %vm535, %v527, %v532
        %v537 = vrsqrt.pop %v363
        %v538 = vmul.f32 %v537, %v363
        %v539 = vmul.f32 %v538, %v537
        %v540 = vmul.f32 0.5, %v539
        %v541 = vsub.f32 1.5, %v540
        %v542 = vmul.f32 %v537, %v541
        %vm543 = vweird.f32 %v363
        %vm544 = vweird.f32 %v537
        %vm545 = vmor %vm543, %vm544
        %v546 = vsel %vm545, %v537, %v542
        %v547 = vrsqrt.pop %v366
        %v548 = vmul.f32 %v547, %v366
        %v549 = vmul.f32 %v548, %v547
        %v550 = vmul.f32 0.5, %v549
        %v551 = vsub.f32 1.5, %v550
        %v552 = vmul.f32 %v547, %v551
        %vm553 = vweird.f32 %v366
        %vm554 = vweird.f32 %v547
        %vm555 = vmor %vm553, %vm554
        %v556 = vsel %vm555, %v547, %v552
        %v557 = vrsqrt.pop %v369
        %v558 = vmul.f32 %v557, %v369
        %v559 = vmul.f32 %v558, %v557
        %v560 = vmul.f32 0.5, %v559
        %v561 = vsub.f32 1.5, %v560
        %v562 = vmul.f32 %v557, %v561
        %vm563 = vweird.f32 %v369
        %vm564 = vweird.f32 %v557
        %vm565 = vmor %vm563, %vm564
        %v566 = vsel %vm565, %v557, %v562
        %v567 = vrsqrt.pop %v372
        %v568 = vmul.f32 %v567, %v372
        %v569 = vmul.f32 %v568, %v567
        %v570 = vmul.f32 0.5, %v569
        %v571 = vsub.f32 1.5, %v570
        %v572 = vmul.f32 %v567, %v571
        %vm573 = vweird.f32 %v372
        %vm574 = vweird.f32 %v567
        %vm575 = vmor %vm573, %vm574
        %v576 = vsel %vm575, %v567, %v572
        %v577 = vrsqrt.pop %v375
        %v578 = vmul.f32 %v577, %v375
        %v579 = vmul.f32 %v578, %v577
        %v580 = vmul.f32 0.5, %v579
        %v581 = vsub.f32 1.5, %v580
        %v582 = vmul.f32 %v577, %v581
        %vm583 = vweird.f32 %v375
        %vm584 = vweird.f32 %v577
        %vm585 = vmor %vm583, %vm584
        %v586 = vsel %vm585, %v577, %v582
        %v587 = vrsqrt.pop %v378
        %v588 = vmul.f32 %v587, %v378
        %v589 = vmul.f32 %v588, %v587
        %v590 = vmul.f32 0.5, %v589
        %v591 = vsub.f32 1.5, %v590
        %v592 = vmul.f32 %v587, %v591
        %vm593 = vweird.f32 %v378
        %vm594 = vweird.f32 %v587
        %vm595 = vmor %vm593, %vm594
        %v596 = vsel %vm595, %v587, %v592
        %v597 = vrsqrt.pop %v381
        %v598 = vmul.f32 %v597, %v381
        %v599 = vmul.f32 %v598, %v597
        %v600 = vmul.f32 0.5, %v599
        %v601 = vsub.f32 1.5, %v600
        %v602 = vmul.f32 %v597, %v601
        %vm603 = vweird.f32 %v381
        %vm604 = vweird.f32 %v597
        %vm605 = vmor %vm603, %vm604
        %v606 = vsel %vm605, %v597, %v602
        %v607 = vrsqrt.pop %v384
        %v608 = vmul.f32 %v607, %v384
        %v609 = vmul.f32 %v608, %v607
        %v610 = vmul.f32 0.5, %v609
        %v611 = vsub.f32 1.5, %v610
        %v612 = vmul.f32 %v607, %v611
        %vm613 = vweird.f32 %v384
        %vm614 = vweird.f32 %v607
        %vm615 = vmor %vm613, %vm614
        %v616 = vsel %vm615, %v607, %v612
        %v617 = vrsqrt.pop %v387
        %v618 = vmul.f32 %v617, %v387
        %v619 = vmul.f32 %v618, %v617
        %v620 = vmul.f32 0.5, %v619
        %v621 = vsub.f32 1.5, %v620
        %v622 = vmul.f32 %v617, %v621
        %vm623 = vweird.f32 %v387
        %vm624 = vweird.f32 %v617
        %vm625 = vmor %vm623, %vm624
        %v626 = vsel %vm625, %v617, %v622
        %v627 = vrsqrt.pop %v390
        %v628 = vmul.f32 %v627, %v390
        %v629 = vmul.f32 %v628, %v627
        %v630 = vmul.f32 0.5, %v629
        %v631 = vsub.f32 1.5, %v630
        %v632 = vmul.f32 %v627, %v631
        %vm633 = vweird.f32 %v390
        %vm634 = vweird.f32 %v627
        %vm635 = vmor %vm633, %vm634
        %v636 = vsel %vm635, %v627, %v632
        %v637 = vrsqrt.pop %v393
        %v638 = vmul.f32 %v637, %v393
        %v639 = vmul.f32 %v638, %v637
        %v640 = vmul.f32 0.5, %v639
        %v641 = vsub.f32 1.5, %v640
        %v642 = vmul.f32 %v637, %v641
        %vm643 = vweird.f32 %v393
        %vm644 = vweird.f32 %v637
        %vm645 = vmor %vm643, %vm644
        %v646 = vsel %vm645, %v637, %v642
        %v647 = vrsqrt.pop %v396
        %v648 = vmul.f32 %v647, %v396
        %v649 = vmul.f32 %v648, %v647
        %v650 = vmul.f32 0.5, %v649
        %v651 = vsub.f32 1.5, %v650
        %v652 = vmul.f32 %v647, %v651
        %vm653 = vweird.f32 %v396
        %vm654 = vweird.f32 %v647
        %vm655 = vmor %vm653, %vm654
        %v656 = vsel %vm655, %v647, %v652
        %v657 = vrsqrt.pop %v399
        %v658 = vmul.f32 %v657, %v399
        %v659 = vmul.f32 %v658, %v657
        %v660 = vmul.f32 0.5, %v659
        %v661 = vsub.f32 1.5, %v660
        %v662 = vmul.f32 %v657, %v661
        %vm663 = vweird.f32 %v399
        %vm664 = vweird.f32 %v657
        %vm665 = vmor %vm663, %vm664
        %v666 = vsel %vm665, %v657, %v662
        %v667 = vrsqrt.pop %v402
        %v668 = vmul.f32 %v667, %v402
        %v669 = vmul.f32 %v668, %v667
        %v670 = vmul.f32 0.5, %v669
        %v671 = vsub.f32 1.5, %v670
        %v672 = vmul.f32 %v667, %v671
        %vm673 = vweird.f32 %v402
        %vm674 = vweird.f32 %v667
        %vm675 = vmor %vm673, %vm674
        %v676 = vsel %vm675, %v667, %v672
        %v677 = vrsqrt.pop %v405
        %v678 = vmul.f32 %v677, %v405
        %v679 = vmul.f32 %v678, %v677
        %v680 = vmul.f32 0.5, %v679
        %v681 = vsub.f32 1.5, %v680
        %v682 = vmul.f32 %v677, %v681
        %vm683 = vweird.f32 %v405
        %vm684 = vweird.f32 %v677
        %vm685 = vmor %vm683, %vm684
        %v686 = vsel %vm685, %v677, %v682
        %v687 = vrsqrt.pop %v408
        %v688 = vmul.f32 %v687, %v408
        %v689 = vmul.f32 %v688, %v687
        %v690 = vmul.f32 0.5, %v689
        %v691 = vsub.f32 1.5, %v690
        %v692 = vmul.f32 %v687, %v691
        %vm693 = vweird.f32 %v408
        %vm694 = vweird.f32 %v687
        %vm695 = vmor %vm693, %vm694
        %v696 = vsel %vm695, %v687, %v692
        %v697 = vrsqrt.pop %v411
        %v698 = vmul.f32 %v697, %v411
        %v699 = vmul.f32 %v698, %v697
        %v700 = vmul.f32 0.5, %v699
        %v701 = vsub.f32 1.5, %v700
        %v702 = vmul.f32 %v697, %v701
        %vm703 = vweird.f32 %v411
        %vm704 = vweird.f32 %v697
        %vm705 = vmor %vm703, %vm704
        %v706 = vsel %vm705, %v697, %v702
        %v707 = vrsqrt.pop %v414
        %v708 = vmul.f32 %v707, %v414
        %v709 = vmul.f32 %v708, %v707
        %v710 = vmul.f32 0.5, %v709
        %v711 = vsub.f32 1.5, %v710
        %v712 = vmul.f32 %v707, %v711
        %vm713 = vweird.f32 %v414
        %vm714 = vweird.f32 %v707
        %vm715 = vmor %vm713, %vm714
        %v716 = vsel %vm715, %v707, %v712
        %v717 = vrsqrt.pop %v417
        %v718 = vmul.f32 %v717, %v417
        %v719 = vmul.f32 %v718, %v717
        %v720 = vmul.f32 0.5, %v719
        %v721 = vsub.f32 1.5, %v720
        %v722 = vmul.f32 %v717, %v721
        %vm723 = vweird.f32 %v417
        %vm724 = vweird.f32 %v717
        %vm725 = vmor %vm723, %vm724
        %v726 = vsel %vm725, %v717, %v722
        %v727 = vrsqrt.pop %v420
        %v728 = vmul.f32 %v727, %v420
        %v729 = vmul.f32 %v728, %v727
        %v730 = vmul.f32 0.5, %v729
        %v731 = vsub.f32 1.5, %v730
        %v732 = vmul.f32 %v727, %v731
        %vm733 = vweird.f32 %v420
        %vm734 = vweird.f32 %v727
        %vm735 = vmor %vm733, %vm734
        %v736 = vsel %vm735, %v727, %v732
        %v737 = vrsqrt.pop %v423
        %v738 = vmul.f32 %v737, %v423
        %v739 = vmul.f32 %v738, %v737
        %v740 = vmul.f32 0.5, %v739
        %v741 = vsub.f32 1.5, %v740
        %v742 = vmul.f32 %v737, %v741
        %vm743 = vweird.f32 %v423
        %vm744 = vweird.f32 %v737
        %vm745 = vmor %vm743, %vm744
        %v746 = vsel %vm745, %v737, %v742
        %v747 = vrsqrt.pop %v426
        %v748 = vmul.f32 %v747, %v426
        %v749 = vmul.f32 %v748, %v747
        %v750 = vmul.f32 0.5, %v749
        %v751 = vsub.f32 1.5, %v750
        %v752 = vmul.f32 %v747, %v751
        %vm753 = vweird.f32 %v426
        %vm754 = vweird.f32 %v747
        %vm755 = vmor %vm753, %vm754
        %v756 = vsel %vm755, %v747, %v752
        %v757 = vsel %vm427, %v466, 0.0
        %v758 = vsel %vm428, %v476, 0.0
        %v759 = vsel %vm429, %v486, 0.0
        %v760 = vsel %vm430, %v496, 0.0
        %v761 = vsel %vm431, %v506, 0.0
        %v762 = vsel %vm432, %v516, 0.0
        %v763 = vsel %vm433, %v526, 0.0
        %v764 = vsel %vm434, %v536, 0.0
        %v765 = vsel %vm435, %v546, 0.0
        %v766 = vsel %vm436, %v556, 0.0
        %v767 = vsel %vm437, %v566, 0.0
        %v768 = vsel %vm438, %v576, 0.0
        %v769 = vsel %vm439, %v586, 0.0
        %v770 = vsel %vm440, %v596, 0.0
        %v771 = vsel %vm441, %v606, 0.0
        %v772 = vsel %vm442, %v616, 0.0
        %v773 = vsel %vm443, %v626, 0.0
        %v774 = vsel %vm444, %v636, 0.0
        %v775 = vsel %vm445, %v646, 0.0
        %v776 = vsel %vm446, %v656, 0.0
        %v777 = vsel %vm447, %v666, 0.0
        %v778 = vsel %vm448, %v676, 0.0
        %v779 = vsel %vm449, %v686, 0.0
        %v780 = vsel %vm450, %v696, 0.0
        %v781 = vsel %vm451, %v706, 0.0
        %v782 = vsel %vm452, %v716, 0.0
        %v783 = vsel %vm453, %v726, 0.0
        %v784 = vsel %vm454, %v736, 0.0
        %v785 = vsel %vm455, %v746, 0.0
        %v786 = vsel %vm456, %v756, 0.0
        %v787 = vld [vmem:[%s2] sm:$0xf]
        %v788 = vld [vmem:[%s2 + $0x4] sm:$0xf]
        %v789 = vld [vmem:[%s2 + $0x8] sm:$0xf]
        %v790 = vld [vmem:[%s2 + $0xc] sm:$0xf]
        %v791 = vld [vmem:[%s2 + $0x10] sm:$0xf]
        %v792 = vld [vmem:[%s2 + $0x14] sm:$0xf]
        %v793 = vld [vmem:[%s2 + $0x18] sm:$0xf]
        %v794 = vld [vmem:[%s2 + $0x1c] sm:$0xf]
        %v795 = vld [vmem:[%s2 + $0x20] sm:$0xf]
        %v796 = vld [vmem:[%s2 + $0x24] sm:$0xf]
        %v797 = vld [vmem:[%s2 + $0x28] sm:$0xf]
        %v798 = vld [vmem:[%s2 + $0x2c] sm:$0xf]
        %v799 = vld [vmem:[%s2 + $0x30] sm:$0xf]
        %v800 = vld [vmem:[%s2 + $0x34] sm:$0xf]
        %v801 = vld [vmem:[%s2 + $0x38] sm:$0xf]
        %v802 = vld [vmem:[%s2 + $0x3c] sm:$0xf]
        %s803 = scalar_lea.vmem %s2, 64
        %v804 = vld [vmem:[%s803] sm:$0xf]
        %v805 = vld [vmem:[%s803 + $0x4] sm:$0xf]
        %v806 = vld [vmem:[%s803 + $0x8] sm:$0xf]
        %v807 = vld [vmem:[%s803 + $0xc] sm:$0xf]
        %v808 = vld [vmem:[%s803 + $0x10] sm:$0xf]
        %v809 = vld [vmem:[%s803 + $0x14] sm:$0xf]
        %v810 = vld [vmem:[%s803 + $0x18] sm:$0xf]
        %v811 = vld [vmem:[%s803 + $0x1c] sm:$0xf]
        %v812 = vld [vmem:[%s803 + $0x20] sm:$0xf]
        %v813 = vld [vmem:[%s803 + $0x24] sm:$0xf]
        %v814 = vld [vmem:[%s803 + $0x28] sm:$0xf]
        %v815 = vld [vmem:[%s803 + $0x2c] sm:$0xf]
        %v816 = vld [vmem:[%s803 + $0x30] sm:$0xf]
        %v817 = vld [vmem:[%s803 + $0x34] sm:$0xf]
        %v818 = vld [vmem:[%s803 + $0x38] sm:$0xf]
        %v819 = vld [vmem:[%s803 + $0x3c] sm:$0xf]
        %s820 = scalar_lea.vmem %s2, 128
        %v821 = vld [vmem:[%s820] sm:$0xf]
        %v822 = vld [vmem:[%s820 + $0x4] sm:$0xf]
        %v823 = vld [vmem:[%s820 + $0x8] sm:$0xf]
        %v824 = vld [vmem:[%s820 + $0xc] sm:$0xf]
        %v825 = vld [vmem:[%s820 + $0x10] sm:$0xf]
        %v826 = vld [vmem:[%s820 + $0x14] sm:$0xf]
        %v827 = vld [vmem:[%s820 + $0x18] sm:$0xf]
        %v828 = vld [vmem:[%s820 + $0x1c] sm:$0xf]
        %v829 = vld [vmem:[%s820 + $0x20] sm:$0xf]
        %v830 = vld [vmem:[%s820 + $0x24] sm:$0xf]
        %v831 = vld [vmem:[%s820 + $0x28] sm:$0xf]
        %v832 = vld [vmem:[%s820 + $0x2c] sm:$0xf]
        %v833 = vld [vmem:[%s820 + $0x30] sm:$0xf]
        %v834 = vld [vmem:[%s820 + $0x34] sm:$0xf]
        %v835 = vld [vmem:[%s820 + $0x38] sm:$0xf]
        %v836 = vld [vmem:[%s820 + $0x3c] sm:$0xf]
        %s837 = scalar_lea.vmem %s2, 192
        %v838 = vld [vmem:[%s837] sm:$0xf]
        %v839 = vld [vmem:[%s837 + $0x4] sm:$0xf]
        %v840 = vld [vmem:[%s837 + $0x8] sm:$0xf]
        %v841 = vld [vmem:[%s837 + $0xc] sm:$0xf]
        %v842 = vld [vmem:[%s837 + $0x10] sm:$0xf]
        %v843 = vld [vmem:[%s837 + $0x14] sm:$0xf]
        %v844 = vld [vmem:[%s837 + $0x18] sm:$0xf]
        %v845 = vld [vmem:[%s837 + $0x1c] sm:$0xf]
        %v846 = vld [vmem:[%s837 + $0x20] sm:$0xf]
        %v847 = vld [vmem:[%s837 + $0x24] sm:$0xf]
        %v848 = vld [vmem:[%s837 + $0x28] sm:$0xf]
        %v849 = vld [vmem:[%s837 + $0x2c] sm:$0xf]
        %v850 = vld [vmem:[%s837 + $0x30] sm:$0xf]
        %v851 = vld [vmem:[%s837 + $0x34] sm:$0xf]
        %v852 = vld [vmem:[%s837 + $0x38] sm:$0xf]
        %v853 = vld [vmem:[%s837 + $0x3c] sm:$0xf]
        %v854 = vld [vmem:[%s3] sm:$0x1]
        %v855 = vld [vmem:[%s3 + $0x1] sm:$0x1]
        %v856 = vld [vmem:[%s3 + $0x2] sm:$0x1]
        %v857 = vunpack.c.l.bf16 %v276
        %v858 = vunpack.c.l.bf16 %v277
        %v859 = vunpack.c.l.bf16 %v278
        %v860 = vunpack.c.l.bf16 %v279
        %v861 = vunpack.c.l.bf16 %v280
        %v862 = vunpack.c.l.bf16 %v281
        %v863 = vunpack.c.l.bf16 %v282
        %v864 = vunpack.c.l.bf16 %v283
        %v865 = vunpack.c.l.bf16 %v284
        %v866 = vunpack.c.l.bf16 %v285
        %v867 = vunpack.c.l.bf16 %v286
        %v868 = vunpack.c.l.bf16 %v287
        %v869 = vunpack.c.l.bf16 %v288
        %v870 = vunpack.c.l.bf16 %v289
        %v871 = vunpack.c.l.bf16 %v290
        %v872 = vunpack.c.l.bf16 %v291
        %v873 = vunpack.c.l.bf16 %v292
        %v874 = vunpack.c.l.bf16 %v293
        %v875 = vunpack.c.l.bf16 %v294
        %v876 = vunpack.c.l.bf16 %v295
        %v877 = vunpack.c.l.bf16 %v296
        %v878 = vunpack.c.l.bf16 %v297
        %v879 = vunpack.c.l.bf16 %v298
        %v880 = vunpack.c.l.bf16 %v299
        %v881 = vunpack.c.l.bf16 %v300
        %v882 = vunpack.c.l.bf16 %v301
        %v883 = vunpack.c.l.bf16 %v302
        %v884 = vunpack.c.l.bf16 %v303
        %v885 = vunpack.c.l.bf16 %v304
        %v886 = vunpack.c.l.bf16 %v305
        %v887 = vmul.f32 %v757, %v857
        %v888 = vmul.f32 %v758, %v858
        %v889 = vmul.f32 %v759, %v859
        %v890 = vmul.f32 %v760, %v860
        %v891 = vmul.f32 %v761, %v861
        %v892 = vmul.f32 %v762, %v862
        %v893 = vmul.f32 %v763, %v863
        %v894 = vmul.f32 %v764, %v864
        %v895 = vmul.f32 %v765, %v865
        %v896 = vmul.f32 %v766, %v866
        %v897 = vmul.f32 %v767, %v867
        %v898 = vmul.f32 %v768, %v868
        %v899 = vmul.f32 %v769, %v869
        %v900 = vmul.f32 %v770, %v870
        %v901 = vmul.f32 %v771, %v871
        %v902 = vmul.f32 %v772, %v872
        %v903 = vmul.f32 %v773, %v873
        %v904 = vmul.f32 %v774, %v874
        %v905 = vmul.f32 %v775, %v875
        %v906 = vmul.f32 %v776, %v876
        %v907 = vmul.f32 %v777, %v877
        %v908 = vmul.f32 %v778, %v878
        %v909 = vmul.f32 %v779, %v879
        %v910 = vmul.f32 %v780, %v880
        %v911 = vmul.f32 %v781, %v881
        %v912 = vmul.f32 %v782, %v882
        %v913 = vmul.f32 %v783, %v883
        %v914 = vmul.f32 %v784, %v884
        %v915 = vmul.f32 %v785, %v885
        %v916 = vmul.f32 %v786, %v886
        %v917 = vpack.c.bf16 %v887, %v887
        %v918 = vpack.c.bf16 %v888, %v888
        %v919 = vpack.c.bf16 %v889, %v889
        %v920 = vpack.c.bf16 %v890, %v890
        %v921 = vpack.c.bf16 %v891, %v891
        %v922 = vpack.c.bf16 %v892, %v892
        %v923 = vpack.c.bf16 %v893, %v893
        %v924 = vpack.c.bf16 %v894, %v894
        %v925 = vpack.c.bf16 %v895, %v895
        %v926 = vpack.c.bf16 %v896, %v896
        %v927 = vpack.c.bf16 %v897, %v897
        %v928 = vpack.c.bf16 %v898, %v898
        %v929 = vpack.c.bf16 %v899, %v899
        %v930 = vpack.c.bf16 %v900, %v900
        %v931 = vpack.c.bf16 %v901, %v901
        %v932 = vpack.c.bf16 %v902, %v902
        %v933 = vpack.c.bf16 %v903, %v903
        %v934 = vpack.c.bf16 %v904, %v904
        %v935 = vpack.c.bf16 %v905, %v905
        %v936 = vpack.c.bf16 %v906, %v906
        %v937 = vpack.c.bf16 %v907, %v907
        %v938 = vpack.c.bf16 %v908, %v908
        %v939 = vpack.c.bf16 %v909, %v909
        %v940 = vpack.c.bf16 %v910, %v910
        %v941 = vpack.c.bf16 %v911, %v911
        %v942 = vpack.c.bf16 %v912, %v912
        %v943 = vpack.c.bf16 %v913, %v913
        %v944 = vpack.c.bf16 %v914, %v914
        %v945 = vpack.c.bf16 %v915, %v915
        %v946 = vpack.c.bf16 %v916, %v916
        %v949 = vunpack.c.l.b16 %v246
        %v950 = vunpack.c.l.b16 %v247
        %v951 = vpack.c.b16 %v950, %v949
        %v954 = vunpack.c.l.b16 %v917
        %v955 = vunpack.c.l.b16 %v918
        %v956 = vpack.c.b16 %v955, %v954
        %v959 = vsel %vm336, %v951, 0
        %961 = vmatpush.bf16.msra.mxu0 0
        %962 = vmatpush.bf16.msra.mxu0 0
        %963 = vmatpush.bf16.msra.mxu0 0
        %964 = vmatpush.bf16.msra.mxu0 0
        %965 = vmatpush.bf16.msra.mxu0 0
        %966 = vmatpush.bf16.msra.mxu0 0
        %967 = vmatpush.bf16.msra.mxu0 0
        %968 = vmatpush.bf16.msra.mxu0 %v956
        %969 = vmatmul.bf16.gmra.mxu0 %v959
        %v970 = vpop.f32.mrf.mxu0
        %v971 = vadd.f32 0.0, %v970
        %v972 = vpop.f32.mrf.mxu0
        %v973 = vadd.f32 0.0, %v972
        %974 = vdwg.mxu0
        %v977 = vunpack.c.l.b16 %v248
        %v978 = vunpack.c.l.b16 %v249
        %v979 = vpack.c.b16 %v978, %v977
        %v982 = vunpack.c.l.b16 %v919
        %v983 = vunpack.c.l.b16 %v920
        %v984 = vpack.c.b16 %v983, %v982
        %v987 = vsel %vm336, %v979, 0
        %989 = vmatpush.bf16.msra.mxu0 0
        %990 = vmatpush.bf16.msra.mxu0 0
        %991 = vmatpush.bf16.msra.mxu0 0
        %992 = vmatpush.bf16.msra.mxu0 0
        %993 = vmatpush.bf16.msra.mxu0 0
        %994 = vmatpush.bf16.msra.mxu0 0
        %995 = vmatpush.bf16.msra.mxu0 0
        %996 = vmatpush.bf16.msra.mxu0 %v984
        %997 = vmatmul.bf16.gmra.mxu0 %v987
        %v998 = vpop.f32.mrf.mxu0
        %v999 = vadd.f32 0.0, %v998
        %v1000 = vpop.f32.mrf.mxu0
        %v1001 = vadd.f32 0.0, %v1000
        %1002 = vdwg.mxu0
        %v1005 = vunpack.c.l.b16 %v250
        %v1006 = vunpack.c.l.b16 %v251
        %v1007 = vpack.c.b16 %v1006, %v1005
        %v1010 = vunpack.c.l.b16 %v921
        %v1011 = vunpack.c.l.b16 %v922
        %v1012 = vpack.c.b16 %v1011, %v1010
        %v1015 = vsel %vm336, %v1007, 0
        %1017 = vmatpush.bf16.msra.mxu0 0
        %1018 = vmatpush.bf16.msra.mxu0 0
        %1019 = vmatpush.bf16.msra.mxu0 0
        %1020 = vmatpush.bf16.msra.mxu0 0
        %1021 = vmatpush.bf16.msra.mxu0 0
        %1022 = vmatpush.bf16.msra.mxu0 0
        %1023 = vmatpush.bf16.msra.mxu0 0
        %1024 = vmatpush.bf16.msra.mxu0 %v1012
        %1025 = vmatmul.bf16.gmra.mxu0 %v1015
        %v1026 = vpop.f32.mrf.mxu0
        %v1027 = vadd.f32 0.0, %v1026
        %v1028 = vpop.f32.mrf.mxu0
        %v1029 = vadd.f32 0.0, %v1028
        %1030 = vdwg.mxu0
        %v1033 = vunpack.c.l.b16 %v252
        %v1034 = vunpack.c.l.b16 %v253
        %v1035 = vpack.c.b16 %v1034, %v1033
        %v1038 = vunpack.c.l.b16 %v923
        %v1039 = vunpack.c.l.b16 %v924
        %v1040 = vpack.c.b16 %v1039, %v1038
        %v1043 = vsel %vm336, %v1035, 0
        %1045 = vmatpush.bf16.msra.mxu0 0
        %1046 = vmatpush.bf16.msra.mxu0 0
        %1047 = vmatpush.bf16.msra.mxu0 0
        %1048 = vmatpush.bf16.msra.mxu0 0
        %1049 = vmatpush.bf16.msra.mxu0 0
        %1050 = vmatpush.bf16.msra.mxu0 0
        %1051 = vmatpush.bf16.msra.mxu0 0
        %1052 = vmatpush.bf16.msra.mxu0 %v1040
        %1053 = vmatmul.bf16.gmra.mxu0 %v1043
        %v1054 = vpop.f32.mrf.mxu0
        %v1055 = vadd.f32 0.0, %v1054
        %v1056 = vpop.f32.mrf.mxu0
        %v1057 = vadd.f32 0.0, %v1056
        %1058 = vdwg.mxu0
        %v1061 = vunpack.c.l.b16 %v254
        %v1062 = vunpack.c.l.b16 %v255
        %v1063 = vpack.c.b16 %v1062, %v1061
        %v1066 = vunpack.c.l.b16 %v925
        %v1067 = vunpack.c.l.b16 %v926
        %v1068 = vpack.c.b16 %v1067, %v1066
        %v1071 = vsel %vm336, %v1063, 0
        %1073 = vmatpush.bf16.msra.mxu0 0
        %1074 = vmatpush.bf16.msra.mxu0 0
        %1075 = vmatpush.bf16.msra.mxu0 0
        %1076 = vmatpush.bf16.msra.mxu0 0
        %1077 = vmatpush.bf16.msra.mxu0 0
        %1078 = vmatpush.bf16.msra.mxu0 0
        %1079 = vmatpush.bf16.msra.mxu0 0
        %1080 = vmatpush.bf16.msra.mxu0 %v1068
        %1081 = vmatmul.bf16.gmra.mxu0 %v1071
        %v1082 = vpop.f32.mrf.mxu0
        %v1083 = vadd.f32 0.0, %v1082
        %v1084 = vpop.f32.mrf.mxu0
        %v1085 = vadd.f32 0.0, %v1084
        %1086 = vdwg.mxu0
        %v1089 = vunpack.c.l.b16 %v256
        %v1090 = vunpack.c.l.b16 %v257
        %v1091 = vpack.c.b16 %v1090, %v1089
        %v1094 = vunpack.c.l.b16 %v927
        %v1095 = vunpack.c.l.b16 %v928
        %v1096 = vpack.c.b16 %v1095, %v1094
        %v1099 = vsel %vm336, %v1091, 0
        %1101 = vmatpush.bf16.msra.mxu0 0
        %1102 = vmatpush.bf16.msra.mxu0 0
        %1103 = vmatpush.bf16.msra.mxu0 0
        %1104 = vmatpush.bf16.msra.mxu0 0
        %1105 = vmatpush.bf16.msra.mxu0 0
        %1106 = vmatpush.bf16.msra.mxu0 0
        %1107 = vmatpush.bf16.msra.mxu0 0
        %1108 = vmatpush.bf16.msra.mxu0 %v1096
        %1109 = vmatmul.bf16.gmra.mxu0 %v1099
        %v1110 = vpop.f32.mrf.mxu0
        %v1111 = vadd.f32 0.0, %v1110
        %v1112 = vpop.f32.mrf.mxu0
        %v1113 = vadd.f32 0.0, %v1112
        %1114 = vdwg.mxu0
        %v1117 = vunpack.c.l.b16 %v258
        %v1118 = vunpack.c.l.b16 %v259
        %v1119 = vpack.c.b16 %v1118, %v1117
        %v1122 = vunpack.c.l.b16 %v929
        %v1123 = vunpack.c.l.b16 %v930
        %v1124 = vpack.c.b16 %v1123, %v1122
        %v1127 = vsel %vm336, %v1119, 0
        %1129 = vmatpush.bf16.msra.mxu0 0
        %1130 = vmatpush.bf16.msra.mxu0 0
        %1131 = vmatpush.bf16.msra.mxu0 0
        %1132 = vmatpush.bf16.msra.mxu0 0
        %1133 = vmatpush.bf16.msra.mxu0 0
        %1134 = vmatpush.bf16.msra.mxu0 0
        %1135 = vmatpush.bf16.msra.mxu0 0
        %1136 = vmatpush.bf16.msra.mxu0 %v1124
        %1137 = vmatmul.bf16.gmra.mxu0 %v1127
        %v1138 = vpop.f32.mrf.mxu0
        %v1139 = vadd.f32 0.0, %v1138
        %v1140 = vpop.f32.mrf.mxu0
        %v1141 = vadd.f32 0.0, %v1140
        %1142 = vdwg.mxu0
        %v1145 = vunpack.c.l.b16 %v260
        %v1146 = vunpack.c.l.b16 %v261
        %v1147 = vpack.c.b16 %v1146, %v1145
        %v1150 = vunpack.c.l.b16 %v931
        %v1151 = vunpack.c.l.b16 %v932
        %v1152 = vpack.c.b16 %v1151, %v1150
        %v1155 = vsel %vm336, %v1147, 0
        %1157 = vmatpush.bf16.msra.mxu0 0
        %1158 = vmatpush.bf16.msra.mxu0 0
        %1159 = vmatpush.bf16.msra.mxu0 0
        %1160 = vmatpush.bf16.msra.mxu0 0
        %1161 = vmatpush.bf16.msra.mxu0 0
        %1162 = vmatpush.bf16.msra.mxu0 0
        %1163 = vmatpush.bf16.msra.mxu0 0
        %1164 = vmatpush.bf16.msra.mxu0 %v1152
        %1165 = vmatmul.bf16.gmra.mxu0 %v1155
        %v1166 = vpop.f32.mrf.mxu0
        %v1167 = vadd.f32 0.0, %v1166
        %v1168 = vpop.f32.mrf.mxu0
        %v1169 = vadd.f32 0.0, %v1168
        %1170 = vdwg.mxu0
        %v1173 = vunpack.c.l.b16 %v262
        %v1174 = vunpack.c.l.b16 %v263
        %v1175 = vpack.c.b16 %v1174, %v1173
        %v1178 = vunpack.c.l.b16 %v933
        %v1179 = vunpack.c.l.b16 %v934
        %v1180 = vpack.c.b16 %v1179, %v1178
        %v1183 = vsel %vm336, %v1175, 0
        %1185 = vmatpush.bf16.msra.mxu0 0
        %1186 = vmatpush.bf16.msra.mxu0 0
        %1187 = vmatpush.bf16.msra.mxu0 0
        %1188 = vmatpush.bf16.msra.mxu0 0
        %1189 = vmatpush.bf16.msra.mxu0 0
        %1190 = vmatpush.bf16.msra.mxu0 0
        %1191 = vmatpush.bf16.msra.mxu0 0
        %1192 = vmatpush.bf16.msra.mxu0 %v1180
        %1193 = vmatmul.bf16.gmra.mxu0 %v1183
        %v1194 = vpop.f32.mrf.mxu0
        %v1195 = vadd.f32 0.0, %v1194
        %v1196 = vpop.f32.mrf.mxu0
        %v1197 = vadd.f32 0.0, %v1196
        %1198 = vdwg.mxu0
        %v1201 = vunpack.c.l.b16 %v264
        %v1202 = vunpack.c.l.b16 %v265
        %v1203 = vpack.c.b16 %v1202, %v1201
        %v1206 = vunpack.c.l.b16 %v935
        %v1207 = vunpack.c.l.b16 %v936
        %v1208 = vpack.c.b16 %v1207, %v1206
        %v1211 = vsel %vm336, %v1203, 0
        %1213 = vmatpush.bf16.msra.mxu0 0
        %1214 = vmatpush.bf16.msra.mxu0 0
        %1215 = vmatpush.bf16.msra.mxu0 0
        %1216 = vmatpush.bf16.msra.mxu0 0
        %1217 = vmatpush.bf16.msra.mxu0 0
        %1218 = vmatpush.bf16.msra.mxu0 0
        %1219 = vmatpush.bf16.msra.mxu0 0
        %1220 = vmatpush.bf16.msra.mxu0 %v1208
        %1221 = vmatmul.bf16.gmra.mxu0 %v1211
        %v1222 = vpop.f32.mrf.mxu0
        %v1223 = vadd.f32 0.0, %v1222
        %v1224 = vpop.f32.mrf.mxu0
        %v1225 = vadd.f32 0.0, %v1224
        %1226 = vdwg.mxu0
        %v1229 = vunpack.c.l.b16 %v266
        %v1230 = vunpack.c.l.b16 %v267
        %v1231 = vpack.c.b16 %v1230, %v1229
        %v1234 = vunpack.c.l.b16 %v937
        %v1235 = vunpack.c.l.b16 %v938
        %v1236 = vpack.c.b16 %v1235, %v1234
        %v1239 = vsel %vm336, %v1231, 0
        %1241 = vmatpush.bf16.msra.mxu0 0
        %1242 = vmatpush.bf16.msra.mxu0 0
        %1243 = vmatpush.bf16.msra.mxu0 0
        %1244 = vmatpush.bf16.msra.mxu0 0
        %1245 = vmatpush.bf16.msra.mxu0 0
        %1246 = vmatpush.bf16.msra.mxu0 0
        %1247 = vmatpush.bf16.msra.mxu0 0
        %1248 = vmatpush.bf16.msra.mxu0 %v1236
        %1249 = vmatmul.bf16.gmra.mxu0 %v1239
        %v1250 = vpop.f32.mrf.mxu0
        %v1251 = vadd.f32 0.0, %v1250
        %v1252 = vpop.f32.mrf.mxu0
        %v1253 = vadd.f32 0.0, %v1252
        %1254 = vdwg.mxu0
        %v1257 = vunpack.c.l.b16 %v268
        %v1258 = vunpack.c.l.b16 %v269
        %v1259 = vpack.c.b16 %v1258, %v1257
        %v1262 = vunpack.c.l.b16 %v939
        %v1263 = vunpack.c.l.b16 %v940
        %v1264 = vpack.c.b16 %v1263, %v1262
        %v1267 = vsel %vm336, %v1259, 0
        %1269 = vmatpush.bf16.msra.mxu0 0
        %1270 = vmatpush.bf16.msra.mxu0 0
        %1271 = vmatpush.bf16.msra.mxu0 0
        %1272 = vmatpush.bf16.msra.mxu0 0
        %1273 = vmatpush.bf16.msra.mxu0 0
        %1274 = vmatpush.bf16.msra.mxu0 0
        %1275 = vmatpush.bf16.msra.mxu0 0
        %1276 = vmatpush.bf16.msra.mxu0 %v1264
        %1277 = vmatmul.bf16.gmra.mxu0 %v1267
        %v1278 = vpop.f32.mrf.mxu0
        %v1279 = vadd.f32 0.0, %v1278
        %v1280 = vpop.f32.mrf.mxu0
        %v1281 = vadd.f32 0.0, %v1280
        %1282 = vdwg.mxu0
        %v1285 = vunpack.c.l.b16 %v270
        %v1286 = vunpack.c.l.b16 %v271
        %v1287 = vpack.c.b16 %v1286, %v1285
        %v1290 = vunpack.c.l.b16 %v941
        %v1291 = vunpack.c.l.b16 %v942
        %v1292 = vpack.c.b16 %v1291, %v1290
        %v1295 = vsel %vm336, %v1287, 0
        %1297 = vmatpush.bf16.msra.mxu0 0
        %1298 = vmatpush.bf16.msra.mxu0 0
        %1299 = vmatpush.bf16.msra.mxu0 0
        %1300 = vmatpush.bf16.msra.mxu0 0
        %1301 = vmatpush.bf16.msra.mxu0 0
        %1302 = vmatpush.bf16.msra.mxu0 0
        %1303 = vmatpush.bf16.msra.mxu0 0
        %1304 = vmatpush.bf16.msra.mxu0 %v1292
        %1305 = vmatmul.bf16.gmra.mxu0 %v1295
        %v1306 = vpop.f32.mrf.mxu0
        %v1307 = vadd.f32 0.0, %v1306
        %v1308 = vpop.f32.mrf.mxu0
        %v1309 = vadd.f32 0.0, %v1308
        %1310 = vdwg.mxu0
        %v1313 = vunpack.c.l.b16 %v272
        %v1314 = vunpack.c.l.b16 %v273
        %v1315 = vpack.c.b16 %v1314, %v1313
        %v1318 = vunpack.c.l.b16 %v943
        %v1319 = vunpack.c.l.b16 %v944
        %v1320 = vpack.c.b16 %v1319, %v1318
        %v1323 = vsel %vm336, %v1315, 0
        %1325 = vmatpush.bf16.msra.mxu0 0
        %1326 = vmatpush.bf16.msra.mxu0 0
        %1327 = vmatpush.bf16.msra.mxu0 0
        %1328 = vmatpush.bf16.msra.mxu0 0
        %1329 = vmatpush.bf16.msra.mxu0 0
        %1330 = vmatpush.bf16.msra.mxu0 0
        %1331 = vmatpush.bf16.msra.mxu0 0
        %1332 = vmatpush.bf16.msra.mxu0 %v1320
        %1333 = vmatmul.bf16.gmra.mxu0 %v1323
        %v1334 = vpop.f32.mrf.mxu0
        %v1335 = vadd.f32 0.0, %v1334
        %v1336 = vpop.f32.mrf.mxu0
        %v1337 = vadd.f32 0.0, %v1336
        %1338 = vdwg.mxu0
        %v1341 = vunpack.c.l.b16 %v274
        %v1342 = vunpack.c.l.b16 %v275
        %v1343 = vpack.c.b16 %v1342, %v1341
        %v1346 = vunpack.c.l.b16 %v945
        %v1347 = vunpack.c.l.b16 %v946
        %v1348 = vpack.c.b16 %v1347, %v1346
        %v1351 = vsel %vm336, %v1343, 0
        %1353 = vmatpush.bf16.msra.mxu0 0
        %1354 = vmatpush.bf16.msra.mxu0 0
        %1355 = vmatpush.bf16.msra.mxu0 0
        %1356 = vmatpush.bf16.msra.mxu0 0
        %1357 = vmatpush.bf16.msra.mxu0 0
        %1358 = vmatpush.bf16.msra.mxu0 0
        %1359 = vmatpush.bf16.msra.mxu0 0
        %1360 = vmatpush.bf16.msra.mxu0 %v1348
        %1361 = vmatmul.bf16.gmra.mxu0 %v1351
        %v1362 = vpop.f32.mrf.mxu0
        %v1363 = vadd.f32 0.0, %v1362
        %v1364 = vpop.f32.mrf.mxu0
        %v1365 = vadd.f32 0.0, %v1364
        %1366 = vdwg.mxu0
        %v1367 = vmul.f32 %v757, %v971
        %v1368 = vmul.f32 %v758, %v973
        %v1369 = vmul.f32 %v759, %v999
        %v1370 = vmul.f32 %v760, %v1001
        %v1371 = vmul.f32 %v761, %v1027
        %v1372 = vmul.f32 %v762, %v1029
        %v1373 = vmul.f32 %v763, %v1055
        %v1374 = vmul.f32 %v764, %v1057
        %v1375 = vmul.f32 %v765, %v1083
        %v1376 = vmul.f32 %v766, %v1085
        %v1377 = vmul.f32 %v767, %v1111
        %v1378 = vmul.f32 %v768, %v1113
        %v1379 = vmul.f32 %v769, %v1139
        %v1380 = vmul.f32 %v770, %v1141
        %v1381 = vmul.f32 %v771, %v1167
        %v1382 = vmul.f32 %v772, %v1169
        %v1383 = vmul.f32 %v773, %v1195
        %v1384 = vmul.f32 %v774, %v1197
        %v1385 = vmul.f32 %v775, %v1223
        %v1386 = vmul.f32 %v776, %v1225
        %v1387 = vmul.f32 %v777, %v1251
        %v1388 = vmul.f32 %v778, %v1253
        %v1389 = vmul.f32 %v779, %v1279
        %v1390 = vmul.f32 %v780, %v1281
        %v1391 = vmul.f32 %v781, %v1307
        %v1392 = vmul.f32 %v782, %v1309
        %v1393 = vmul.f32 %v783, %v1335
        %v1394 = vmul.f32 %v784, %v1337
        %v1395 = vmul.f32 %v785, %v1363
        %v1396 = vmul.f32 %v786, %v1365
        %v1397 = vpack.c.bf16 %v1368, %v1367
        %v1398 = vpack.c.bf16 %v1370, %v1369
        %v1399 = vpack.c.bf16 %v1372, %v1371
        %v1400 = vpack.c.bf16 %v1374, %v1373
        %v1401 = vpack.c.bf16 %v1376, %v1375
        %v1402 = vpack.c.bf16 %v1378, %v1377
        %v1403 = vpack.c.bf16 %v1380, %v1379
        %v1404 = vpack.c.bf16 %v1382, %v1381
        %v1405 = vpack.c.bf16 %v1384, %v1383
        %v1406 = vpack.c.bf16 %v1386, %v1385
        %v1407 = vpack.c.bf16 %v1388, %v1387
        %v1408 = vpack.c.bf16 %v1390, %v1389
        %v1409 = vpack.c.bf16 %v1392, %v1391
        %v1410 = vpack.c.bf16 %v1394, %v1393
        %v1411 = vpack.c.bf16 %v1396, %v1395
        %v1412 = vperm.slane %v854, 0
        %v1429 = vunpack.c.l.b16 %v787
        %v1430 = vunpack.c.l.b16 %v788
        %v1431 = vunpack.c.l.b16 %v789
        %v1432 = vunpack.c.l.b16 %v790
        %v1433 = vunpack.c.l.b16 %v791
        %v1434 = vunpack.c.l.b16 %v792
        %v1435 = vunpack.c.l.b16 %v793
        %v1436 = vunpack.c.l.b16 %v794
        %v1437 = vunpack.c.l.b16 %v795
        %v1438 = vunpack.c.l.b16 %v796
        %v1439 = vunpack.c.l.b16 %v797
        %v1440 = vunpack.c.l.b16 %v798
        %v1441 = vunpack.c.l.b16 %v799
        %v1442 = vunpack.c.l.b16 %v800
        %v1443 = vunpack.c.l.b16 %v801
        %v1444 = vunpack.c.l.b16 %v802
        %v1445 = vpack.c.b16 %v1430, %v1429
        %v1446 = vpack.c.b16 %v1432, %v1431
        %v1447 = vpack.c.b16 %v1434, %v1433
        %v1448 = vpack.c.b16 %v1436, %v1435
        %v1449 = vpack.c.b16 %v1438, %v1437
        %v1450 = vpack.c.b16 %v1440, %v1439
        %v1451 = vpack.c.b16 %v1442, %v1441
        %v1452 = vpack.c.b16 %v1444, %v1443
        %1461 = vmatpush.bf16.msra.mxu0 %v1452
        %1462 = vmatpush.bf16.msra.mxu0 %v1451
        %1463 = vmatpush.bf16.msra.mxu0 %v1450
        %1464 = vmatpush.bf16.msra.mxu0 %v1449
        %1465 = vmatpush.bf16.msra.mxu0 %v1448
        %1466 = vmatpush.bf16.msra.mxu0 %v1447
        %1467 = vmatpush.bf16.msra.mxu0 %v1446
        %1468 = vmatpush.bf16.msra.mxu0 %v1445
        %1469 = vmatmul.bf16.gmra.mxu0 %v1397
        %v1470 = vpop.f32.mrf.mxu0
        %v1471 = vadd.f32 %v1412, %v1470
        %v1472 = vpop.f32.mrf.mxu0
        %v1473 = vadd.f32 %v1412, %v1472
        %1474 = vmatmul.bf16.gmra.mxu0 %v1398
        %v1475 = vpop.f32.mrf.mxu0
        %v1476 = vadd.f32 %v1412, %v1475
        %v1477 = vpop.f32.mrf.mxu0
        %v1478 = vadd.f32 %v1412, %v1477
        %1479 = vmatmul.bf16.gmra.mxu0 %v1399
        %v1480 = vpop.f32.mrf.mxu0
        %v1481 = vadd.f32 %v1412, %v1480
        %v1482 = vpop.f32.mrf.mxu0
        %v1483 = vadd.f32 %v1412, %v1482
        %1484 = vmatmul.bf16.gmra.mxu0 %v1400
        %v1485 = vpop.f32.mrf.mxu0
        %v1486 = vadd.f32 %v1412, %v1485
        %v1487 = vpop.f32.mrf.mxu0
        %v1488 = vadd.f32 %v1412, %v1487
        %1489 = vmatmul.bf16.gmra.mxu0 %v1401
        %v1490 = vpop.f32.mrf.mxu0
        %v1491 = vadd.f32 %v1412, %v1490
        %v1492 = vpop.f32.mrf.mxu0
        %v1493 = vadd.f32 %v1412, %v1492
        %1494 = vmatmul.bf16.gmra.mxu0 %v1402
        %v1495 = vpop.f32.mrf.mxu0
        %v1496 = vadd.f32 %v1412, %v1495
        %v1497 = vpop.f32.mrf.mxu0
        %v1498 = vadd.f32 %v1412, %v1497
        %1499 = vmatmul.bf16.gmra.mxu0 %v1403
        %v1500 = vpop.f32.mrf.mxu0
        %v1501 = vadd.f32 %v1412, %v1500
        %v1502 = vpop.f32.mrf.mxu0
        %v1503 = vadd.f32 %v1412, %v1502
        %1504 = vmatmul.bf16.gmra.mxu0 %v1404
        %v1505 = vpop.f32.mrf.mxu0
        %v1506 = vadd.f32 %v1412, %v1505
        %v1507 = vpop.f32.mrf.mxu0
        %v1508 = vadd.f32 %v1412, %v1507
        %1509 = vmatmul.bf16.gmra.mxu0 %v1405
        %v1510 = vpop.f32.mrf.mxu0
        %v1511 = vadd.f32 %v1412, %v1510
        %v1512 = vpop.f32.mrf.mxu0
        %v1513 = vadd.f32 %v1412, %v1512
        %1514 = vmatmul.bf16.gmra.mxu0 %v1406
        %v1515 = vpop.f32.mrf.mxu0
        %v1516 = vadd.f32 %v1412, %v1515
        %v1517 = vpop.f32.mrf.mxu0
        %v1518 = vadd.f32 %v1412, %v1517
        %1519 = vmatmul.bf16.gmra.mxu0 %v1407
        %v1520 = vpop.f32.mrf.mxu0
        %v1521 = vadd.f32 %v1412, %v1520
        %v1522 = vpop.f32.mrf.mxu0
        %v1523 = vadd.f32 %v1412, %v1522
        %1524 = vmatmul.bf16.gmra.mxu0 %v1408
        %v1525 = vpop.f32.mrf.mxu0
        %v1526 = vadd.f32 %v1412, %v1525
        %v1527 = vpop.f32.mrf.mxu0
        %v1528 = vadd.f32 %v1412, %v1527
        %1529 = vmatmul.bf16.gmra.mxu0 %v1409
        %v1530 = vpop.f32.mrf.mxu0
        %v1531 = vadd.f32 %v1412, %v1530
        %v1532 = vpop.f32.mrf.mxu0
        %v1533 = vadd.f32 %v1412, %v1532
        %1534 = vmatmul.bf16.gmra.mxu0 %v1410
        %v1535 = vpop.f32.mrf.mxu0
        %v1536 = vadd.f32 %v1412, %v1535
        %v1537 = vpop.f32.mrf.mxu0
        %v1538 = vadd.f32 %v1412, %v1537
        %1539 = vmatmul.bf16.gmra.mxu0 %v1411
        %v1540 = vpop.f32.mrf.mxu0
        %v1541 = vadd.f32 %v1412, %v1540
        %v1542 = vpop.f32.mrf.mxu0
        %v1543 = vadd.f32 %v1412, %v1542
        %1544 = vdwg.mxu0
        %v1545 = vmax.f32 %v1471, 0.0
        %v1546 = vmax.f32 %v1473, 0.0
        %v1547 = vmax.f32 %v1476, 0.0
        %v1548 = vmax.f32 %v1478, 0.0
        %v1549 = vmax.f32 %v1481, 0.0
        %v1550 = vmax.f32 %v1483, 0.0
        %v1551 = vmax.f32 %v1486, 0.0
        %v1552 = vmax.f32 %v1488, 0.0
        %v1553 = vmax.f32 %v1491, 0.0
        %v1554 = vmax.f32 %v1493, 0.0
        %v1555 = vmax.f32 %v1496, 0.0
        %v1556 = vmax.f32 %v1498, 0.0
        %v1557 = vmax.f32 %v1501, 0.0
        %v1558 = vmax.f32 %v1503, 0.0
        %v1559 = vmax.f32 %v1506, 0.0
        %v1560 = vmax.f32 %v1508, 0.0
        %v1561 = vmax.f32 %v1511, 0.0
        %v1562 = vmax.f32 %v1513, 0.0
        %v1563 = vmax.f32 %v1516, 0.0
        %v1564 = vmax.f32 %v1518, 0.0
        %v1565 = vmax.f32 %v1521, 0.0
        %v1566 = vmax.f32 %v1523, 0.0
        %v1567 = vmax.f32 %v1526, 0.0
        %v1568 = vmax.f32 %v1528, 0.0
        %v1569 = vmax.f32 %v1531, 0.0
        %v1570 = vmax.f32 %v1533, 0.0
        %v1571 = vmax.f32 %v1536, 0.0
        %v1572 = vmax.f32 %v1538, 0.0
        %v1573 = vmax.f32 %v1541, 0.0
        %v1574 = vmax.f32 %v1543, 0.0
        %v1575 = vmul.f32 %v757, %v1545
        %v1576 = vmul.f32 %v758, %v1546
        %v1577 = vmul.f32 %v759, %v1547
        %v1578 = vmul.f32 %v760, %v1548
        %v1579 = vmul.f32 %v761, %v1549
        %v1580 = vmul.f32 %v762, %v1550
        %v1581 = vmul.f32 %v763, %v1551
        %v1582 = vmul.f32 %v764, %v1552
        %v1583 = vmul.f32 %v765, %v1553
        %v1584 = vmul.f32 %v766, %v1554
        %v1585 = vmul.f32 %v767, %v1555
        %v1586 = vmul.f32 %v768, %v1556
        %v1587 = vmul.f32 %v769, %v1557
        %v1588 = vmul.f32 %v770, %v1558
        %v1589 = vmul.f32 %v771, %v1559
        %v1590 = vmul.f32 %v772, %v1560
        %v1591 = vmul.f32 %v773, %v1561
        %v1592 = vmul.f32 %v774, %v1562
        %v1593 = vmul.f32 %v775, %v1563
        %v1594 = vmul.f32 %v776, %v1564
        %v1595 = vmul.f32 %v777, %v1565
        %v1596 = vmul.f32 %v778, %v1566
        %v1597 = vmul.f32 %v779, %v1567
        %v1598 = vmul.f32 %v780, %v1568
        %v1599 = vmul.f32 %v781, %v1569
        %v1600 = vmul.f32 %v782, %v1570
        %v1601 = vmul.f32 %v783, %v1571
        %v1602 = vmul.f32 %v784, %v1572
        %v1603 = vmul.f32 %v785, %v1573
        %v1604 = vmul.f32 %v786, %v1574
        %v1605 = vpack.c.bf16 %v1575, %v1575
        %v1606 = vpack.c.bf16 %v1576, %v1576
        %v1607 = vpack.c.bf16 %v1577, %v1577
        %v1608 = vpack.c.bf16 %v1578, %v1578
        %v1609 = vpack.c.bf16 %v1579, %v1579
        %v1610 = vpack.c.bf16 %v1580, %v1580
        %v1611 = vpack.c.bf16 %v1581, %v1581
        %v1612 = vpack.c.bf16 %v1582, %v1582
        %v1613 = vpack.c.bf16 %v1583, %v1583
        %v1614 = vpack.c.bf16 %v1584, %v1584
        %v1615 = vpack.c.bf16 %v1585, %v1585
        %v1616 = vpack.c.bf16 %v1586, %v1586
        %v1617 = vpack.c.bf16 %v1587, %v1587
        %v1618 = vpack.c.bf16 %v1588, %v1588
        %v1619 = vpack.c.bf16 %v1589, %v1589
        %v1620 = vpack.c.bf16 %v1590, %v1590
        %v1621 = vpack.c.bf16 %v1591, %v1591
        %v1622 = vpack.c.bf16 %v1592, %v1592
        %v1623 = vpack.c.bf16 %v1593, %v1593
        %v1624 = vpack.c.bf16 %v1594, %v1594
        %v1625 = vpack.c.bf16 %v1595, %v1595
        %v1626 = vpack.c.bf16 %v1596, %v1596
        %v1627 = vpack.c.bf16 %v1597, %v1597
        %v1628 = vpack.c.bf16 %v1598, %v1598
        %v1629 = vpack.c.bf16 %v1599, %v1599
        %v1630 = vpack.c.bf16 %v1600, %v1600
        %v1631 = vpack.c.bf16 %v1601, %v1601
        %v1632 = vpack.c.bf16 %v1602, %v1602
        %v1633 = vpack.c.bf16 %v1603, %v1603
        %v1634 = vpack.c.bf16 %v1604, %v1604
        %v1637 = vunpack.c.l.b16 %v1605
        %v1638 = vunpack.c.l.b16 %v1606
        %v1639 = vpack.c.b16 %v1638, %v1637
        %1641 = vmatpush.bf16.msra.mxu0 0
        %1642 = vmatpush.bf16.msra.mxu0 0
        %1643 = vmatpush.bf16.msra.mxu0 0
        %1644 = vmatpush.bf16.msra.mxu0 0
        %1645 = vmatpush.bf16.msra.mxu0 0
        %1646 = vmatpush.bf16.msra.mxu0 0
        %1647 = vmatpush.bf16.msra.mxu0 0
        %1648 = vmatpush.bf16.msra.mxu0 %v1639
        %1649 = vmatmul.bf16.gmra.mxu0 %v959
        %v1650 = vpop.f32.mrf.mxu0
        %v1651 = vadd.f32 0.0, %v1650
        %v1652 = vpop.f32.mrf.mxu0
        %v1653 = vadd.f32 0.0, %v1652
        %1654 = vdwg.mxu0
        %v1657 = vunpack.c.l.b16 %v1607
        %v1658 = vunpack.c.l.b16 %v1608
        %v1659 = vpack.c.b16 %v1658, %v1657
        %1661 = vmatpush.bf16.msra.mxu0 0
        %1662 = vmatpush.bf16.msra.mxu0 0
        %1663 = vmatpush.bf16.msra.mxu0 0
        %1664 = vmatpush.bf16.msra.mxu0 0
        %1665 = vmatpush.bf16.msra.mxu0 0
        %1666 = vmatpush.bf16.msra.mxu0 0
        %1667 = vmatpush.bf16.msra.mxu0 0
        %1668 = vmatpush.bf16.msra.mxu0 %v1659
        %1669 = vmatmul.bf16.gmra.mxu0 %v987
        %v1670 = vpop.f32.mrf.mxu0
        %v1671 = vadd.f32 0.0, %v1670
        %v1672 = vpop.f32.mrf.mxu0
        %v1673 = vadd.f32 0.0, %v1672
        %1674 = vdwg.mxu0
        %v1677 = vunpack.c.l.b16 %v1609
        %v1678 = vunpack.c.l.b16 %v1610
        %v1679 = vpack.c.b16 %v1678, %v1677
        %1681 = vmatpush.bf16.msra.mxu0 0
        %1682 = vmatpush.bf16.msra.mxu0 0
        %1683 = vmatpush.bf16.msra.mxu0 0
        %1684 = vmatpush.bf16.msra.mxu0 0
        %1685 = vmatpush.bf16.msra.mxu0 0
        %1686 = vmatpush.bf16.msra.mxu0 0
        %1687 = vmatpush.bf16.msra.mxu0 0
        %1688 = vmatpush.bf16.msra.mxu0 %v1679
        %1689 = vmatmul.bf16.gmra.mxu0 %v1015
        %v1690 = vpop.f32.mrf.mxu0
        %v1691 = vadd.f32 0.0, %v1690
        %v1692 = vpop.f32.mrf.mxu0
        %v1693 = vadd.f32 0.0, %v1692
        %1694 = vdwg.mxu0
        %v1697 = vunpack.c.l.b16 %v1611
        %v1698 = vunpack.c.l.b16 %v1612
        %v1699 = vpack.c.b16 %v1698, %v1697
        %1701 = vmatpush.bf16.msra.mxu0 0
        %1702 = vmatpush.bf16.msra.mxu0 0
        %1703 = vmatpush.bf16.msra.mxu0 0
        %1704 = vmatpush.bf16.msra.mxu0 0
        %1705 = vmatpush.bf16.msra.mxu0 0
        %1706 = vmatpush.bf16.msra.mxu0 0
        %1707 = vmatpush.bf16.msra.mxu0 0
        %1708 = vmatpush.bf16.msra.mxu0 %v1699
        %1709 = vmatmul.bf16.gmra.mxu0 %v1043
        %v1710 = vpop.f32.mrf.mxu0
        %v1711 = vadd.f32 0.0, %v1710
        %v1712 = vpop.f32.mrf.mxu0
        %v1713 = vadd.f32 0.0, %v1712
        %1714 = vdwg.mxu0
        %v1717 = vunpack.c.l.b16 %v1613
        %v1718 = vunpack.c.l.b16 %v1614
        %v1719 = vpack.c.b16 %v1718, %v1717
        %1721 = vmatpush.bf16.msra.mxu0 0
        %1722 = vmatpush.bf16.msra.mxu0 0
        %1723 = vmatpush.bf16.msra.mxu0 0
        %1724 = vmatpush.bf16.msra.mxu0 0
        %1725 = vmatpush.bf16.msra.mxu0 0
        %1726 = vmatpush.bf16.msra.mxu0 0
        %1727 = vmatpush.bf16.msra.mxu0 0
        %1728 = vmatpush.bf16.msra.mxu0 %v1719
        %1729 = vmatmul.bf16.gmra.mxu0 %v1071
        %v1730 = vpop.f32.mrf.mxu0
        %v1731 = vadd.f32 0.0, %v1730
        %v1732 = vpop.f32.mrf.mxu0
        %v1733 = vadd.f32 0.0, %v1732
        %1734 = vdwg.mxu0
        %v1737 = vunpack.c.l.b16 %v1615
        %v1738 = vunpack.c.l.b16 %v1616
        %v1739 = vpack.c.b16 %v1738, %v1737
        %1741 = vmatpush.bf16.msra.mxu0 0
        %1742 = vmatpush.bf16.msra.mxu0 0
        %1743 = vmatpush.bf16.msra.mxu0 0
        %1744 = vmatpush.bf16.msra.mxu0 0
        %1745 = vmatpush.bf16.msra.mxu0 0
        %1746 = vmatpush.bf16.msra.mxu0 0
        %1747 = vmatpush.bf16.msra.mxu0 0
        %1748 = vmatpush.bf16.msra.mxu0 %v1739
        %1749 = vmatmul.bf16.gmra.mxu0 %v1099
        %v1750 = vpop.f32.mrf.mxu0
        %v1751 = vadd.f32 0.0, %v1750
        %v1752 = vpop.f32.mrf.mxu0
        %v1753 = vadd.f32 0.0, %v1752
        %1754 = vdwg.mxu0
        %v1757 = vunpack.c.l.b16 %v1617
        %v1758 = vunpack.c.l.b16 %v1618
        %v1759 = vpack.c.b16 %v1758, %v1757
        %1761 = vmatpush.bf16.msra.mxu0 0
        %1762 = vmatpush.bf16.msra.mxu0 0
        %1763 = vmatpush.bf16.msra.mxu0 0
        %1764 = vmatpush.bf16.msra.mxu0 0
        %1765 = vmatpush.bf16.msra.mxu0 0
        %1766 = vmatpush.bf16.msra.mxu0 0
        %1767 = vmatpush.bf16.msra.mxu0 0
        %1768 = vmatpush.bf16.msra.mxu0 %v1759
        %1769 = vmatmul.bf16.gmra.mxu0 %v1127
        %v1770 = vpop.f32.mrf.mxu0
        %v1771 = vadd.f32 0.0, %v1770
        %v1772 = vpop.f32.mrf.mxu0
        %v1773 = vadd.f32 0.0, %v1772
        %1774 = vdwg.mxu0
        %v1777 = vunpack.c.l.b16 %v1619
        %v1778 = vunpack.c.l.b16 %v1620
        %v1779 = vpack.c.b16 %v1778, %v1777
        %1781 = vmatpush.bf16.msra.mxu0 0
        %1782 = vmatpush.bf16.msra.mxu0 0
        %1783 = vmatpush.bf16.msra.mxu0 0
        %1784 = vmatpush.bf16.msra.mxu0 0
        %1785 = vmatpush.bf16.msra.mxu0 0
        %1786 = vmatpush.bf16.msra.mxu0 0
        %1787 = vmatpush.bf16.msra.mxu0 0
        %1788 = vmatpush.bf16.msra.mxu0 %v1779
        %1789 = vmatmul.bf16.gmra.mxu0 %v1155
        %v1790 = vpop.f32.mrf.mxu0
        %v1791 = vadd.f32 0.0, %v1790
        %v1792 = vpop.f32.mrf.mxu0
        %v1793 = vadd.f32 0.0, %v1792
        %1794 = vdwg.mxu0
        %v1797 = vunpack.c.l.b16 %v1621
        %v1798 = vunpack.c.l.b16 %v1622
        %v1799 = vpack.c.b16 %v1798, %v1797
        %1801 = vmatpush.bf16.msra.mxu0 0
        %1802 = vmatpush.bf16.msra.mxu0 0
        %1803 = vmatpush.bf16.msra.mxu0 0
        %1804 = vmatpush.bf16.msra.mxu0 0
        %1805 = vmatpush.bf16.msra.mxu0 0
        %1806 = vmatpush.bf16.msra.mxu0 0
        %1807 = vmatpush.bf16.msra.mxu0 0
        %1808 = vmatpush.bf16.msra.mxu0 %v1799
        %1809 = vmatmul.bf16.gmra.mxu0 %v1183
        %v1810 = vpop.f32.mrf.mxu0
        %v1811 = vadd.f32 0.0, %v1810
        %v1812 = vpop.f32.mrf.mxu0
        %v1813 = vadd.f32 0.0, %v1812
        %1814 = vdwg.mxu0
        %v1817 = vunpack.c.l.b16 %v1623
        %v1818 = vunpack.c.l.b16 %v1624
        %v1819 = vpack.c.b16 %v1818, %v1817
        %1821 = vmatpush.bf16.msra.mxu0 0
        %1822 = vmatpush.bf16.msra.mxu0 0
        %1823 = vmatpush.bf16.msra.mxu0 0
        %1824 = vmatpush.bf16.msra.mxu0 0
        %1825 = vmatpush.bf16.msra.mxu0 0
        %1826 = vmatpush.bf16.msra.mxu0 0
        %1827 = vmatpush.bf16.msra.mxu0 0
        %1828 = vmatpush.bf16.msra.mxu0 %v1819
        %1829 = vmatmul.bf16.gmra.mxu0 %v1211
        %v1830 = vpop.f32.mrf.mxu0
        %v1831 = vadd.f32 0.0, %v1830
        %v1832 = vpop.f32.mrf.mxu0
        %v1833 = vadd.f32 0.0, %v1832
        %1834 = vdwg.mxu0
        %v1837 = vunpack.c.l.b16 %v1625
        %v1838 = vunpack.c.l.b16 %v1626
        %v1839 = vpack.c.b16 %v1838, %v1837
        %1841 = vmatpush.bf16.msra.mxu0 0
        %1842 = vmatpush.bf16.msra.mxu0 0
        %1843 = vmatpush.bf16.msra.mxu0 0
        %1844 = vmatpush.bf16.msra.mxu0 0
        %1845 = vmatpush.bf16.msra.mxu0 0
        %1846 = vmatpush.bf16.msra.mxu0 0
        %1847 = vmatpush.bf16.msra.mxu0 0
        %1848 = vmatpush.bf16.msra.mxu0 %v1839
        %1849 = vmatmul.bf16.gmra.mxu0 %v1239
        %v1850 = vpop.f32.mrf.mxu0
        %v1851 = vadd.f32 0.0, %v1850
        %v1852 = vpop.f32.mrf.mxu0
        %v1853 = vadd.f32 0.0, %v1852
        %1854 = vdwg.mxu0
        %v1857 = vunpack.c.l.b16 %v1627
        %v1858 = vunpack.c.l.b16 %v1628
        %v1859 = vpack.c.b16 %v1858, %v1857
        %1861 = vmatpush.bf16.msra.mxu0 0
        %1862 = vmatpush.bf16.msra.mxu0 0
        %1863 = vmatpush.bf16.msra.mxu0 0
        %1864 = vmatpush.bf16.msra.mxu0 0
        %1865 = vmatpush.bf16.msra.mxu0 0
        %1866 = vmatpush.bf16.msra.mxu0 0
        %1867 = vmatpush.bf16.msra.mxu0 0
        %1868 = vmatpush.bf16.msra.mxu0 %v1859
        %1869 = vmatmul.bf16.gmra.mxu0 %v1267
        %v1870 = vpop.f32.mrf.mxu0
        %v1871 = vadd.f32 0.0, %v1870
        %v1872 = vpop.f32.mrf.mxu0
        %v1873 = vadd.f32 0.0, %v1872
        %1874 = vdwg.mxu0
        %v1877 = vunpack.c.l.b16 %v1629
        %v1878 = vunpack.c.l.b16 %v1630
        %v1879 = vpack.c.b16 %v1878, %v1877
        %1881 = vmatpush.bf16.msra.mxu0 0
        %1882 = vmatpush.bf16.msra.mxu0 0
        %1883 = vmatpush.bf16.msra.mxu0 0
        %1884 = vmatpush.bf16.msra.mxu0 0
        %1885 = vmatpush.bf16.msra.mxu0 0
        %1886 = vmatpush.bf16.msra.mxu0 0
        %1887 = vmatpush.bf16.msra.mxu0 0
        %1888 = vmatpush.bf16.msra.mxu0 %v1879
        %1889 = vmatmul.bf16.gmra.mxu0 %v1295
        %v1890 = vpop.f32.mrf.mxu0
        %v1891 = vadd.f32 0.0, %v1890
        %v1892 = vpop.f32.mrf.mxu0
        %v1893 = vadd.f32 0.0, %v1892
        %1894 = vdwg.mxu0
        %v1897 = vunpack.c.l.b16 %v1631
        %v1898 = vunpack.c.l.b16 %v1632
        %v1899 = vpack.c.b16 %v1898, %v1897
        %1901 = vmatpush.bf16.msra.mxu0 0
        %1902 = vmatpush.bf16.msra.mxu0 0
        %1903 = vmatpush.bf16.msra.mxu0 0
        %1904 = vmatpush.bf16.msra.mxu0 0
        %1905 = vmatpush.bf16.msra.mxu0 0
        %1906 = vmatpush.bf16.msra.mxu0 0
        %1907 = vmatpush.bf16.msra.mxu0 0
        %1908 = vmatpush.bf16.msra.mxu0 %v1899
        %1909 = vmatmul.bf16.gmra.mxu0 %v1323
        %v1910 = vpop.f32.mrf.mxu0
        %v1911 = vadd.f32 0.0, %v1910
        %v1912 = vpop.f32.mrf.mxu0
        %v1913 = vadd.f32 0.0, %v1912
        %1914 = vdwg.mxu0
        %v1917 = vunpack.c.l.b16 %v1633
        %v1918 = vunpack.c.l.b16 %v1634
        %v1919 = vpack.c.b16 %v1918, %v1917
        %1921 = vmatpush.bf16.msra.mxu0 0
        %1922 = vmatpush.bf16.msra.mxu0 0
        %1923 = vmatpush.bf16.msra.mxu0 0
        %1924 = vmatpush.bf16.msra.mxu0 0
        %1925 = vmatpush.bf16.msra.mxu0 0
        %1926 = vmatpush.bf16.msra.mxu0 0
        %1927 = vmatpush.bf16.msra.mxu0 0
        %1928 = vmatpush.bf16.msra.mxu0 %v1919
        %1929 = vmatmul.bf16.gmra.mxu0 %v1351
        %v1930 = vpop.f32.mrf.mxu0
        %v1931 = vadd.f32 0.0, %v1930
        %v1932 = vpop.f32.mrf.mxu0
        %v1933 = vadd.f32 0.0, %v1932
        %1934 = vdwg.mxu0
        %v1935 = vmul.f32 %v757, %v1651
        %v1936 = vmul.f32 %v758, %v1653
        %v1937 = vmul.f32 %v759, %v1671
        %v1938 = vmul.f32 %v760, %v1673
        %v1939 = vmul.f32 %v761, %v1691
        %v1940 = vmul.f32 %v762, %v1693
        %v1941 = vmul.f32 %v763, %v1711
        %v1942 = vmul.f32 %v764, %v1713
        %v1943 = vmul.f32 %v765, %v1731
        %v1944 = vmul.f32 %v766, %v1733
        %v1945 = vmul.f32 %v767, %v1751
        %v1946 = vmul.f32 %v768, %v1753
        %v1947 = vmul.f32 %v769, %v1771
        %v1948 = vmul.f32 %v770, %v1773
        %v1949 = vmul.f32 %v771, %v1791
        %v1950 = vmul.f32 %v772, %v1793
        %v1951 = vmul.f32 %v773, %v1811
        %v1952 = vmul.f32 %v774, %v1813
        %v1953 = vmul.f32 %v775, %v1831
        %v1954 = vmul.f32 %v776, %v1833
        %v1955 = vmul.f32 %v777, %v1851
        %v1956 = vmul.f32 %v778, %v1853
        %v1957 = vmul.f32 %v779, %v1871
        %v1958 = vmul.f32 %v780, %v1873
        %v1959 = vmul.f32 %v781, %v1891
        %v1960 = vmul.f32 %v782, %v1893
        %v1961 = vmul.f32 %v783, %v1911
        %v1962 = vmul.f32 %v784, %v1913
        %v1963 = vmul.f32 %v785, %v1931
        %v1964 = vmul.f32 %v786, %v1933
        %v1965 = vpack.c.bf16 %v1936, %v1935
        %v1966 = vpack.c.bf16 %v1938, %v1937
        %v1967 = vpack.c.bf16 %v1940, %v1939
        %v1968 = vpack.c.bf16 %v1942, %v1941
        %v1969 = vpack.c.bf16 %v1944, %v1943
        %v1970 = vpack.c.bf16 %v1946, %v1945
        %v1971 = vpack.c.bf16 %v1948, %v1947
        %v1972 = vpack.c.bf16 %v1950, %v1949
        %v1973 = vpack.c.bf16 %v1952, %v1951
        %v1974 = vpack.c.bf16 %v1954, %v1953
        %v1975 = vpack.c.bf16 %v1956, %v1955
        %v1976 = vpack.c.bf16 %v1958, %v1957
        %v1977 = vpack.c.bf16 %v1960, %v1959
        %v1978 = vpack.c.bf16 %v1962, %v1961
        %v1979 = vpack.c.bf16 %v1964, %v1963
        %v1980 = vperm.slane %v855, 0
        %v1997 = vunpack.c.l.b16 %v804
        %v1998 = vunpack.c.l.b16 %v805
        %v1999 = vunpack.c.l.b16 %v806
        %v2000 = vunpack.c.l.b16 %v807
        %v2001 = vunpack.c.l.b16 %v808
        %v2002 = vunpack.c.l.b16 %v809
        %v2003 = vunpack.c.l.b16 %v810
        %v2004 = vunpack.c.l.b16 %v811
        %v2005 = vunpack.c.l.b16 %v812
        %v2006 = vunpack.c.l.b16 %v813
        %v2007 = vunpack.c.l.b16 %v814
        %v2008 = vunpack.c.l.b16 %v815
        %v2009 = vunpack.c.l.b16 %v816
        %v2010 = vunpack.c.l.b16 %v817
        %v2011 = vunpack.c.l.b16 %v818
        %v2012 = vunpack.c.l.b16 %v819
        %v2013 = vpack.c.b16 %v1998, %v1997
        %v2014 = vpack.c.b16 %v2000, %v1999
        %v2015 = vpack.c.b16 %v2002, %v2001
        %v2016 = vpack.c.b16 %v2004, %v2003
        %v2017 = vpack.c.b16 %v2006, %v2005
        %v2018 = vpack.c.b16 %v2008, %v2007
        %v2019 = vpack.c.b16 %v2010, %v2009
        %v2020 = vpack.c.b16 %v2012, %v2011
        %2029 = vmatpush.bf16.msra.mxu0 %v2020
        %2030 = vmatpush.bf16.msra.mxu0 %v2019
        %2031 = vmatpush.bf16.msra.mxu0 %v2018
        %2032 = vmatpush.bf16.msra.mxu0 %v2017
        %2033 = vmatpush.bf16.msra.mxu0 %v2016
        %2034 = vmatpush.bf16.msra.mxu0 %v2015
        %2035 = vmatpush.bf16.msra.mxu0 %v2014
        %2036 = vmatpush.bf16.msra.mxu0 %v2013
        %2037 = vmatmul.bf16.gmra.mxu0 %v1965
        %v2038 = vpop.f32.mrf.mxu0
        %v2039 = vadd.f32 %v1980, %v2038
        %v2040 = vpop.f32.mrf.mxu0
        %v2041 = vadd.f32 %v1980, %v2040
        %2042 = vmatmul.bf16.gmra.mxu0 %v1966
        %v2043 = vpop.f32.mrf.mxu0
        %v2044 = vadd.f32 %v1980, %v2043
        %v2045 = vpop.f32.mrf.mxu0
        %v2046 = vadd.f32 %v1980, %v2045
        %2047 = vmatmul.bf16.gmra.mxu0 %v1967
        %v2048 = vpop.f32.mrf.mxu0
        %v2049 = vadd.f32 %v1980, %v2048
        %v2050 = vpop.f32.mrf.mxu0
        %v2051 = vadd.f32 %v1980, %v2050
        %2052 = vmatmul.bf16.gmra.mxu0 %v1968
        %v2053 = vpop.f32.mrf.mxu0
        %v2054 = vadd.f32 %v1980, %v2053
        %v2055 = vpop.f32.mrf.mxu0
        %v2056 = vadd.f32 %v1980, %v2055
        %2057 = vmatmul.bf16.gmra.mxu0 %v1969
        %v2058 = vpop.f32.mrf.mxu0
        %v2059 = vadd.f32 %v1980, %v2058
        %v2060 = vpop.f32.mrf.mxu0
        %v2061 = vadd.f32 %v1980, %v2060
        %2062 = vmatmul.bf16.gmra.mxu0 %v1970
        %v2063 = vpop.f32.mrf.mxu0
        %v2064 = vadd.f32 %v1980, %v2063
        %v2065 = vpop.f32.mrf.mxu0
        %v2066 = vadd.f32 %v1980, %v2065
        %2067 = vmatmul.bf16.gmra.mxu0 %v1971
        %v2068 = vpop.f32.mrf.mxu0
        %v2069 = vadd.f32 %v1980, %v2068
        %v2070 = vpop.f32.mrf.mxu0
        %v2071 = vadd.f32 %v1980, %v2070
        %2072 = vmatmul.bf16.gmra.mxu0 %v1972
        %v2073 = vpop.f32.mrf.mxu0
        %v2074 = vadd.f32 %v1980, %v2073
        %v2075 = vpop.f32.mrf.mxu0
        %v2076 = vadd.f32 %v1980, %v2075
        %2077 = vmatmul.bf16.gmra.mxu0 %v1973
        %v2078 = vpop.f32.mrf.mxu0
        %v2079 = vadd.f32 %v1980, %v2078
        %v2080 = vpop.f32.mrf.mxu0
        %v2081 = vadd.f32 %v1980, %v2080
        %2082 = vmatmul.bf16.gmra.mxu0 %v1974
        %v2083 = vpop.f32.mrf.mxu0
        %v2084 = vadd.f32 %v1980, %v2083
        %v2085 = vpop.f32.mrf.mxu0
        %v2086 = vadd.f32 %v1980, %v2085
        %2087 = vmatmul.bf16.gmra.mxu0 %v1975
        %v2088 = vpop.f32.mrf.mxu0
        %v2089 = vadd.f32 %v1980, %v2088
        %v2090 = vpop.f32.mrf.mxu0
        %v2091 = vadd.f32 %v1980, %v2090
        %2092 = vmatmul.bf16.gmra.mxu0 %v1976
        %v2093 = vpop.f32.mrf.mxu0
        %v2094 = vadd.f32 %v1980, %v2093
        %v2095 = vpop.f32.mrf.mxu0
        %v2096 = vadd.f32 %v1980, %v2095
        %2097 = vmatmul.bf16.gmra.mxu0 %v1977
        %v2098 = vpop.f32.mrf.mxu0
        %v2099 = vadd.f32 %v1980, %v2098
        %v2100 = vpop.f32.mrf.mxu0
        %v2101 = vadd.f32 %v1980, %v2100
        %2102 = vmatmul.bf16.gmra.mxu0 %v1978
        %v2103 = vpop.f32.mrf.mxu0
        %v2104 = vadd.f32 %v1980, %v2103
        %v2105 = vpop.f32.mrf.mxu0
        %v2106 = vadd.f32 %v1980, %v2105
        %2107 = vmatmul.bf16.gmra.mxu0 %v1979
        %v2108 = vpop.f32.mrf.mxu0
        %v2109 = vadd.f32 %v1980, %v2108
        %v2110 = vpop.f32.mrf.mxu0
        %v2111 = vadd.f32 %v1980, %v2110
        %2112 = vdwg.mxu0
        %v2113 = vmax.f32 %v2039, 0.0
        %v2114 = vmax.f32 %v2041, 0.0
        %v2115 = vmax.f32 %v2044, 0.0
        %v2116 = vmax.f32 %v2046, 0.0
        %v2117 = vmax.f32 %v2049, 0.0
        %v2118 = vmax.f32 %v2051, 0.0
        %v2119 = vmax.f32 %v2054, 0.0
        %v2120 = vmax.f32 %v2056, 0.0
        %v2121 = vmax.f32 %v2059, 0.0
        %v2122 = vmax.f32 %v2061, 0.0
        %v2123 = vmax.f32 %v2064, 0.0
        %v2124 = vmax.f32 %v2066, 0.0
        %v2125 = vmax.f32 %v2069, 0.0
        %v2126 = vmax.f32 %v2071, 0.0
        %v2127 = vmax.f32 %v2074, 0.0
        %v2128 = vmax.f32 %v2076, 0.0
        %v2129 = vmax.f32 %v2079, 0.0
        %v2130 = vmax.f32 %v2081, 0.0
        %v2131 = vmax.f32 %v2084, 0.0
        %v2132 = vmax.f32 %v2086, 0.0
        %v2133 = vmax.f32 %v2089, 0.0
        %v2134 = vmax.f32 %v2091, 0.0
        %v2135 = vmax.f32 %v2094, 0.0
        %v2136 = vmax.f32 %v2096, 0.0
        %v2137 = vmax.f32 %v2099, 0.0
        %v2138 = vmax.f32 %v2101, 0.0
        %v2139 = vmax.f32 %v2104, 0.0
        %v2140 = vmax.f32 %v2106, 0.0
        %v2141 = vmax.f32 %v2109, 0.0
        %v2142 = vmax.f32 %v2111, 0.0
        %v2143 = vpack.c.bf16 %v2114, %v2113
        %v2144 = vpack.c.bf16 %v2116, %v2115
        %v2145 = vpack.c.bf16 %v2118, %v2117
        %v2146 = vpack.c.bf16 %v2120, %v2119
        %v2147 = vpack.c.bf16 %v2122, %v2121
        %v2148 = vpack.c.bf16 %v2124, %v2123
        %v2149 = vpack.c.bf16 %v2126, %v2125
        %v2150 = vpack.c.bf16 %v2128, %v2127
        %v2151 = vpack.c.bf16 %v2130, %v2129
        %v2152 = vpack.c.bf16 %v2132, %v2131
        %v2153 = vpack.c.bf16 %v2134, %v2133
        %v2154 = vpack.c.bf16 %v2136, %v2135
        %v2155 = vpack.c.bf16 %v2138, %v2137
        %v2156 = vpack.c.bf16 %v2140, %v2139
        %v2157 = vpack.c.bf16 %v2142, %v2141
        %v2174 = vunpack.c.l.b16 %v838
        %v2175 = vunpack.c.l.b16 %v839
        %v2176 = vunpack.c.l.b16 %v840
        %v2177 = vunpack.c.l.b16 %v841
        %v2178 = vunpack.c.l.b16 %v842
        %v2179 = vunpack.c.l.b16 %v843
        %v2180 = vunpack.c.l.b16 %v844
        %v2181 = vunpack.c.l.b16 %v845
        %v2182 = vunpack.c.l.b16 %v846
        %v2183 = vunpack.c.l.b16 %v847
        %v2184 = vunpack.c.l.b16 %v848
        %v2185 = vunpack.c.l.b16 %v849
        %v2186 = vunpack.c.l.b16 %v850
        %v2187 = vunpack.c.l.b16 %v851
        %v2188 = vunpack.c.l.b16 %v852
        %v2189 = vunpack.c.l.b16 %v853
        %v2190 = vpack.c.b16 %v2175, %v2174
        %v2191 = vpack.c.b16 %v2177, %v2176
        %v2192 = vpack.c.b16 %v2179, %v2178
        %v2193 = vpack.c.b16 %v2181, %v2180
        %v2194 = vpack.c.b16 %v2183, %v2182
        %v2195 = vpack.c.b16 %v2185, %v2184
        %v2196 = vpack.c.b16 %v2187, %v2186
        %v2197 = vpack.c.b16 %v2189, %v2188
        %2206 = vmatpush.bf16.msra.mxu0 %v2197
        %2207 = vmatpush.bf16.msra.mxu0 %v2196
        %2208 = vmatpush.bf16.msra.mxu0 %v2195
        %2209 = vmatpush.bf16.msra.mxu0 %v2194
        %2210 = vmatpush.bf16.msra.mxu0 %v2193
        %2211 = vmatpush.bf16.msra.mxu0 %v2192
        %2212 = vmatpush.bf16.msra.mxu0 %v2191
        %2213 = vmatpush.bf16.msra.mxu0 %v2190
        %2214 = vmatmul.bf16.gmra.mxu0 %v2143
        %v2215 = vpop.f32.mrf.mxu0
        %v2216 = vadd.f32 0.0, %v2215
        %v2217 = vpop.f32.mrf.mxu0
        %v2218 = vadd.f32 0.0, %v2217
        %2219 = vmatmul.bf16.gmra.mxu0 %v2144
        %v2220 = vpop.f32.mrf.mxu0
        %v2221 = vadd.f32 0.0, %v2220
        %v2222 = vpop.f32.mrf.mxu0
        %v2223 = vadd.f32 0.0, %v2222
        %2224 = vmatmul.bf16.gmra.mxu0 %v2145
        %v2225 = vpop.f32.mrf.mxu0
        %v2226 = vadd.f32 0.0, %v2225
        %v2227 = vpop.f32.mrf.mxu0
        %v2228 = vadd.f32 0.0, %v2227
        %2229 = vmatmul.bf16.gmra.mxu0 %v2146
        %v2230 = vpop.f32.mrf.mxu0
        %v2231 = vadd.f32 0.0, %v2230
        %v2232 = vpop.f32.mrf.mxu0
        %v2233 = vadd.f32 0.0, %v2232
        %2234 = vmatmul.bf16.gmra.mxu0 %v2147
        %v2235 = vpop.f32.mrf.mxu0
        %v2236 = vadd.f32 0.0, %v2235
        %v2237 = vpop.f32.mrf.mxu0
        %v2238 = vadd.f32 0.0, %v2237
        %2239 = vmatmul.bf16.gmra.mxu0 %v2148
        %v2240 = vpop.f32.mrf.mxu0
        %v2241 = vadd.f32 0.0, %v2240
        %v2242 = vpop.f32.mrf.mxu0
        %v2243 = vadd.f32 0.0, %v2242
        %2244 = vmatmul.bf16.gmra.mxu0 %v2149
        %v2245 = vpop.f32.mrf.mxu0
        %v2246 = vadd.f32 0.0, %v2245
        %v2247 = vpop.f32.mrf.mxu0
        %v2248 = vadd.f32 0.0, %v2247
        %2249 = vmatmul.bf16.gmra.mxu0 %v2150
        %v2250 = vpop.f32.mrf.mxu0
        %v2251 = vadd.f32 0.0, %v2250
        %v2252 = vpop.f32.mrf.mxu0
        %v2253 = vadd.f32 0.0, %v2252
        %2254 = vmatmul.bf16.gmra.mxu0 %v2151
        %v2255 = vpop.f32.mrf.mxu0
        %v2256 = vadd.f32 0.0, %v2255
        %v2257 = vpop.f32.mrf.mxu0
        %v2258 = vadd.f32 0.0, %v2257
        %2259 = vmatmul.bf16.gmra.mxu0 %v2152
        %v2260 = vpop.f32.mrf.mxu0
        %v2261 = vadd.f32 0.0, %v2260
        %v2262 = vpop.f32.mrf.mxu0
        %v2263 = vadd.f32 0.0, %v2262
        %2264 = vmatmul.bf16.gmra.mxu0 %v2153
        %v2265 = vpop.f32.mrf.mxu0
        %v2266 = vadd.f32 0.0, %v2265
        %v2267 = vpop.f32.mrf.mxu0
        %v2268 = vadd.f32 0.0, %v2267
        %2269 = vmatmul.bf16.gmra.mxu0 %v2154
        %v2270 = vpop.f32.mrf.mxu0
        %v2271 = vadd.f32 0.0, %v2270
        %v2272 = vpop.f32.mrf.mxu0
        %v2273 = vadd.f32 0.0, %v2272
        %2274 = vmatmul.bf16.gmra.mxu0 %v2155
        %v2275 = vpop.f32.mrf.mxu0
        %v2276 = vadd.f32 0.0, %v2275
        %v2277 = vpop.f32.mrf.mxu0
        %v2278 = vadd.f32 0.0, %v2277
        %2279 = vmatmul.bf16.gmra.mxu0 %v2156
        %v2280 = vpop.f32.mrf.mxu0
        %v2281 = vadd.f32 0.0, %v2280
        %v2282 = vpop.f32.mrf.mxu0
        %v2283 = vadd.f32 0.0, %v2282
        %2284 = vmatmul.bf16.gmra.mxu0 %v2157
        %v2285 = vpop.f32.mrf.mxu0
        %v2286 = vadd.f32 0.0, %v2285
        %v2287 = vpop.f32.mrf.mxu0
        %v2288 = vadd.f32 0.0, %v2287
        %2289 = vdwg.mxu0
        %v2320 = vunpack.c.l.b16 %v276
        %v2321 = vunpack.c.l.b16 %v277
        %v2322 = vunpack.c.l.b16 %v278
        %v2323 = vunpack.c.l.b16 %v279
        %v2324 = vunpack.c.l.b16 %v280
        %v2325 = vunpack.c.l.b16 %v281
        %v2326 = vunpack.c.l.b16 %v282
        %v2327 = vunpack.c.l.b16 %v283
        %v2328 = vunpack.c.l.b16 %v284
        %v2329 = vunpack.c.l.b16 %v285
        %v2330 = vunpack.c.l.b16 %v286
        %v2331 = vunpack.c.l.b16 %v287
        %v2332 = vunpack.c.l.b16 %v288
        %v2333 = vunpack.c.l.b16 %v289
        %v2334 = vunpack.c.l.b16 %v290
        %v2335 = vunpack.c.l.b16 %v291
        %v2336 = vunpack.c.l.b16 %v292
        %v2337 = vunpack.c.l.b16 %v293
        %v2338 = vunpack.c.l.b16 %v294
        %v2339 = vunpack.c.l.b16 %v295
        %v2340 = vunpack.c.l.b16 %v296
        %v2341 = vunpack.c.l.b16 %v297
        %v2342 = vunpack.c.l.b16 %v298
        %v2343 = vunpack.c.l.b16 %v299
        %v2344 = vunpack.c.l.b16 %v300
        %v2345 = vunpack.c.l.b16 %v301
        %v2346 = vunpack.c.l.b16 %v302
        %v2347 = vunpack.c.l.b16 %v303
        %v2348 = vunpack.c.l.b16 %v304
        %v2349 = vunpack.c.l.b16 %v305
        %v2350 = vpack.c.b16 %v2321, %v2320
        %v2351 = vpack.c.b16 %v2323, %v2322
        %v2352 = vpack.c.b16 %v2325, %v2324
        %v2353 = vpack.c.b16 %v2327, %v2326
        %v2354 = vpack.c.b16 %v2329, %v2328
        %v2355 = vpack.c.b16 %v2331, %v2330
        %v2356 = vpack.c.b16 %v2333, %v2332
        %v2357 = vpack.c.b16 %v2335, %v2334
        %v2358 = vpack.c.b16 %v2337, %v2336
        %v2359 = vpack.c.b16 %v2339, %v2338
        %v2360 = vpack.c.b16 %v2341, %v2340
        %v2361 = vpack.c.b16 %v2343, %v2342
        %v2362 = vpack.c.b16 %v2345, %v2344
        %v2363 = vpack.c.b16 %v2347, %v2346
        %v2364 = vpack.c.b16 %v2349, %v2348
        %v2396 = vunpack.c.l.b16 %v821
        %v2397 = vunpack.c.l.b16 %v822
        %v2398 = vunpack.c.l.b16 %v823
        %v2399 = vunpack.c.l.b16 %v824
        %v2400 = vunpack.c.l.b16 %v825
        %v2401 = vunpack.c.l.b16 %v826
        %v2402 = vunpack.c.l.b16 %v827
        %v2403 = vunpack.c.l.b16 %v828
        %v2404 = vunpack.c.l.b16 %v829
        %v2405 = vunpack.c.l.b16 %v830
        %v2406 = vunpack.c.l.b16 %v831
        %v2407 = vunpack.c.l.b16 %v832
        %v2408 = vunpack.c.l.b16 %v833
        %v2409 = vunpack.c.l.b16 %v834
        %v2410 = vunpack.c.l.b16 %v835
        %v2411 = vunpack.c.l.b16 %v836
        %v2412 = vpack.c.b16 %v2397, %v2396
        %v2413 = vpack.c.b16 %v2399, %v2398
        %v2414 = vpack.c.b16 %v2401, %v2400
        %v2415 = vpack.c.b16 %v2403, %v2402
        %v2416 = vpack.c.b16 %v2405, %v2404
        %v2417 = vpack.c.b16 %v2407, %v2406
        %v2418 = vpack.c.b16 %v2409, %v2408
        %v2419 = vpack.c.b16 %v2411, %v2410
        %2428 = vmatpush.bf16.msra.mxu0 %v2419
        %2429 = vmatpush.bf16.msra.mxu0 %v2418
        %2430 = vmatpush.bf16.msra.mxu0 %v2417
        %2431 = vmatpush.bf16.msra.mxu0 %v2416
        %2432 = vmatpush.bf16.msra.mxu0 %v2415
        %2433 = vmatpush.bf16.msra.mxu0 %v2414
        %2434 = vmatpush.bf16.msra.mxu0 %v2413
        %2435 = vmatpush.bf16.msra.mxu0 %v2412
        %2436 = vmatmul.bf16.gmra.mxu0 %v2350
        %v2437 = vpop.f32.mrf.mxu0
        %v2438 = vadd.f32 %v2216, %v2437
        %v2439 = vpop.f32.mrf.mxu0
        %v2440 = vadd.f32 %v2218, %v2439
        %2441 = vmatmul.bf16.gmra.mxu0 %v2351
        %v2442 = vpop.f32.mrf.mxu0
        %v2443 = vadd.f32 %v2221, %v2442
        %v2444 = vpop.f32.mrf.mxu0
        %v2445 = vadd.f32 %v2223, %v2444
        %2446 = vmatmul.bf16.gmra.mxu0 %v2352
        %v2447 = vpop.f32.mrf.mxu0
        %v2448 = vadd.f32 %v2226, %v2447
        %v2449 = vpop.f32.mrf.mxu0
        %v2450 = vadd.f32 %v2228, %v2449
        %2451 = vmatmul.bf16.gmra.mxu0 %v2353
        %v2452 = vpop.f32.mrf.mxu0
        %v2453 = vadd.f32 %v2231, %v2452
        %v2454 = vpop.f32.mrf.mxu0
        %v2455 = vadd.f32 %v2233, %v2454
        %2456 = vmatmul.bf16.gmra.mxu0 %v2354
        %v2457 = vpop.f32.mrf.mxu0
        %v2458 = vadd.f32 %v2236, %v2457
        %v2459 = vpop.f32.mrf.mxu0
        %v2460 = vadd.f32 %v2238, %v2459
        %2461 = vmatmul.bf16.gmra.mxu0 %v2355
        %v2462 = vpop.f32.mrf.mxu0
        %v2463 = vadd.f32 %v2241, %v2462
        %v2464 = vpop.f32.mrf.mxu0
        %v2465 = vadd.f32 %v2243, %v2464
        %2466 = vmatmul.bf16.gmra.mxu0 %v2356
        %v2467 = vpop.f32.mrf.mxu0
        %v2468 = vadd.f32 %v2246, %v2467
        %v2469 = vpop.f32.mrf.mxu0
        %v2470 = vadd.f32 %v2248, %v2469
        %2471 = vmatmul.bf16.gmra.mxu0 %v2357
        %v2472 = vpop.f32.mrf.mxu0
        %v2473 = vadd.f32 %v2251, %v2472
        %v2474 = vpop.f32.mrf.mxu0
        %v2475 = vadd.f32 %v2253, %v2474
        %2476 = vmatmul.bf16.gmra.mxu0 %v2358
        %v2477 = vpop.f32.mrf.mxu0
        %v2478 = vadd.f32 %v2256, %v2477
        %v2479 = vpop.f32.mrf.mxu0
        %v2480 = vadd.f32 %v2258, %v2479
        %2481 = vmatmul.bf16.gmra.mxu0 %v2359
        %v2482 = vpop.f32.mrf.mxu0
        %v2483 = vadd.f32 %v2261, %v2482
        %v2484 = vpop.f32.mrf.mxu0
        %v2485 = vadd.f32 %v2263, %v2484
        %2486 = vmatmul.bf16.gmra.mxu0 %v2360
        %v2487 = vpop.f32.mrf.mxu0
        %v2488 = vadd.f32 %v2266, %v2487
        %v2489 = vpop.f32.mrf.mxu0
        %v2490 = vadd.f32 %v2268, %v2489
        %2491 = vmatmul.bf16.gmra.mxu0 %v2361
        %v2492 = vpop.f32.mrf.mxu0
        %v2493 = vadd.f32 %v2271, %v2492
        %v2494 = vpop.f32.mrf.mxu0
        %v2495 = vadd.f32 %v2273, %v2494
        %2496 = vmatmul.bf16.gmra.mxu0 %v2362
        %v2497 = vpop.f32.mrf.mxu0
        %v2498 = vadd.f32 %v2276, %v2497
        %v2499 = vpop.f32.mrf.mxu0
        %v2500 = vadd.f32 %v2278, %v2499
        %2501 = vmatmul.bf16.gmra.mxu0 %v2363
        %v2502 = vpop.f32.mrf.mxu0
        %v2503 = vadd.f32 %v2281, %v2502
        %v2504 = vpop.f32.mrf.mxu0
        %v2505 = vadd.f32 %v2283, %v2504
        %2506 = vmatmul.bf16.gmra.mxu0 %v2364
        %v2507 = vpop.f32.mrf.mxu0
        %v2508 = vadd.f32 %v2286, %v2507
        %v2509 = vpop.f32.mrf.mxu0
        %v2510 = vadd.f32 %v2288, %v2509
        %2511 = vdwg.mxu0
        %v2512 = vperm.slane %v856, 0
        %v2513 = vadd.f32 %v2438, %v2512
        %v2514 = vadd.f32 %v2440, %v2512
        %v2515 = vadd.f32 %v2443, %v2512
        %v2516 = vadd.f32 %v2445, %v2512
        %v2517 = vadd.f32 %v2448, %v2512
        %v2518 = vadd.f32 %v2450, %v2512
        %v2519 = vadd.f32 %v2453, %v2512
        %v2520 = vadd.f32 %v2455, %v2512
        %v2521 = vadd.f32 %v2458, %v2512
        %v2522 = vadd.f32 %v2460, %v2512
        %v2523 = vadd.f32 %v2463, %v2512
        %v2524 = vadd.f32 %v2465, %v2512
        %v2525 = vadd.f32 %v2468, %v2512
        %v2526 = vadd.f32 %v2470, %v2512
        %v2527 = vadd.f32 %v2473, %v2512
        %v2528 = vadd.f32 %v2475, %v2512
        %v2529 = vadd.f32 %v2478, %v2512
        %v2530 = vadd.f32 %v2480, %v2512
        %v2531 = vadd.f32 %v2483, %v2512
        %v2532 = vadd.f32 %v2485, %v2512
        %v2533 = vadd.f32 %v2488, %v2512
        %v2534 = vadd.f32 %v2490, %v2512
        %v2535 = vadd.f32 %v2493, %v2512
        %v2536 = vadd.f32 %v2495, %v2512
        %v2537 = vadd.f32 %v2498, %v2512
        %v2538 = vadd.f32 %v2500, %v2512
        %v2539 = vadd.f32 %v2503, %v2512
        %v2540 = vadd.f32 %v2505, %v2512
        %v2541 = vadd.f32 %v2508, %v2512
        %v2542 = vadd.f32 %v2510, %v2512
        %v2543 = vmax.f32 %v2513, 0.0
        %v2544 = vmax.f32 %v2514, 0.0
        %v2545 = vmax.f32 %v2515, 0.0
        %v2546 = vmax.f32 %v2516, 0.0
        %v2547 = vmax.f32 %v2517, 0.0
        %v2548 = vmax.f32 %v2518, 0.0
        %v2549 = vmax.f32 %v2519, 0.0
        %v2550 = vmax.f32 %v2520, 0.0
        %v2551 = vmax.f32 %v2521, 0.0
        %v2552 = vmax.f32 %v2522, 0.0
        %v2553 = vmax.f32 %v2523, 0.0
        %v2554 = vmax.f32 %v2524, 0.0
        %v2555 = vmax.f32 %v2525, 0.0
        %v2556 = vmax.f32 %v2526, 0.0
        %v2557 = vmax.f32 %v2527, 0.0
        %v2558 = vmax.f32 %v2528, 0.0
        %v2559 = vmax.f32 %v2529, 0.0
        %v2560 = vmax.f32 %v2530, 0.0
        %v2561 = vmax.f32 %v2531, 0.0
        %v2562 = vmax.f32 %v2532, 0.0
        %v2563 = vmax.f32 %v2533, 0.0
        %v2564 = vmax.f32 %v2534, 0.0
        %v2565 = vmax.f32 %v2535, 0.0
        %v2566 = vmax.f32 %v2536, 0.0
        %v2567 = vmax.f32 %v2537, 0.0
        %v2568 = vmax.f32 %v2538, 0.0
        %v2569 = vmax.f32 %v2539, 0.0
        %v2570 = vmax.f32 %v2540, 0.0
        %v2571 = vmax.f32 %v2541, 0.0
        %v2572 = vmax.f32 %v2542, 0.0
        %2573 = vst [vmem:[%s235] sm:$0xff] %v2543
        %2574 = vst [vmem:[%s235 + $0x8] sm:$0xff] %v2544
        %2575 = vst [vmem:[%s235 + $0x10] sm:$0xff] %v2545
        %2576 = vst [vmem:[%s235 + $0x18] sm:$0xff] %v2546
        %2577 = vst [vmem:[%s235 + $0x20] sm:$0xff] %v2547
        %2578 = vst [vmem:[%s235 + $0x28] sm:$0xff] %v2548
        %2579 = vst [vmem:[%s235 + $0x30] sm:$0xff] %v2549
        %2580 = vst [vmem:[%s235 + $0x38] sm:$0xff] %v2550
        %2581 = vst [vmem:[%s235 + $0x40] sm:$0xff] %v2551
        %2582 = vst [vmem:[%s235 + $0x48] sm:$0xff] %v2552
        %2583 = vst [vmem:[%s235 + $0x50] sm:$0xff] %v2553
        %2584 = vst [vmem:[%s235 + $0x58] sm:$0xff] %v2554
        %2585 = vst [vmem:[%s235 + $0x60] sm:$0xff] %v2555
        %2586 = vst [vmem:[%s235 + $0x68] sm:$0xff] %v2556
        %2587 = vst [vmem:[%s235 + $0x70] sm:$0xff] %v2557
        %2588 = vst [vmem:[%s235 + $0x78] sm:$0xff] %v2558
        %2589 = vst [vmem:[%s235 + $0x80] sm:$0xff] %v2559
        %2590 = vst [vmem:[%s235 + $0x88] sm:$0xff] %v2560
        %2591 = vst [vmem:[%s235 + $0x90] sm:$0xff] %v2561
        %2592 = vst [vmem:[%s235 + $0x98] sm:$0xff] %v2562
        %2593 = vst [vmem:[%s235 + $0xa0] sm:$0xff] %v2563
        %2594 = vst [vmem:[%s235 + $0xa8] sm:$0xff] %v2564
        %2595 = vst [vmem:[%s235 + $0xb0] sm:$0xff] %v2565
        %2596 = vst [vmem:[%s235 + $0xb8] sm:$0xff] %v2566
        %2597 = vst [vmem:[%s235 + $0xc0] sm:$0xff] %v2567
        %2598 = vst [vmem:[%s235 + $0xc8] sm:$0xff] %v2568
        %2599 = vst [vmem:[%s235 + $0xd0] sm:$0xff] %v2569
        %2600 = vst [vmem:[%s235 + $0xd8] sm:$0xff] %v2570
        %2601 = vst [vmem:[%s235 + $0xe0] sm:$0xff] %v2571
        %2602 = vst [vmem:[%s235 + $0xe8] sm:$0xff] %v2572
        %s2603 = sand.u32 %s123, 1
        %s2604 = scalar_lea.sflag [#allocation4], %s2603
        %s2605 = sand.u32 %s123, 1
        %s2606 = smul.addr %s2605, 240
        %s2607 = scalar_lea.vmem [#allocation5], %s2606
        // Predicated region
        $region41: #{tpu_custom_call.1} parent=35 // pred_check
          %p2608 = pneg %p133
        $region42: #{tpu_custom_call.1} parent=35 // pred_check_branch
          %2610 = sbr.rel (%p2608) target = $region44
        $region43: #{tpu_custom_call.1} parent=35 // pred_region
          %s2611 = smul.u32 30, %s21
          %2613 = vsyncadd %s2604, 0
          %s2614 = smul.addr %s2611, 8
          %s2615 = scalar_lea.hbm %s4, %s2614
          %s2616 = sshll.u32 %s2607, 4
          %s2617 = int_to_ptr.vmem [resolvable:$true] %s2616
          %s2618 = sshll.u32 %s2615, 4
          %s2619 = int_to_ptr.hbm [resolvable:$true] %s2618
          %2624 = dma.vmem_to_hbm [thread:$0]  %s2617, 3840, %s2619, %s2604, 128, 128, 8
        $region44: #{tpu_custom_call.1} parent=35 // pred_fallthru
          _
      $region36: #{tpu_custom_call.1} parent=5 // pred_fallthru
        _
      %p2625 = scmp.le.s32.totalorder 2, %s16
      // Predicated region
      $region45: #{tpu_custom_call.1} parent=5 // pred_check
        %p2626 = pneg %p2625
      $region46: #{tpu_custom_call.1} parent=5 // pred_check_branch
        %2628 = sbr.rel (%p2626) target = $region48
      $region47: #{tpu_custom_call.1} parent=5 // pred_region
        %s2629 = ssub.s32 %s16, 2
        // Predicated region
        $region49: #{tpu_custom_call.1} parent=47 // pred_check
          %p2630 = pneg %p139
        $region50: #{tpu_custom_call.1} parent=47 // pred_check_branch
          %2632 = sbr.rel (%p2630) target = $region52
        $region51: #{tpu_custom_call.1} parent=47 // pred_region
          %s2633 = sand.u32 %s124, 1
          %s2634 = scalar_lea.sflag [#allocation4], %s2633
          %s2635 = sand.u32 %s124, 1
          %s2636 = smul.addr %s2635, 240
          %s2637 = scalar_lea.vmem [#allocation5], %s2636
          %2639 = dma.done %s2634, 3840
        $region52: #{tpu_custom_call.1} parent=47 // pred_fallthru
          _
      $region48: #{tpu_custom_call.1} parent=5 // pred_fallthru
        _
    $region6: #{tpu_custom_call.1} parent=1 // loop_footer
      %s20 = sadd.s32 1, %s16
    $region7: #{tpu_custom_call.1} parent=1 // loop_footer_branch
      %15 = sbr.rel target = $region3
    $region8: #{tpu_custom_call.1} parent=1 // loop_exit
      _
    %2640 = vsyncpa [#allocation3], 1
    %s2641 = scalar_lea.sflag [#allocation3], 1
    %2642 = vsyncpa %s2641, 1
    %2643 = vsyncpa [#allocation4], 1
    %s2644 = scalar_lea.sflag [#allocation4], 1
    %2645 = vsyncpa %s2644, 1

</llo_original>
